<compile_context>
chip_gen: v6e
topology: v6e:2x2x1
jax: 0.10.0
libtpu: 0.0.40
codegen_flags: <defaults>
</compile_context>

<pallas_src>
import functools

import jax
import jax.numpy as jnp
from jax.experimental import pallas as pl
from jax.experimental.pallas import tpu as pltpu

_CHUNK = 128                      # hidden-dim chunk = one lane tile
_INV_SQRT2 = 0.7071067811865476


def _full_spec(shape):
    """Whole-array block (grid=(1,))."""
    return pl.BlockSpec(tuple(shape), lambda *_: (0,) * len(shape))


def _relu(x):
    return jnp.maximum(x, 0.0)


def _gelu_exact(x):
    # exact (erf) GELU -- matches torch.nn.functional.gelu default
    return 0.5 * x * (1.0 + jax.lax.erf(x * _INV_SQRT2))


def _chunked_mlp_scores(q, keys, w1q_ref, w1k_ref, b1_ref, w2row_ref, act_fn):
    """scores[b,k] = sum_j act(q @ W1q + b1 + keys @ W1k)[b,k,j] * W2row[0, j].

    Processed 128 hidden lanes at a time so the (B, K, H) intermediate is never
    materialised.  The fc2 weights arrive lane-major ((1, H)); the per-chunk
    reduction is an elementwise multiply + lane reduction (XLU), which keeps the
    scores laid out as (B, K, 1) with K on the sublane axis (no reshapes/relayouts).
    """
    B = q.shape[0]
    K = keys.shape[0]
    H = w1q_ref.shape[1]
    assert H % _CHUNK == 0, "hidden width must be a multiple of 128"
    scores = jnp.zeros((B, K, 1), jnp.float32)
    for c in range(H // _CHUNK):
        lo = c * _CHUNK
        # fold b1 into the tiny (B, 128) query tile (added H times, not K*H times)
        hq = jnp.dot(q, w1q_ref[:, lo:lo + _CHUNK],
                     preferred_element_type=jnp.float32) + b1_ref[0, lo:lo + _CHUNK]
        hk = jnp.dot(keys, w1k_ref[:, lo:lo + _CHUNK],
                     preferred_element_type=jnp.float32)
        h = act_fn(hq[:, None, :] + hk[None, :, :])                  # (B, K, 128)
        w2row = w2row_ref[:, lo:lo + _CHUNK]                         # (1, 128) lane-dense
        scores = scores + jnp.sum(h * w2row[None, :, :], axis=-1, keepdims=True)
    return scores                                                    # (B, K, 1)


def _readhead_kernel(q_ref, keys_ref, payload_ref,
                     saw1q_ref, saw1k_ref, sab1_ref, saw2_ref,
                     eaw1q_ref, eaw1m_ref, eab1_ref, eaw2_ref,
                     out_ref, *, topk):
    B, E = q_ref.shape
    K = keys_ref.shape[0]
    A = payload_ref.shape[1] - 1

    q = q_ref[...]                        # (B, E)
    keys = keys_ref[...]                  # (K, E) state-feature columns (pre-split)

    # ---- stage 1: StateAttention scores (relu MLP scorer) -------------------
    # fc2 bias omitted: a constant shift does not change the top-k ranking.
    s1 = _chunked_mlp_scores(q, keys, saw1q_ref, saw1k_ref, sab1_ref, saw2_ref, _relu)

    # ---- in-kernel top-k: iterative (max, lowest-index tie-break, mask) -----
    # softmax is monotonic, so top-k on raw scores == top-k on attention weights.
    idx = jax.lax.broadcasted_iota(jnp.int32, (B, K, 1), 1).astype(jnp.float32)
    big = jnp.float32(K)
    neg_inf = jnp.float32(-jnp.inf)
    work = s1
    keep = jnp.zeros((B, K, 1), jnp.float32)          # 1.0 on selected top-k slots
    for _ in range(topk):                             # topk is small and static
        row_max = jnp.max(work, axis=1, keepdims=True)          # (B, 1, 1)
        cand = jnp.where(work >= row_max, idx, big)
        sel_idx = jnp.min(cand, axis=1, keepdims=True)          # lowest index at max
        sel = idx == sel_idx                                    # one-hot over K
        keep = jnp.maximum(keep, sel.astype(jnp.float32))
        work = jnp.where(sel, neg_inf, work)

    # ---- stage 2: ActionResultAttention over the selected slots -------------
    # Masked softmax over all K slots == softmax over the gathered top-k rows:
    # non-selected slots get -inf scores, i.e. exactly zero attention weight,
    # which makes the explicit gather unnecessary.  fc2 bias cancels under softmax.
    s2 = _chunked_mlp_scores(q, keys, eaw1q_ref, eaw1m_ref, eab1_ref, eaw2_ref,
                             _gelu_exact)
    s2 = jnp.where(keep > 0.5, s2, neg_inf)
    row_max2 = jnp.max(s2, axis=1, keepdims=True)
    e = jnp.exp(s2 - row_max2)                                  # masked slots -> 0
    denom = jnp.sum(e, axis=1, keepdims=True)                   # (B, 1, 1)
    attn = e / denom                                            # exact divide (tiny)

    # payload = [trunc(actions) | result]; torch does actions.long() (trunc toward 0)
    payload = payload_ref[...]                                  # (K, A + 1)
    col = jax.lax.broadcasted_iota(jnp.int32, payload.shape, 1)
    payload = jnp.where(col < A, jnp.trunc(payload), payload)

    # packed output slab: [:, :A] = weighted_actions, [:, A:] = weighted_results
    out_ref[...] = jnp.sum(attn * payload[None, :, :], axis=1)  # (B, A + 1)


# --------------------------------------------------------------------------
# ReadHead forward: one fused pallas_call, wrapper only splits memory / w2 and
# unpacks the output slab.
# --------------------------------------------------------------------------
def read_head_forward(state_features, memory, params, *, topk):
    B, E = state_features.shape
    K, M = memory.shape
    A = M - E - 1
    # Pre-split memory into lane-aligned operands (keys for the scorers, payload
    # for the weighted sums) and pass fc2 weights lane-major ((1, H) row vectors;
    # (H,1)->(1,H) is a pure reshape, no data movement).
    keys = memory[:, :E]
    payload = memory[:, E:]
    sa_w2_row = params["sa_w2"].reshape(1, -1)
    ea_w2_row = params["ea_w2"].reshape(1, -1)
    operands = (state_features, keys, payload,
                params["sa_w1q"], params["sa_w1k"], params["sa_b1"], sa_w2_row,
                params["ea_w1q"], params["ea_w1m"], params["ea_b1"], ea_w2_row)
    packed = pl.pallas_call(
        functools.partial(_readhead_kernel, topk=topk),
        out_shape=jax.ShapeDtypeStruct((B, A + 1), jnp.float32),
        grid=(1,),
        in_specs=[_full_spec(x.shape) for x in operands],
        out_specs=_full_spec((B, A + 1)),
        compiler_params=pltpu.CompilerParams(dimension_semantics=("arbitrary",)),
    )(*operands)
    weighted_actions = packed[:, :A]
    weighted_results = packed[:, A:]
    return weighted_results, weighted_actions


# --------------------------------------------------------------------------
# Deterministic parameter init (PyTorch nn.Linear-style uniform).
# fc1 weights are stored pre-split into [query | key] halves for the kernel;
# fc2 biases are kept for the reference but are mathematically inert in ReadHead.
# --------------------------------------------------------------------------
def _linear_params(key, fan_in, fan_out):
    kw, kb = jax.random.split(key)
    bound = 1.0 / float(fan_in) ** 0.5
    w = jax.random.uniform(kw, (fan_in, fan_out), jnp.float32, -bound, bound)
    b = jax.random.uniform(kb, (1, fan_out), jnp.float32, -bound, bound)
    return w, b


def init_readhead_params(key, E):
    k1, k2, k3, k4 = jax.random.split(key, 4)
    sa_w1, sa_b1 = _linear_params(k1, 2 * E, 512)   # StateAttention.fc1
    sa_w2, sa_b2 = _linear_params(k2, 512, 1)       # StateAttention.fc2
    ea_w1, ea_b1 = _linear_params(k3, 2 * E, 256)   # ActionResultAttention.fc1
    ea_w2, ea_b2 = _linear_params(k4, 256, 1)       # ActionResultAttention.fc2
    return dict(
        sa_w1q=sa_w1[:E], sa_w1k=sa_w1[E:], sa_b1=sa_b1, sa_w2=sa_w2, sa_b2=sa_b2,
        ea_w1q=ea_w1[:E], ea_w1m=ea_w1[E:], ea_b1=ea_b1, ea_w2=ea_w2, ea_b2=ea_b2)


# --------------------------------------------------------------------------
# Pure-JAX reference (mirrors the torch forward, incl. top_k + gather + b2)
# --------------------------------------------------------------------------
def readhead_reference(state_features, memory, params, E, topk):
    B = state_features.shape[0]
    K = memory.shape[0]
    sa_w1 = jnp.concatenate([params["sa_w1q"], params["sa_w1k"]], axis=0)
    ea_w1 = jnp.concatenate([params["ea_w1q"], params["ea_w1m"]], axis=0)
    fm = memory[:, :E]
    comb = jnp.concatenate(
        [jnp.broadcast_to(state_features[:, None, :], (B, K, E)),
         jnp.broadcast_to(fm[None, :, :], (B, K, E))], axis=-1)
    h = jax.nn.relu(comb @ sa_w1 + params["sa_b1"][0])
    scores = (h @ params["sa_w2"])[..., 0] + params["sa_b2"][0, 0]
    attw = jax.nn.softmax(scores, axis=1)
    _, idx = jax.lax.top_k(attw, topk)
    rel = jnp.take(memory, idx, axis=0)
    mf = rel[..., :E]
    act = jnp.trunc(rel[..., E:-1])
    res = rel[..., -1]
    comb2 = jnp.concatenate(
        [jnp.broadcast_to(state_features[:, None, :], (B, topk, E)), mf], axis=-1)
    h2 = comb2 @ ea_w1 + params["ea_b1"][0]
    h2 = 0.5 * h2 * (1.0 + jax.lax.erf(h2 * _INV_SQRT2))
    sc2 = (h2 @ params["ea_w2"])[..., 0] + params["ea_b2"][0, 0]
    aw2 = jax.nn.softmax(sc2, axis=1)
    wact = jnp.sum(act * aw2[..., None], axis=1)
    wres = jnp.sum(res * aw2, axis=1, keepdims=True)
    return wres, wact


if __name__ == "__main__":
    B, E, K, A, TOPK = 2, 32, 64, 4, 8          # batch, feature, slots, action dims, topk
    M = E + A + 1                                # memory row width
    key = jax.random.PRNGKey(0)
    k_state, k_mem, k_par = jax.random.split(key, 3)

    state_features = jax.random.normal(k_state, (B, E), jnp.float32)
    memory = jax.random.normal(k_mem, (K, M), jnp.float32) * 2.0
    params = init_readhead_params(k_par, E)

    fwd = jax.jit(functools.partial(read_head_forward, topk=TOPK))
    weighted_results, weighted_actions = fwd(state_features, memory, params)
    jax.block_until_ready((weighted_results, weighted_actions))

    assert weighted_results.shape == (B, 1)
    assert weighted_actions.shape == (B, A)

    ref_res, ref_act = readhead_reference(state_features, memory, params, E, TOPK)
    # tolerance covers f32 summation-order / default-precision differences between
    # the chunked in-kernel matmuls and the XLA reference; the softmax divide is
    # now exact.
    assert jnp.allclose(weighted_results, ref_res, atol=2e-3, rtol=2e-3)
    assert jnp.allclose(weighted_actions, ref_act, atol=2e-3, rtol=2e-3)

    print("KERNEL_OK")
</pallas_src>

<mosaic_0001>
module attributes {stable_mosaic.version = 11 : i64} {
  func.func @_readhead_kernel(%arg0: i32, %arg1: memref<2x32xf32, #tpu.memory_space<vmem>>, %arg2: memref<64x32xf32, #tpu.memory_space<vmem>>, %arg3: memref<64x5xf32, #tpu.memory_space<vmem>>, %arg4: memref<32x512xf32, #tpu.memory_space<vmem>>, %arg5: memref<32x512xf32, #tpu.memory_space<vmem>>, %arg6: memref<1x512xf32, #tpu.memory_space<vmem>>, %arg7: memref<1x512xf32, #tpu.memory_space<vmem>>, %arg8: memref<32x256xf32, #tpu.memory_space<vmem>>, %arg9: memref<32x256xf32, #tpu.memory_space<vmem>>, %arg10: memref<1x256xf32, #tpu.memory_space<vmem>>, %arg11: memref<1x256xf32, #tpu.memory_space<vmem>>, %arg12: memref<2x5xf32, #tpu.memory_space<vmem>>) attributes {dimension_semantics = [#tpu.dimension_semantics<arbitrary>], iteration_bounds = array<i64: 1>, scalar_prefetch = 0 : i64, scratch_operands = 0 : i64, tpu.core_type = #tpu.core_type<tc>, window_params = [{pipeline_mode = #tpu.pipeline_mode<synchronous>, transform_indices = @transform_0, window_bounds = array<i64: 2, 32>}, {pipeline_mode = #tpu.pipeline_mode<synchronous>, transform_indices = @transform_1, window_bounds = array<i64: 64, 32>}, {pipeline_mode = #tpu.pipeline_mode<synchronous>, transform_indices = @transform_2, window_bounds = array<i64: 64, 5>}, {pipeline_mode = #tpu.pipeline_mode<synchronous>, transform_indices = @transform_3, window_bounds = array<i64: 32, 512>}, {pipeline_mode = #tpu.pipeline_mode<synchronous>, transform_indices = @transform_4, window_bounds = array<i64: 32, 512>}, {pipeline_mode = #tpu.pipeline_mode<synchronous>, transform_indices = @transform_5, window_bounds = array<i64: 1, 512>}, {pipeline_mode = #tpu.pipeline_mode<synchronous>, transform_indices = @transform_6, window_bounds = array<i64: 1, 512>}, {pipeline_mode = #tpu.pipeline_mode<synchronous>, transform_indices = @transform_7, window_bounds = array<i64: 32, 256>}, {pipeline_mode = #tpu.pipeline_mode<synchronous>, transform_indices = @transform_8, window_bounds = array<i64: 32, 256>}, {pipeline_mode = #tpu.pipeline_mode<synchronous>, transform_indices = @transform_9, window_bounds = array<i64: 1, 256>}, {pipeline_mode = #tpu.pipeline_mode<synchronous>, transform_indices = @transform_10, window_bounds = array<i64: 1, 256>}, {pipeline_mode = #tpu.pipeline_mode<synchronous>, transform_indices = @transform_11, window_bounds = array<i64: 2, 5>}]} {
    %c0 = arith.constant 0 : index
    %c0_0 = arith.constant 0 : index
    %0 = vector.load %arg1[%c0, %c0_0] : memref<2x32xf32, #tpu.memory_space<vmem>>, vector<2x32xf32>
    %c0_1 = arith.constant 0 : index
    %c0_2 = arith.constant 0 : index
    %1 = vector.load %arg2[%c0_1, %c0_2] : memref<64x32xf32, #tpu.memory_space<vmem>>, vector<64x32xf32>
    %cst = arith.constant 0.000000e+00 : f32
    %2 = vector.broadcast %cst : f32 to vector<2x64x1xf32>
    %c0_3 = arith.constant 0 : index
    %c0_4 = arith.constant 0 : index
    %3 = vector.load %arg4[%c0_3, %c0_4] : memref<32x512xf32, #tpu.memory_space<vmem>>, vector<32x128xf32>
    %cst_5 = arith.constant dense<0.000000e+00> : vector<2x128xf32>
    %4 = tpu.matmul %0, %3, %cst_5 {dimension_numbers = #tpu.dot_dimension_numbers<[1], [0], [0], [1], [0, 0, 1, 1], [], []>} : vector<2x32xf32>, vector<32x128xf32>, vector<2x128xf32> -> vector<2x128xf32>
    %c0_6 = arith.constant 0 : index
    %c0_7 = arith.constant 0 : index
    %5 = vector.load %arg6[%c0_6, %c0_7] : memref<1x512xf32, #tpu.memory_space<vmem>>, vector<1x128xf32>
    %6 = vector.shape_cast %5 : vector<1x128xf32> to vector<128xf32>
    %7 = vector.shape_cast %6 : vector<128xf32> to vector<1x128xf32>
    %8 = vector.broadcast %7 : vector<1x128xf32> to vector<2x128xf32>
    %9 = arith.addf %4, %8 : vector<2x128xf32>
    %c0_8 = arith.constant 0 : index
    %c0_9 = arith.constant 0 : index
    %10 = vector.load %arg5[%c0_8, %c0_9] : memref<32x512xf32, #tpu.memory_space<vmem>>, vector<32x128xf32>
    %cst_10 = arith.constant dense<0.000000e+00> : vector<64x128xf32>
    %11 = tpu.matmul %1, %10, %cst_10 {dimension_numbers = #tpu.dot_dimension_numbers<[1], [0], [0], [1], [0, 0, 1, 1], [], []>} : vector<64x32xf32>, vector<32x128xf32>, vector<64x128xf32> -> vector<64x128xf32>
    %12 = vector.shape_cast %9 : vector<2x128xf32> to vector<2x1x128xf32>
    %13 = vector.shape_cast %11 : vector<64x128xf32> to vector<1x64x128xf32>
    %14 = vector.broadcast %12 : vector<2x1x128xf32> to vector<2x64x128xf32>
    %15 = vector.broadcast %13 : vector<1x64x128xf32> to vector<2x64x128xf32>
    %16 = arith.addf %14, %15 : vector<2x64x128xf32>
    %cst_11 = arith.constant 0.000000e+00 : f32
    %17 = vector.broadcast %cst_11 : f32 to vector<2x64x128xf32>
    %18 = arith.maximumf %16, %17 : vector<2x64x128xf32>
    %c0_12 = arith.constant 0 : index
    %c0_13 = arith.constant 0 : index
    %19 = vector.load %arg7[%c0_12, %c0_13] : memref<1x512xf32, #tpu.memory_space<vmem>>, vector<1x128xf32>
    %20 = vector.shape_cast %19 : vector<1x128xf32> to vector<1x1x128xf32>
    %21 = vector.broadcast %20 : vector<1x1x128xf32> to vector<2x64x128xf32>
    %22 = arith.mulf %18, %21 : vector<2x64x128xf32>
    %cst_14 = arith.constant dense<0.000000e+00> : vector<2x64xf32>
    %23 = vector.multi_reduction <add>, %22, %cst_14 [2] : vector<2x64x128xf32> to vector<2x64xf32>
    %24 = vector.shape_cast %23 : vector<2x64xf32> to vector<2x64x1xf32>
    %25 = arith.addf %2, %24 : vector<2x64x1xf32>
    %c0_15 = arith.constant 0 : index
    %c128 = arith.constant 128 : index
    %26 = vector.load %arg4[%c0_15, %c128] : memref<32x512xf32, #tpu.memory_space<vmem>>, vector<32x128xf32>
    %cst_16 = arith.constant dense<0.000000e+00> : vector<2x128xf32>
    %27 = tpu.matmul %0, %26, %cst_16 {dimension_numbers = #tpu.dot_dimension_numbers<[1], [0], [0], [1], [0, 0, 1, 1], [], []>} : vector<2x32xf32>, vector<32x128xf32>, vector<2x128xf32> -> vector<2x128xf32>
    %c0_17 = arith.constant 0 : index
    %c128_18 = arith.constant 128 : index
    %28 = vector.load %arg6[%c0_17, %c128_18] : memref<1x512xf32, #tpu.memory_space<vmem>>, vector<1x128xf32>
    %29 = vector.shape_cast %28 : vector<1x128xf32> to vector<128xf32>
    %30 = vector.shape_cast %29 : vector<128xf32> to vector<1x128xf32>
    %31 = vector.broadcast %30 : vector<1x128xf32> to vector<2x128xf32>
    %32 = arith.addf %27, %31 : vector<2x128xf32>
    %c0_19 = arith.constant 0 : index
    %c128_20 = arith.constant 128 : index
    %33 = vector.load %arg5[%c0_19, %c128_20] : memref<32x512xf32, #tpu.memory_space<vmem>>, vector<32x128xf32>
    %cst_21 = arith.constant dense<0.000000e+00> : vector<64x128xf32>
    %34 = tpu.matmul %1, %33, %cst_21 {dimension_numbers = #tpu.dot_dimension_numbers<[1], [0], [0], [1], [0, 0, 1, 1], [], []>} : vector<64x32xf32>, vector<32x128xf32>, vector<64x128xf32> -> vector<64x128xf32>
    %35 = vector.shape_cast %32 : vector<2x128xf32> to vector<2x1x128xf32>
    %36 = vector.shape_cast %34 : vector<64x128xf32> to vector<1x64x128xf32>
    %37 = vector.broadcast %35 : vector<2x1x128xf32> to vector<2x64x128xf32>
    %38 = vector.broadcast %36 : vector<1x64x128xf32> to vector<2x64x128xf32>
    %39 = arith.addf %37, %38 : vector<2x64x128xf32>
    %cst_22 = arith.constant 0.000000e+00 : f32
    %40 = vector.broadcast %cst_22 : f32 to vector<2x64x128xf32>
    %41 = arith.maximumf %39, %40 : vector<2x64x128xf32>
    %c0_23 = arith.constant 0 : index
    %c128_24 = arith.constant 128 : index
    %42 = vector.load %arg7[%c0_23, %c128_24] : memref<1x512xf32, #tpu.memory_space<vmem>>, vector<1x128xf32>
    %43 = vector.shape_cast %42 : vector<1x128xf32> to vector<1x1x128xf32>
    %44 = vector.broadcast %43 : vector<1x1x128xf32> to vector<2x64x128xf32>
    %45 = arith.mulf %41, %44 : vector<2x64x128xf32>
    %cst_25 = arith.constant dense<0.000000e+00> : vector<2x64xf32>
    %46 = vector.multi_reduction <add>, %45, %cst_25 [2] : vector<2x64x128xf32> to vector<2x64xf32>
    %47 = vector.shape_cast %46 : vector<2x64xf32> to vector<2x64x1xf32>
    %48 = arith.addf %25, %47 : vector<2x64x1xf32>
    %c0_26 = arith.constant 0 : index
    %c256 = arith.constant 256 : index
    %49 = vector.load %arg4[%c0_26, %c256] : memref<32x512xf32, #tpu.memory_space<vmem>>, vector<32x128xf32>
    %cst_27 = arith.constant dense<0.000000e+00> : vector<2x128xf32>
    %50 = tpu.matmul %0, %49, %cst_27 {dimension_numbers = #tpu.dot_dimension_numbers<[1], [0], [0], [1], [0, 0, 1, 1], [], []>} : vector<2x32xf32>, vector<32x128xf32>, vector<2x128xf32> -> vector<2x128xf32>
    %c0_28 = arith.constant 0 : index
    %c256_29 = arith.constant 256 : index
    %51 = vector.load %arg6[%c0_28, %c256_29] : memref<1x512xf32, #tpu.memory_space<vmem>>, vector<1x128xf32>
    %52 = vector.shape_cast %51 : vector<1x128xf32> to vector<128xf32>
    %53 = vector.shape_cast %52 : vector<128xf32> to vector<1x128xf32>
    %54 = vector.broadcast %53 : vector<1x128xf32> to vector<2x128xf32>
    %55 = arith.addf %50, %54 : vector<2x128xf32>
    %c0_30 = arith.constant 0 : index
    %c256_31 = arith.constant 256 : index
    %56 = vector.load %arg5[%c0_30, %c256_31] : memref<32x512xf32, #tpu.memory_space<vmem>>, vector<32x128xf32>
    %cst_32 = arith.constant dense<0.000000e+00> : vector<64x128xf32>
    %57 = tpu.matmul %1, %56, %cst_32 {dimension_numbers = #tpu.dot_dimension_numbers<[1], [0], [0], [1], [0, 0, 1, 1], [], []>} : vector<64x32xf32>, vector<32x128xf32>, vector<64x128xf32> -> vector<64x128xf32>
    %58 = vector.shape_cast %55 : vector<2x128xf32> to vector<2x1x128xf32>
    %59 = vector.shape_cast %57 : vector<64x128xf32> to vector<1x64x128xf32>
    %60 = vector.broadcast %58 : vector<2x1x128xf32> to vector<2x64x128xf32>
    %61 = vector.broadcast %59 : vector<1x64x128xf32> to vector<2x64x128xf32>
    %62 = arith.addf %60, %61 : vector<2x64x128xf32>
    %cst_33 = arith.constant 0.000000e+00 : f32
    %63 = vector.broadcast %cst_33 : f32 to vector<2x64x128xf32>
    %64 = arith.maximumf %62, %63 : vector<2x64x128xf32>
    %c0_34 = arith.constant 0 : index
    %c256_35 = arith.constant 256 : index
    %65 = vector.load %arg7[%c0_34, %c256_35] : memref<1x512xf32, #tpu.memory_space<vmem>>, vector<1x128xf32>
    %66 = vector.shape_cast %65 : vector<1x128xf32> to vector<1x1x128xf32>
    %67 = vector.broadcast %66 : vector<1x1x128xf32> to vector<2x64x128xf32>
    %68 = arith.mulf %64, %67 : vector<2x64x128xf32>
    %cst_36 = arith.constant dense<0.000000e+00> : vector<2x64xf32>
    %69 = vector.multi_reduction <add>, %68, %cst_36 [2] : vector<2x64x128xf32> to vector<2x64xf32>
    %70 = vector.shape_cast %69 : vector<2x64xf32> to vector<2x64x1xf32>
    %71 = arith.addf %48, %70 : vector<2x64x1xf32>
    %c0_37 = arith.constant 0 : index
    %c384 = arith.constant 384 : index
    %72 = vector.load %arg4[%c0_37, %c384] : memref<32x512xf32, #tpu.memory_space<vmem>>, vector<32x128xf32>
    %cst_38 = arith.constant dense<0.000000e+00> : vector<2x128xf32>
    %73 = tpu.matmul %0, %72, %cst_38 {dimension_numbers = #tpu.dot_dimension_numbers<[1], [0], [0], [1], [0, 0, 1, 1], [], []>} : vector<2x32xf32>, vector<32x128xf32>, vector<2x128xf32> -> vector<2x128xf32>
    %c0_39 = arith.constant 0 : index
    %c384_40 = arith.constant 384 : index
    %74 = vector.load %arg6[%c0_39, %c384_40] : memref<1x512xf32, #tpu.memory_space<vmem>>, vector<1x128xf32>
    %75 = vector.shape_cast %74 : vector<1x128xf32> to vector<128xf32>
    %76 = vector.shape_cast %75 : vector<128xf32> to vector<1x128xf32>
    %77 = vector.broadcast %76 : vector<1x128xf32> to vector<2x128xf32>
    %78 = arith.addf %73, %77 : vector<2x128xf32>
    %c0_41 = arith.constant 0 : index
    %c384_42 = arith.constant 384 : index
    %79 = vector.load %arg5[%c0_41, %c384_42] : memref<32x512xf32, #tpu.memory_space<vmem>>, vector<32x128xf32>
    %cst_43 = arith.constant dense<0.000000e+00> : vector<64x128xf32>
    %80 = tpu.matmul %1, %79, %cst_43 {dimension_numbers = #tpu.dot_dimension_numbers<[1], [0], [0], [1], [0, 0, 1, 1], [], []>} : vector<64x32xf32>, vector<32x128xf32>, vector<64x128xf32> -> vector<64x128xf32>
    %81 = vector.shape_cast %78 : vector<2x128xf32> to vector<2x1x128xf32>
    %82 = vector.shape_cast %80 : vector<64x128xf32> to vector<1x64x128xf32>
    %83 = vector.broadcast %81 : vector<2x1x128xf32> to vector<2x64x128xf32>
    %84 = vector.broadcast %82 : vector<1x64x128xf32> to vector<2x64x128xf32>
    %85 = arith.addf %83, %84 : vector<2x64x128xf32>
    %cst_44 = arith.constant 0.000000e+00 : f32
    %86 = vector.broadcast %cst_44 : f32 to vector<2x64x128xf32>
    %87 = arith.maximumf %85, %86 : vector<2x64x128xf32>
    %c0_45 = arith.constant 0 : index
    %c384_46 = arith.constant 384 : index
    %88 = vector.load %arg7[%c0_45, %c384_46] : memref<1x512xf32, #tpu.memory_space<vmem>>, vector<1x128xf32>
    %89 = vector.shape_cast %88 : vector<1x128xf32> to vector<1x1x128xf32>
    %90 = vector.broadcast %89 : vector<1x1x128xf32> to vector<2x64x128xf32>
    %91 = arith.mulf %87, %90 : vector<2x64x128xf32>
    %cst_47 = arith.constant dense<0.000000e+00> : vector<2x64xf32>
    %92 = vector.multi_reduction <add>, %91, %cst_47 [2] : vector<2x64x128xf32> to vector<2x64xf32>
    %93 = vector.shape_cast %92 : vector<2x64xf32> to vector<2x64x1xf32>
    %94 = arith.addf %71, %93 : vector<2x64x1xf32>
    %95 = tpu.iota {dimensions = array<i32: 1>} : vector<2x64x1xi32>
    %96 = arith.sitofp %95 : vector<2x64x1xi32> to vector<2x64x1xf32>
    %cst_48 = arith.constant 0.000000e+00 : f32
    %97 = vector.broadcast %cst_48 : f32 to vector<2x64x1xf32>
    %cst_49 = arith.constant dense<0xFF800000> : vector<2x1xf32>
    %98 = vector.multi_reduction <maximumf>, %94, %cst_49 [1] : vector<2x64x1xf32> to vector<2x1xf32>
    %99 = vector.shape_cast %98 : vector<2x1xf32> to vector<2x1x1xf32>
    %100 = vector.broadcast %99 : vector<2x1x1xf32> to vector<2x64x1xf32>
    %101 = arith.cmpf oge, %94, %100 : vector<2x64x1xf32>
    %cst_50 = arith.constant 6.400000e+01 : f32
    %102 = vector.broadcast %cst_50 : f32 to vector<2x64x1xf32>
    %103 = arith.select %101, %96, %102 : vector<2x64x1xi1>, vector<2x64x1xf32>
    %cst_51 = arith.constant dense<0x7F800000> : vector<2x1xf32>
    %104 = vector.multi_reduction <minimumf>, %103, %cst_51 [1] : vector<2x64x1xf32> to vector<2x1xf32>
    %105 = vector.shape_cast %104 : vector<2x1xf32> to vector<2x1x1xf32>
    %106 = vector.broadcast %105 : vector<2x1x1xf32> to vector<2x64x1xf32>
    %107 = arith.cmpf oeq, %96, %106 : vector<2x64x1xf32>
    %108 = arith.extui %107 : vector<2x64x1xi1> to vector<2x64x1xi32>
    %109 = arith.sitofp %108 : vector<2x64x1xi32> to vector<2x64x1xf32>
    %110 = arith.maximumf %97, %109 : vector<2x64x1xf32>
    %cst_52 = arith.constant 0xFF800000 : f32
    %111 = vector.broadcast %cst_52 : f32 to vector<2x64x1xf32>
    %112 = arith.select %107, %111, %94 : vector<2x64x1xi1>, vector<2x64x1xf32>
    %cst_53 = arith.constant dense<0xFF800000> : vector<2x1xf32>
    %113 = vector.multi_reduction <maximumf>, %112, %cst_53 [1] : vector<2x64x1xf32> to vector<2x1xf32>
    %114 = vector.shape_cast %113 : vector<2x1xf32> to vector<2x1x1xf32>
    %115 = vector.broadcast %114 : vector<2x1x1xf32> to vector<2x64x1xf32>
    %116 = arith.cmpf oge, %112, %115 : vector<2x64x1xf32>
    %cst_54 = arith.constant 6.400000e+01 : f32
    %117 = vector.broadcast %cst_54 : f32 to vector<2x64x1xf32>
    %118 = arith.select %116, %96, %117 : vector<2x64x1xi1>, vector<2x64x1xf32>
    %cst_55 = arith.constant dense<0x7F800000> : vector<2x1xf32>
    %119 = vector.multi_reduction <minimumf>, %118, %cst_55 [1] : vector<2x64x1xf32> to vector<2x1xf32>
    %120 = vector.shape_cast %119 : vector<2x1xf32> to vector<2x1x1xf32>
    %121 = vector.broadcast %120 : vector<2x1x1xf32> to vector<2x64x1xf32>
    %122 = arith.cmpf oeq, %96, %121 : vector<2x64x1xf32>
    %123 = arith.extui %122 : vector<2x64x1xi1> to vector<2x64x1xi32>
    %124 = arith.sitofp %123 : vector<2x64x1xi32> to vector<2x64x1xf32>
    %125 = arith.maximumf %110, %124 : vector<2x64x1xf32>
    %cst_56 = arith.constant 0xFF800000 : f32
    %126 = vector.broadcast %cst_56 : f32 to vector<2x64x1xf32>
    %127 = arith.select %122, %126, %112 : vector<2x64x1xi1>, vector<2x64x1xf32>
    %cst_57 = arith.constant dense<0xFF800000> : vector<2x1xf32>
    %128 = vector.multi_reduction <maximumf>, %127, %cst_57 [1] : vector<2x64x1xf32> to vector<2x1xf32>
    %129 = vector.shape_cast %128 : vector<2x1xf32> to vector<2x1x1xf32>
    %130 = vector.broadcast %129 : vector<2x1x1xf32> to vector<2x64x1xf32>
    %131 = arith.cmpf oge, %127, %130 : vector<2x64x1xf32>
    %cst_58 = arith.constant 6.400000e+01 : f32
    %132 = vector.broadcast %cst_58 : f32 to vector<2x64x1xf32>
    %133 = arith.select %131, %96, %132 : vector<2x64x1xi1>, vector<2x64x1xf32>
    %cst_59 = arith.constant dense<0x7F800000> : vector<2x1xf32>
    %134 = vector.multi_reduction <minimumf>, %133, %cst_59 [1] : vector<2x64x1xf32> to vector<2x1xf32>
    %135 = vector.shape_cast %134 : vector<2x1xf32> to vector<2x1x1xf32>
    %136 = vector.broadcast %135 : vector<2x1x1xf32> to vector<2x64x1xf32>
    %137 = arith.cmpf oeq, %96, %136 : vector<2x64x1xf32>
    %138 = arith.extui %137 : vector<2x64x1xi1> to vector<2x64x1xi32>
    %139 = arith.sitofp %138 : vector<2x64x1xi32> to vector<2x64x1xf32>
    %140 = arith.maximumf %125, %139 : vector<2x64x1xf32>
    %cst_60 = arith.constant 0xFF800000 : f32
    %141 = vector.broadcast %cst_60 : f32 to vector<2x64x1xf32>
    %142 = arith.select %137, %141, %127 : vector<2x64x1xi1>, vector<2x64x1xf32>
    %cst_61 = arith.constant dense<0xFF800000> : vector<2x1xf32>
    %143 = vector.multi_reduction <maximumf>, %142, %cst_61 [1] : vector<2x64x1xf32> to vector<2x1xf32>
    %144 = vector.shape_cast %143 : vector<2x1xf32> to vector<2x1x1xf32>
    %145 = vector.broadcast %144 : vector<2x1x1xf32> to vector<2x64x1xf32>
    %146 = arith.cmpf oge, %142, %145 : vector<2x64x1xf32>
    %cst_62 = arith.constant 6.400000e+01 : f32
    %147 = vector.broadcast %cst_62 : f32 to vector<2x64x1xf32>
    %148 = arith.select %146, %96, %147 : vector<2x64x1xi1>, vector<2x64x1xf32>
    %cst_63 = arith.constant dense<0x7F800000> : vector<2x1xf32>
    %149 = vector.multi_reduction <minimumf>, %148, %cst_63 [1] : vector<2x64x1xf32> to vector<2x1xf32>
    %150 = vector.shape_cast %149 : vector<2x1xf32> to vector<2x1x1xf32>
    %151 = vector.broadcast %150 : vector<2x1x1xf32> to vector<2x64x1xf32>
    %152 = arith.cmpf oeq, %96, %151 : vector<2x64x1xf32>
    %153 = arith.extui %152 : vector<2x64x1xi1> to vector<2x64x1xi32>
    %154 = arith.sitofp %153 : vector<2x64x1xi32> to vector<2x64x1xf32>
    %155 = arith.maximumf %140, %154 : vector<2x64x1xf32>
    %cst_64 = arith.constant 0xFF800000 : f32
    %156 = vector.broadcast %cst_64 : f32 to vector<2x64x1xf32>
    %157 = arith.select %152, %156, %142 : vector<2x64x1xi1>, vector<2x64x1xf32>
    %cst_65 = arith.constant dense<0xFF800000> : vector<2x1xf32>
    %158 = vector.multi_reduction <maximumf>, %157, %cst_65 [1] : vector<2x64x1xf32> to vector<2x1xf32>
    %159 = vector.shape_cast %158 : vector<2x1xf32> to vector<2x1x1xf32>
    %160 = vector.broadcast %159 : vector<2x1x1xf32> to vector<2x64x1xf32>
    %161 = arith.cmpf oge, %157, %160 : vector<2x64x1xf32>
    %cst_66 = arith.constant 6.400000e+01 : f32
    %162 = vector.broadcast %cst_66 : f32 to vector<2x64x1xf32>
    %163 = arith.select %161, %96, %162 : vector<2x64x1xi1>, vector<2x64x1xf32>
    %cst_67 = arith.constant dense<0x7F800000> : vector<2x1xf32>
    %164 = vector.multi_reduction <minimumf>, %163, %cst_67 [1] : vector<2x64x1xf32> to vector<2x1xf32>
    %165 = vector.shape_cast %164 : vector<2x1xf32> to vector<2x1x1xf32>
    %166 = vector.broadcast %165 : vector<2x1x1xf32> to vector<2x64x1xf32>
    %167 = arith.cmpf oeq, %96, %166 : vector<2x64x1xf32>
    %168 = arith.extui %167 : vector<2x64x1xi1> to vector<2x64x1xi32>
    %169 = arith.sitofp %168 : vector<2x64x1xi32> to vector<2x64x1xf32>
    %170 = arith.maximumf %155, %169 : vector<2x64x1xf32>
    %cst_68 = arith.constant 0xFF800000 : f32
    %171 = vector.broadcast %cst_68 : f32 to vector<2x64x1xf32>
    %172 = arith.select %167, %171, %157 : vector<2x64x1xi1>, vector<2x64x1xf32>
    %cst_69 = arith.constant dense<0xFF800000> : vector<2x1xf32>
    %173 = vector.multi_reduction <maximumf>, %172, %cst_69 [1] : vector<2x64x1xf32> to vector<2x1xf32>
    %174 = vector.shape_cast %173 : vector<2x1xf32> to vector<2x1x1xf32>
    %175 = vector.broadcast %174 : vector<2x1x1xf32> to vector<2x64x1xf32>
    %176 = arith.cmpf oge, %172, %175 : vector<2x64x1xf32>
    %cst_70 = arith.constant 6.400000e+01 : f32
    %177 = vector.broadcast %cst_70 : f32 to vector<2x64x1xf32>
    %178 = arith.select %176, %96, %177 : vector<2x64x1xi1>, vector<2x64x1xf32>
    %cst_71 = arith.constant dense<0x7F800000> : vector<2x1xf32>
    %179 = vector.multi_reduction <minimumf>, %178, %cst_71 [1] : vector<2x64x1xf32> to vector<2x1xf32>
    %180 = vector.shape_cast %179 : vector<2x1xf32> to vector<2x1x1xf32>
    %181 = vector.broadcast %180 : vector<2x1x1xf32> to vector<2x64x1xf32>
    %182 = arith.cmpf oeq, %96, %181 : vector<2x64x1xf32>
    %183 = arith.extui %182 : vector<2x64x1xi1> to vector<2x64x1xi32>
    %184 = arith.sitofp %183 : vector<2x64x1xi32> to vector<2x64x1xf32>
    %185 = arith.maximumf %170, %184 : vector<2x64x1xf32>
    %cst_72 = arith.constant 0xFF800000 : f32
    %186 = vector.broadcast %cst_72 : f32 to vector<2x64x1xf32>
    %187 = arith.select %182, %186, %172 : vector<2x64x1xi1>, vector<2x64x1xf32>
    %cst_73 = arith.constant dense<0xFF800000> : vector<2x1xf32>
    %188 = vector.multi_reduction <maximumf>, %187, %cst_73 [1] : vector<2x64x1xf32> to vector<2x1xf32>
    %189 = vector.shape_cast %188 : vector<2x1xf32> to vector<2x1x1xf32>
    %190 = vector.broadcast %189 : vector<2x1x1xf32> to vector<2x64x1xf32>
    %191 = arith.cmpf oge, %187, %190 : vector<2x64x1xf32>
    %cst_74 = arith.constant 6.400000e+01 : f32
    %192 = vector.broadcast %cst_74 : f32 to vector<2x64x1xf32>
    %193 = arith.select %191, %96, %192 : vector<2x64x1xi1>, vector<2x64x1xf32>
    %cst_75 = arith.constant dense<0x7F800000> : vector<2x1xf32>
    %194 = vector.multi_reduction <minimumf>, %193, %cst_75 [1] : vector<2x64x1xf32> to vector<2x1xf32>
    %195 = vector.shape_cast %194 : vector<2x1xf32> to vector<2x1x1xf32>
    %196 = vector.broadcast %195 : vector<2x1x1xf32> to vector<2x64x1xf32>
    %197 = arith.cmpf oeq, %96, %196 : vector<2x64x1xf32>
    %198 = arith.extui %197 : vector<2x64x1xi1> to vector<2x64x1xi32>
    %199 = arith.sitofp %198 : vector<2x64x1xi32> to vector<2x64x1xf32>
    %200 = arith.maximumf %185, %199 : vector<2x64x1xf32>
    %cst_76 = arith.constant 0xFF800000 : f32
    %201 = vector.broadcast %cst_76 : f32 to vector<2x64x1xf32>
    %202 = arith.select %197, %201, %187 : vector<2x64x1xi1>, vector<2x64x1xf32>
    %cst_77 = arith.constant dense<0xFF800000> : vector<2x1xf32>
    %203 = vector.multi_reduction <maximumf>, %202, %cst_77 [1] : vector<2x64x1xf32> to vector<2x1xf32>
    %204 = vector.shape_cast %203 : vector<2x1xf32> to vector<2x1x1xf32>
    %205 = vector.broadcast %204 : vector<2x1x1xf32> to vector<2x64x1xf32>
    %206 = arith.cmpf oge, %202, %205 : vector<2x64x1xf32>
    %cst_78 = arith.constant 6.400000e+01 : f32
    %207 = vector.broadcast %cst_78 : f32 to vector<2x64x1xf32>
    %208 = arith.select %206, %96, %207 : vector<2x64x1xi1>, vector<2x64x1xf32>
    %cst_79 = arith.constant dense<0x7F800000> : vector<2x1xf32>
    %209 = vector.multi_reduction <minimumf>, %208, %cst_79 [1] : vector<2x64x1xf32> to vector<2x1xf32>
    %210 = vector.shape_cast %209 : vector<2x1xf32> to vector<2x1x1xf32>
    %211 = vector.broadcast %210 : vector<2x1x1xf32> to vector<2x64x1xf32>
    %212 = arith.cmpf oeq, %96, %211 : vector<2x64x1xf32>
    %213 = arith.extui %212 : vector<2x64x1xi1> to vector<2x64x1xi32>
    %214 = arith.sitofp %213 : vector<2x64x1xi32> to vector<2x64x1xf32>
    %215 = arith.maximumf %200, %214 : vector<2x64x1xf32>
    %cst_80 = arith.constant 0.000000e+00 : f32
    %216 = vector.broadcast %cst_80 : f32 to vector<2x64x1xf32>
    %c0_81 = arith.constant 0 : index
    %c0_82 = arith.constant 0 : index
    %217 = vector.load %arg8[%c0_81, %c0_82] : memref<32x256xf32, #tpu.memory_space<vmem>>, vector<32x128xf32>
    %cst_83 = arith.constant dense<0.000000e+00> : vector<2x128xf32>
    %218 = tpu.matmul %0, %217, %cst_83 {dimension_numbers = #tpu.dot_dimension_numbers<[1], [0], [0], [1], [0, 0, 1, 1], [], []>} : vector<2x32xf32>, vector<32x128xf32>, vector<2x128xf32> -> vector<2x128xf32>
    %c0_84 = arith.constant 0 : index
    %c0_85 = arith.constant 0 : index
    %219 = vector.load %arg10[%c0_84, %c0_85] : memref<1x256xf32, #tpu.memory_space<vmem>>, vector<1x128xf32>
    %220 = vector.shape_cast %219 : vector<1x128xf32> to vector<128xf32>
    %221 = vector.shape_cast %220 : vector<128xf32> to vector<1x128xf32>
    %222 = vector.broadcast %221 : vector<1x128xf32> to vector<2x128xf32>
    %223 = arith.addf %218, %222 : vector<2x128xf32>
    %c0_86 = arith.constant 0 : index
    %c0_87 = arith.constant 0 : index
    %224 = vector.load %arg9[%c0_86, %c0_87] : memref<32x256xf32, #tpu.memory_space<vmem>>, vector<32x128xf32>
    %cst_88 = arith.constant dense<0.000000e+00> : vector<64x128xf32>
    %225 = tpu.matmul %1, %224, %cst_88 {dimension_numbers = #tpu.dot_dimension_numbers<[1], [0], [0], [1], [0, 0, 1, 1], [], []>} : vector<64x32xf32>, vector<32x128xf32>, vector<64x128xf32> -> vector<64x128xf32>
    %226 = vector.shape_cast %223 : vector<2x128xf32> to vector<2x1x128xf32>
    %227 = vector.shape_cast %225 : vector<64x128xf32> to vector<1x64x128xf32>
    %228 = vector.broadcast %226 : vector<2x1x128xf32> to vector<2x64x128xf32>
    %229 = vector.broadcast %227 : vector<1x64x128xf32> to vector<2x64x128xf32>
    %230 = arith.addf %228, %229 : vector<2x64x128xf32>
    %cst_89 = arith.constant 5.000000e-01 : f32
    %231 = vector.broadcast %cst_89 : f32 to vector<2x64x128xf32>
    %232 = arith.mulf %231, %230 : vector<2x64x128xf32>
    %cst_90 = arith.constant 0.707106769 : f32
    %233 = vector.broadcast %cst_90 : f32 to vector<2x64x128xf32>
    %234 = arith.mulf %230, %233 : vector<2x64x128xf32>
    %235 = math.erf %234 : vector<2x64x128xf32>
    %cst_91 = arith.constant 1.000000e+00 : f32
    %236 = vector.broadcast %cst_91 : f32 to vector<2x64x128xf32>
    %237 = arith.addf %236, %235 : vector<2x64x128xf32>
    %238 = arith.mulf %232, %237 : vector<2x64x128xf32>
    %c0_92 = arith.constant 0 : index
    %c0_93 = arith.constant 0 : index
    %239 = vector.load %arg11[%c0_92, %c0_93] : memref<1x256xf32, #tpu.memory_space<vmem>>, vector<1x128xf32>
    %240 = vector.shape_cast %239 : vector<1x128xf32> to vector<1x1x128xf32>
    %241 = vector.broadcast %240 : vector<1x1x128xf32> to vector<2x64x128xf32>
    %242 = arith.mulf %238, %241 : vector<2x64x128xf32>
    %cst_94 = arith.constant dense<0.000000e+00> : vector<2x64xf32>
    %243 = vector.multi_reduction <add>, %242, %cst_94 [2] : vector<2x64x128xf32> to vector<2x64xf32>
    %244 = vector.shape_cast %243 : vector<2x64xf32> to vector<2x64x1xf32>
    %245 = arith.addf %216, %244 : vector<2x64x1xf32>
    %c0_95 = arith.constant 0 : index
    %c128_96 = arith.constant 128 : index
    %246 = vector.load %arg8[%c0_95, %c128_96] : memref<32x256xf32, #tpu.memory_space<vmem>>, vector<32x128xf32>
    %cst_97 = arith.constant dense<0.000000e+00> : vector<2x128xf32>
    %247 = tpu.matmul %0, %246, %cst_97 {dimension_numbers = #tpu.dot_dimension_numbers<[1], [0], [0], [1], [0, 0, 1, 1], [], []>} : vector<2x32xf32>, vector<32x128xf32>, vector<2x128xf32> -> vector<2x128xf32>
    %c0_98 = arith.constant 0 : index
    %c128_99 = arith.constant 128 : index
    %248 = vector.load %arg10[%c0_98, %c128_99] : memref<1x256xf32, #tpu.memory_space<vmem>>, vector<1x128xf32>
    %249 = vector.shape_cast %248 : vector<1x128xf32> to vector<128xf32>
    %250 = vector.shape_cast %249 : vector<128xf32> to vector<1x128xf32>
    %251 = vector.broadcast %250 : vector<1x128xf32> to vector<2x128xf32>
    %252 = arith.addf %247, %251 : vector<2x128xf32>
    %c0_100 = arith.constant 0 : index
    %c128_101 = arith.constant 128 : index
    %253 = vector.load %arg9[%c0_100, %c128_101] : memref<32x256xf32, #tpu.memory_space<vmem>>, vector<32x128xf32>
    %cst_102 = arith.constant dense<0.000000e+00> : vector<64x128xf32>
    %254 = tpu.matmul %1, %253, %cst_102 {dimension_numbers = #tpu.dot_dimension_numbers<[1], [0], [0], [1], [0, 0, 1, 1], [], []>} : vector<64x32xf32>, vector<32x128xf32>, vector<64x128xf32> -> vector<64x128xf32>
    %255 = vector.shape_cast %252 : vector<2x128xf32> to vector<2x1x128xf32>
    %256 = vector.shape_cast %254 : vector<64x128xf32> to vector<1x64x128xf32>
    %257 = vector.broadcast %255 : vector<2x1x128xf32> to vector<2x64x128xf32>
    %258 = vector.broadcast %256 : vector<1x64x128xf32> to vector<2x64x128xf32>
    %259 = arith.addf %257, %258 : vector<2x64x128xf32>
    %cst_103 = arith.constant 5.000000e-01 : f32
    %260 = vector.broadcast %cst_103 : f32 to vector<2x64x128xf32>
    %261 = arith.mulf %260, %259 : vector<2x64x128xf32>
    %cst_104 = arith.constant 0.707106769 : f32
    %262 = vector.broadcast %cst_104 : f32 to vector<2x64x128xf32>
    %263 = arith.mulf %259, %262 : vector<2x64x128xf32>
    %264 = math.erf %263 : vector<2x64x128xf32>
    %cst_105 = arith.constant 1.000000e+00 : f32
    %265 = vector.broadcast %cst_105 : f32 to vector<2x64x128xf32>
    %266 = arith.addf %265, %264 : vector<2x64x128xf32>
    %267 = arith.mulf %261, %266 : vector<2x64x128xf32>
    %c0_106 = arith.constant 0 : index
    %c128_107 = arith.constant 128 : index
    %268 = vector.load %arg11[%c0_106, %c128_107] : memref<1x256xf32, #tpu.memory_space<vmem>>, vector<1x128xf32>
    %269 = vector.shape_cast %268 : vector<1x128xf32> to vector<1x1x128xf32>
    %270 = vector.broadcast %269 : vector<1x1x128xf32> to vector<2x64x128xf32>
    %271 = arith.mulf %267, %270 : vector<2x64x128xf32>
    %cst_108 = arith.constant dense<0.000000e+00> : vector<2x64xf32>
    %272 = vector.multi_reduction <add>, %271, %cst_108 [2] : vector<2x64x128xf32> to vector<2x64xf32>
    %273 = vector.shape_cast %272 : vector<2x64xf32> to vector<2x64x1xf32>
    %274 = arith.addf %245, %273 : vector<2x64x1xf32>
    %cst_109 = arith.constant 5.000000e-01 : f32
    %275 = vector.broadcast %cst_109 : f32 to vector<2x64x1xf32>
    %276 = arith.cmpf ogt, %215, %275 : vector<2x64x1xf32>
    %cst_110 = arith.constant 0xFF800000 : f32
    %277 = vector.broadcast %cst_110 : f32 to vector<2x64x1xf32>
    %278 = arith.select %276, %274, %277 : vector<2x64x1xi1>, vector<2x64x1xf32>
    %cst_111 = arith.constant dense<0xFF800000> : vector<2x1xf32>
    %279 = vector.multi_reduction <maximumf>, %278, %cst_111 [1] : vector<2x64x1xf32> to vector<2x1xf32>
    %280 = vector.shape_cast %279 : vector<2x1xf32> to vector<2x1x1xf32>
    %281 = vector.broadcast %280 : vector<2x1x1xf32> to vector<2x64x1xf32>
    %282 = arith.subf %278, %281 : vector<2x64x1xf32>
    %283 = math.exp %282 : vector<2x64x1xf32>
    %cst_112 = arith.constant dense<0.000000e+00> : vector<2x1xf32>
    %284 = vector.multi_reduction <add>, %283, %cst_112 [1] : vector<2x64x1xf32> to vector<2x1xf32>
    %285 = vector.shape_cast %284 : vector<2x1xf32> to vector<2x1x1xf32>
    %286 = vector.broadcast %285 : vector<2x1x1xf32> to vector<2x64x1xf32>
    %287 = arith.divf %283, %286 : vector<2x64x1xf32>
    %c0_113 = arith.constant 0 : index
    %c0_114 = arith.constant 0 : index
    %288 = vector.load %arg3[%c0_113, %c0_114] : memref<64x5xf32, #tpu.memory_space<vmem>>, vector<64x5xf32>
    %289 = tpu.iota {dimensions = array<i32: 1>} : vector<64x5xi32>
    %c4_i32 = arith.constant 4 : i32
    %290 = vector.broadcast %c4_i32 : i32 to vector<64x5xi32>
    %291 = arith.cmpi slt, %289, %290 : vector<64x5xi32>
    %cst_115 = arith.constant 0.000000e+00 : f32
    %292 = vector.broadcast %cst_115 : f32 to vector<64x5xf32>
    %293 = arith.cmpf olt, %288, %292 : vector<64x5xf32>
    %294 = math.ceil %288 : vector<64x5xf32>
    %295 = math.floor %288 : vector<64x5xf32>
    %296 = arith.select %293, %294, %295 : vector<64x5xi1>, vector<64x5xf32>
    %297 = arith.select %291, %296, %288 : vector<64x5xi1>, vector<64x5xf32>
    %298 = vector.shape_cast %297 : vector<64x5xf32> to vector<1x64x5xf32>
    %299 = vector.broadcast %287 : vector<2x64x1xf32> to vector<2x64x5xf32>
    %300 = vector.broadcast %298 : vector<1x64x5xf32> to vector<2x64x5xf32>
    %301 = arith.mulf %299, %300 : vector<2x64x5xf32>
    %cst_116 = arith.constant dense<0.000000e+00> : vector<2x5xf32>
    %302 = vector.multi_reduction <add>, %301, %cst_116 [1] : vector<2x64x5xf32> to vector<2x5xf32>
    %c0_117 = arith.constant 0 : index
    %c0_118 = arith.constant 0 : index
    %303 = vector.load %arg12[%c0_117, %c0_118] : memref<2x5xf32, #tpu.memory_space<vmem>>, vector<2x5xf32>
    tpu.vector_store %arg12[%c0_117, %c0_118], %302 {strides = array<i32>} : memref<2x5xf32, #tpu.memory_space<vmem>>, vector<2x5xf32>,
    return
  }
  func.func @transform_0(%arg0: i32) -> (i32, i32) {
    %c0_i32 = arith.constant 0 : i32
    %c0_i32_0 = arith.constant 0 : i32
    %c0_i32_1 = arith.constant 0 : i32
    return %c0_i32, %c0_i32_0 : i32, i32
  }
  func.func @transform_1(%arg0: i32) -> (i32, i32) {
    %c0_i32 = arith.constant 0 : i32
    %c0_i32_0 = arith.constant 0 : i32
    %c0_i32_1 = arith.constant 0 : i32
    return %c0_i32, %c0_i32_0 : i32, i32
  }
  func.func @transform_2(%arg0: i32) -> (i32, i32) {
    %c0_i32 = arith.constant 0 : i32
    %c0_i32_0 = arith.constant 0 : i32
    %c0_i32_1 = arith.constant 0 : i32
    return %c0_i32, %c0_i32_0 : i32, i32
  }
  func.func @transform_3(%arg0: i32) -> (i32, i32) {
    %c0_i32 = arith.constant 0 : i32
    %c0_i32_0 = arith.constant 0 : i32
    %c0_i32_1 = arith.constant 0 : i32
    return %c0_i32, %c0_i32_0 : i32, i32
  }
  func.func @transform_4(%arg0: i32) -> (i32, i32) {
    %c0_i32 = arith.constant 0 : i32
    %c0_i32_0 = arith.constant 0 : i32
    %c0_i32_1 = arith.constant 0 : i32
    return %c0_i32, %c0_i32_0 : i32, i32
  }
  func.func @transform_5(%arg0: i32) -> (i32, i32) {
    %c0_i32 = arith.constant 0 : i32
    %c0_i32_0 = arith.constant 0 : i32
    %c0_i32_1 = arith.constant 0 : i32
    return %c0_i32, %c0_i32_0 : i32, i32
  }
  func.func @transform_6(%arg0: i32) -> (i32, i32) {
    %c0_i32 = arith.constant 0 : i32
    %c0_i32_0 = arith.constant 0 : i32
    %c0_i32_1 = arith.constant 0 : i32
    return %c0_i32, %c0_i32_0 : i32, i32
  }
  func.func @transform_7(%arg0: i32) -> (i32, i32) {
    %c0_i32 = arith.constant 0 : i32
    %c0_i32_0 = arith.constant 0 : i32
    %c0_i32_1 = arith.constant 0 : i32
    return %c0_i32, %c0_i32_0 : i32, i32
  }
  func.func @transform_8(%arg0: i32) -> (i32, i32) {
    %c0_i32 = arith.constant 0 : i32
    %c0_i32_0 = arith.constant 0 : i32
    %c0_i32_1 = arith.constant 0 : i32
    return %c0_i32, %c0_i32_0 : i32, i32
  }
  func.func @transform_9(%arg0: i32) -> (i32, i32) {
    %c0_i32 = arith.constant 0 : i32
    %c0_i32_0 = arith.constant 0 : i32
    %c0_i32_1 = arith.constant 0 : i32
    return %c0_i32, %c0_i32_0 : i32, i32
  }
  func.func @transform_10(%arg0: i32) -> (i32, i32) {
    %c0_i32 = arith.constant 0 : i32
    %c0_i32_0 = arith.constant 0 : i32
    %c0_i32_1 = arith.constant 0 : i32
    return %c0_i32, %c0_i32_0 : i32, i32
  }
  func.func @transform_11(%arg0: i32) -> (i32, i32) {
    %c0_i32 = arith.constant 0 : i32
    %c0_i32_0 = arith.constant 0 : i32
    %c0_i32_1 = arith.constant 0 : i32
    return %c0_i32, %c0_i32_0 : i32, i32
  }
}

</mosaic_0001>

<llo_original>
// kernel: read_head_forward.1
$region0: #{read_head_forward.1}
  #allocation0 [shape = 'u32[]', space=smem, size = 0x4, offset = 0x4, fixed_abs, tag = 'smem constant byte address 0x4 - core index']
  #allocation1 [shape = 'u32[144,128]{1,0:T(1,128)}', space=vmem, size = 0x12000, scoped, tag = 'internal scratch']
  %s0 = inlined_call_operand.hbm [shape: f32[2,32], index: 0, kind: input, shape index: {}]
  %s1 = inlined_call_operand.vmem [shape: f32[64,32], index: 1, kind: input, shape index: {}]
  %s2 = inlined_call_operand.vmem [shape: f32[64,5], index: 2, kind: input, shape index: {}]
  %s3 = inlined_call_operand.vmem [shape: f32[32,512], index: 3, kind: input, shape index: {}]
  %s4 = inlined_call_operand.vmem [shape: f32[32,512], index: 4, kind: input, shape index: {}]
  %s5 = inlined_call_operand.hbm [shape: f32[1,512], index: 5, kind: input, shape index: {}]
  %s6 = inlined_call_operand.hbm [shape: f32[1,512], index: 6, kind: input, shape index: {}]
  %s7 = inlined_call_operand.hbm [shape: f32[32,256], index: 7, kind: input, shape index: {}]
  %s8 = inlined_call_operand.hbm [shape: f32[32,256], index: 8, kind: input, shape index: {}]
  %s9 = inlined_call_operand.hbm [shape: f32[1,256], index: 9, kind: input, shape index: {}]
  %s10 = inlined_call_operand.vmem [shape: f32[1,256], index: 10, kind: input, shape index: {}]
  %s11 = inlined_call_operand.vmem [shape: f32[2,5], index: 11, kind: output, shape index: {}]
  %s12 = sld [smem:[#allocation0]]
  $region78: #{read_head_forward.1} parent=0
    _
  %s14 = ssub.s32 1, %s12
  %s15 = scalar_select 0, %s14, %s12
  $region1: #{read_head_forward.1} parent=0
    #allocation2 [shape = 'u8[1024]{0}', space=vmem, size = 0x400, scoped, tag = 'input window, operand 0, single buffered']
    #allocation3 [shape = 's32[1]{0}', space=sflag, size = 0x4, scoped, tag = 'scoped memory for read_head_forward.1']
    #allocation4 [shape = 'u8[2048]{0}', space=vmem, size = 0x800, scoped, tag = 'input window, operand 5, single buffered']
    #allocation5 [shape = 's32[1]{0}', space=sflag, size = 0x4, scoped, tag = 'scoped memory for read_head_forward.1']
    #allocation6 [shape = 'u8[2048]{0}', space=vmem, size = 0x800, scoped, tag = 'input window, operand 6, single buffered']
    #allocation7 [shape = 'u8[32768]{0}', space=vmem, size = 0x8000, scoped, tag = 'input window, operand 7, single buffered']
    #allocation8 [shape = 's32[1]{0}', space=sflag, size = 0x4, scoped, tag = 'scoped memory for read_head_forward.1']
    #allocation9 [shape = 'u8[32768]{0}', space=vmem, size = 0x8000, scoped, tag = 'input window, operand 8, single buffered']
    #allocation10 [shape = 'u8[1024]{0}', space=vmem, size = 0x400, scoped, tag = 'input window, operand 9, single buffered']
    #allocation11 [shape = 's32[1]{0}', space=sflag, size = 0x4, scoped, tag = 'scoped memory for read_head_forward.1']
    %16 = vsyncpa [#allocation3], 0
    %17 = vsyncpa [#allocation5], 0
    %18 = vsyncpa [#allocation8], 0
    %19 = vsyncpa [#allocation11], 0
    // Predicated region
    $region2: #{read_head_forward.1} parent=1 // pred_check
      _
    $region3: #{read_head_forward.1} parent=1 // pred_check_branch
      %21 = sbr.rel (0) target = $region5
    $region4: #{read_head_forward.1} parent=1 // pred_region
      %s23 = ssub.s32 32, 32
      %24 = vsyncadd [#allocation3], %s23
      %s26 = sshll.u32 [#allocation2], 4
      %s27 = int_to_ptr.vmem [resolvable:$true] %s26
      %29 = dma.hbm_to_vmem [thread:$0]  %s0, 32, %s27, [#allocation3]
    $region5: #{read_head_forward.1} parent=1 // pred_fallthru
      _
    // Predicated region
    $region6: #{read_head_forward.1} parent=1 // pred_check
      _
    $region7: #{read_head_forward.1} parent=1 // pred_check_branch
      %31 = sbr.rel (0) target = $region9
    $region8: #{read_head_forward.1} parent=1 // pred_region
      _
    $region9: #{read_head_forward.1} parent=1 // pred_fallthru
      _
    // Predicated region
    $region10: #{read_head_forward.1} parent=1 // pred_check
      _
    $region11: #{read_head_forward.1} parent=1 // pred_check_branch
      %33 = sbr.rel (0) target = $region13
    $region12: #{read_head_forward.1} parent=1 // pred_region
      _
    $region13: #{read_head_forward.1} parent=1 // pred_fallthru
      _
    // Predicated region
    $region14: #{read_head_forward.1} parent=1 // pred_check
      _
    $region15: #{read_head_forward.1} parent=1 // pred_check_branch
      %35 = sbr.rel (0) target = $region17
    $region16: #{read_head_forward.1} parent=1 // pred_region
      _
    $region17: #{read_head_forward.1} parent=1 // pred_fallthru
      _
    // Predicated region
    $region18: #{read_head_forward.1} parent=1 // pred_check
      _
    $region19: #{read_head_forward.1} parent=1 // pred_check_branch
      %37 = sbr.rel (0) target = $region21
    $region20: #{read_head_forward.1} parent=1 // pred_region
      _
    $region21: #{read_head_forward.1} parent=1 // pred_fallthru
      _
    // Predicated region
    $region22: #{read_head_forward.1} parent=1 // pred_check
      _
    $region23: #{read_head_forward.1} parent=1 // pred_check_branch
      %39 = sbr.rel (0) target = $region25
    $region24: #{read_head_forward.1} parent=1 // pred_region
      %s41 = ssub.s32 64, 64
      %42 = vsyncadd [#allocation5], %s41
      %s44 = sshll.u32 [#allocation4], 4
      %s45 = int_to_ptr.vmem [resolvable:$true] %s44
      %47 = dma.hbm_to_vmem [thread:$0]  %s5, 64, %s45, [#allocation5]
    $region25: #{read_head_forward.1} parent=1 // pred_fallthru
      _
    // Predicated region
    $region26: #{read_head_forward.1} parent=1 // pred_check
      _
    $region27: #{read_head_forward.1} parent=1 // pred_check_branch
      %49 = sbr.rel (0) target = $region29
    $region28: #{read_head_forward.1} parent=1 // pred_region
      %s51 = ssub.s32 64, 64
      %52 = vsyncadd [#allocation5], %s51
      %s54 = sshll.u32 [#allocation6], 4
      %s55 = int_to_ptr.vmem [resolvable:$true] %s54
      %57 = dma.hbm_to_vmem [thread:$0]  %s6, 64, %s55, [#allocation5]
    $region29: #{read_head_forward.1} parent=1 // pred_fallthru
      _
    // Predicated region
    $region30: #{read_head_forward.1} parent=1 // pred_check
      _
    $region31: #{read_head_forward.1} parent=1 // pred_check_branch
      %59 = sbr.rel (0) target = $region33
    $region32: #{read_head_forward.1} parent=1 // pred_region
      %s61 = ssub.s32 1024, 1024
      %62 = vsyncadd [#allocation8], %s61
      %s63 = sshll.u32 [#allocation7], 4
      %s64 = int_to_ptr.vmem [resolvable:$true] %s63
      %69 = dma.hbm_to_vmem [thread:$0]  %s7, 1024, %s64, [#allocation8], 256, 256, 16
    $region33: #{read_head_forward.1} parent=1 // pred_fallthru
      _
    // Predicated region
    $region34: #{read_head_forward.1} parent=1 // pred_check
      _
    $region35: #{read_head_forward.1} parent=1 // pred_check_branch
      %71 = sbr.rel (0) target = $region37
    $region36: #{read_head_forward.1} parent=1 // pred_region
      %s73 = ssub.s32 1024, 1024
      %74 = vsyncadd [#allocation8], %s73
      %s75 = sshll.u32 [#allocation9], 4
      %s76 = int_to_ptr.vmem [resolvable:$true] %s75
      %81 = dma.hbm_to_vmem [thread:$0]  %s8, 1024, %s76, [#allocation8], 256, 256, 16
    $region37: #{read_head_forward.1} parent=1 // pred_fallthru
      _
    // Predicated region
    $region38: #{read_head_forward.1} parent=1 // pred_check
      _
    $region39: #{read_head_forward.1} parent=1 // pred_check_branch
      %83 = sbr.rel (0) target = $region41
    $region40: #{read_head_forward.1} parent=1 // pred_region
      %s85 = ssub.s32 32, 32
      %86 = vsyncadd [#allocation11], %s85
      %s88 = sshll.u32 [#allocation10], 4
      %s89 = int_to_ptr.vmem [resolvable:$true] %s88
      %91 = dma.hbm_to_vmem [thread:$0]  %s9, 32, %s89, [#allocation11]
    $region41: #{read_head_forward.1} parent=1 // pred_fallthru
      _
    // Predicated region
    $region42: #{read_head_forward.1} parent=1 // pred_check
      _
    $region43: #{read_head_forward.1} parent=1 // pred_check_branch
      %93 = sbr.rel (0) target = $region45
    $region44: #{read_head_forward.1} parent=1 // pred_region
      _
    $region45: #{read_head_forward.1} parent=1 // pred_fallthru
      _
    // Predicated region
    $region46: #{read_head_forward.1} parent=1 // pred_check
      _
    $region47: #{read_head_forward.1} parent=1 // pred_check_branch
      %95 = sbr.rel (0) target = $region49
    $region48: #{read_head_forward.1} parent=1 // pred_region
      %96 = dma.done [#allocation3], 32
    $region49: #{read_head_forward.1} parent=1 // pred_fallthru
      _
    // Predicated region
    $region50: #{read_head_forward.1} parent=1 // pred_check
      _
    $region51: #{read_head_forward.1} parent=1 // pred_check_branch
      %98 = sbr.rel (0) target = $region53
    $region52: #{read_head_forward.1} parent=1 // pred_region
      %99 = dma.done [#allocation5], 64
    $region53: #{read_head_forward.1} parent=1 // pred_fallthru
      _
    // Predicated region
    $region54: #{read_head_forward.1} parent=1 // pred_check
      _
    $region55: #{read_head_forward.1} parent=1 // pred_check_branch
      %101 = sbr.rel (0) target = $region57
    $region56: #{read_head_forward.1} parent=1 // pred_region
      %102 = dma.done [#allocation5], 64
    $region57: #{read_head_forward.1} parent=1 // pred_fallthru
      _
    // Predicated region
    $region58: #{read_head_forward.1} parent=1 // pred_check
      _
    $region59: #{read_head_forward.1} parent=1 // pred_check_branch
      %104 = sbr.rel (0) target = $region61
    $region60: #{read_head_forward.1} parent=1 // pred_region
      %105 = dma.done [#allocation8], 1024
    $region61: #{read_head_forward.1} parent=1 // pred_fallthru
      _
    // Predicated region
    $region62: #{read_head_forward.1} parent=1 // pred_check
      _
    $region63: #{read_head_forward.1} parent=1 // pred_check_branch
      %107 = sbr.rel (0) target = $region65
    $region64: #{read_head_forward.1} parent=1 // pred_region
      %108 = dma.done [#allocation8], 1024
    $region65: #{read_head_forward.1} parent=1 // pred_fallthru
      _
    // Predicated region
    $region66: #{read_head_forward.1} parent=1 // pred_check
      _
    $region67: #{read_head_forward.1} parent=1 // pred_check_branch
      %110 = sbr.rel (0) target = $region69
    $region68: #{read_head_forward.1} parent=1 // pred_region
      %111 = dma.done [#allocation11], 32
    $region69: #{read_head_forward.1} parent=1 // pred_fallthru
      _
    %v112 = vld [vmem:[#allocation2] sm:$0x3]
    %v113 = vld [vmem:[%s1] sm:$0xff]
    %v114 = vld [vmem:[%s1 + $0x8] sm:$0xff]
    %v115 = vld [vmem:[%s1 + $0x10] sm:$0xff]
    %v116 = vld [vmem:[%s1 + $0x18] sm:$0xff]
    %v117 = vld [vmem:[%s1 + $0x20] sm:$0xff]
    %v118 = vld [vmem:[%s1 + $0x28] sm:$0xff]
    %v119 = vld [vmem:[%s1 + $0x30] sm:$0xff]
    %v120 = vld [vmem:[%s1 + $0x38] sm:$0xff]
    %v121 = vld [vmem:[%s3] sm:$0xff]
    %v122 = vld [vmem:[%s3 + $0x20] sm:$0xff]
    %v123 = vld [vmem:[%s3 + $0x40] sm:$0xff]
    %v124 = vld [vmem:[%s3 + $0x60] sm:$0xff]
    %v125 = vld [vmem:[#allocation4] sm:$0x1]
    %v127 = vlaneseq
    %v128 = vshrl.u32 %v127, 7
    %v129 = vsub.s32 0, %v128
    %v130 = vrot.slane %v125, %v129
    %vm132 = vcmask 261120
    %v134 = vsel %vm132, %v112, 0
    %136 = vmatprep.subr.mxu0 0.0
    %137 = vmatpush1.msra.mxu0 0.0
    %138 = vmatprep.subr.mxu0 0.0
    %139 = vmatpush1.msra.mxu0 0.0
    %140 = vmatprep.subr.mxu0 0.0
    %141 = vmatpush1.msra.mxu0 0.0
    %142 = vmatprep.subr.mxu0 0.0
    %143 = vmatpush1.msra.mxu0 0.0
    %144 = vmatprep.subr.mxu0 0.0
    %145 = vmatpush1.msra.mxu0 0.0
    %146 = vmatprep.subr.mxu0 0.0
    %147 = vmatpush1.msra.mxu0 0.0
    %148 = vmatprep.subr.mxu0 0.0
    %149 = vmatpush1.msra.mxu0 0.0
    %150 = vmatprep.subr.mxu0 0.0
    %151 = vmatpush1.msra.mxu0 0.0
    %152 = vmatprep.subr.mxu0 0.0
    %153 = vmatpush1.msra.mxu0 0.0
    %154 = vmatprep.subr.mxu0 0.0
    %155 = vmatpush1.msra.mxu0 0.0
    %156 = vmatprep.subr.mxu0 0.0
    %157 = vmatpush1.msra.mxu0 0.0
    %158 = vmatprep.subr.mxu0 0.0
    %159 = vmatpush1.msra.mxu0 0.0
    %160 = vmatprep.subr.mxu0 0.0
    %161 = vmatpush1.msra.mxu0 %v124
    %162 = vmatprep.subr.mxu0 0.0
    %163 = vmatpush1.msra.mxu0 %v123
    %164 = vmatprep.subr.mxu0 0.0
    %165 = vmatpush1.msra.mxu0 %v122
    %166 = vmatprep.subr.mxu0 0.0
    %167 = vmatpush1.msra.mxu0 %v121
    %168 = vmatprep.subr.mxu0 0.0
    %169 = vmatpush2.msra.mxu0 0.0
    %170 = vmatprep.subr.mxu0 0.0
    %171 = vmatpush2.msra.mxu0 0.0
    %172 = vmatprep.subr.mxu0 0.0
    %173 = vmatpush2.msra.mxu0 0.0
    %174 = vmatprep.subr.mxu0 0.0
    %175 = vmatpush2.msra.mxu0 0.0
    %176 = vmatprep.subr.mxu0 0.0
    %177 = vmatpush2.msra.mxu0 0.0
    %178 = vmatprep.subr.mxu0 0.0
    %179 = vmatpush2.msra.mxu0 0.0
    %180 = vmatprep.subr.mxu0 0.0
    %181 = vmatpush2.msra.mxu0 0.0
    %182 = vmatprep.subr.mxu0 0.0
    %183 = vmatpush2.msra.mxu0 0.0
    %184 = vmatprep.subr.mxu0 0.0
    %185 = vmatpush2.msra.mxu0 0.0
    %186 = vmatprep.subr.mxu0 0.0
    %187 = vmatpush2.msra.mxu0 0.0
    %188 = vmatprep.subr.mxu0 0.0
    %189 = vmatpush2.msra.mxu0 0.0
    %190 = vmatprep.subr.mxu0 0.0
    %191 = vmatpush2.msra.mxu0 0.0
    %192 = vmatprep.subr.mxu0 0.0
    %193 = vmatpush2.msra.mxu0 0.0
    %194 = vmatprep.subr.mxu0 0.0
    %195 = vmatpush2.msra.mxu0 0.0
    %196 = vmatprep.subr.mxu0 0.0
    %197 = vmatpush2.msra.mxu0 0.0
    %198 = vmatprep.subr.mxu0 0.0
    %199 = vmatpush2.msra.mxu0 0.0
    %200 = vmatprep.mubr.f32.mxu0 0.0
    %201 = vmatmul.mubr.f32.gmra.mxu0 %v134
    %v202 = vpop.f32.mrf.mxu0
    %v203 = vadd.f32 %v130, %v202
    %v204 = vpop.f32.mrf.mxu0
    %205 = vdwg.mxu0
    %v206 = vld [vmem:[%s4] sm:$0xff]
    %v207 = vld [vmem:[%s4 + $0x20] sm:$0xff]
    %v208 = vld [vmem:[%s4 + $0x40] sm:$0xff]
    %v209 = vld [vmem:[%s4 + $0x60] sm:$0xff]
    %v211 = vsel %vm132, %v113, 0
    %v214 = vsel %vm132, %v114, 0
    %v217 = vsel %vm132, %v115, 0
    %v220 = vsel %vm132, %v116, 0
    %v223 = vsel %vm132, %v117, 0
    %v226 = vsel %vm132, %v118, 0
    %v229 = vsel %vm132, %v119, 0
    %v232 = vsel %vm132, %v120, 0
    %234 = vmatprep.subr.mxu0 0.0
    %235 = vmatpush1.msra.mxu0 0.0
    %236 = vmatprep.subr.mxu0 0.0
    %237 = vmatpush1.msra.mxu0 0.0
    %238 = vmatprep.subr.mxu0 0.0
    %239 = vmatpush1.msra.mxu0 0.0
    %240 = vmatprep.subr.mxu0 0.0
    %241 = vmatpush1.msra.mxu0 0.0
    %242 = vmatprep.subr.mxu0 0.0
    %243 = vmatpush1.msra.mxu0 0.0
    %244 = vmatprep.subr.mxu0 0.0
    %245 = vmatpush1.msra.mxu0 0.0
    %246 = vmatprep.subr.mxu0 0.0
    %247 = vmatpush1.msra.mxu0 0.0
    %248 = vmatprep.subr.mxu0 0.0
    %249 = vmatpush1.msra.mxu0 0.0
    %250 = vmatprep.subr.mxu0 0.0
    %251 = vmatpush1.msra.mxu0 0.0
    %252 = vmatprep.subr.mxu0 0.0
    %253 = vmatpush1.msra.mxu0 0.0
    %254 = vmatprep.subr.mxu0 0.0
    %255 = vmatpush1.msra.mxu0 0.0
    %256 = vmatprep.subr.mxu0 0.0
    %257 = vmatpush1.msra.mxu0 0.0
    %258 = vmatprep.subr.mxu0 0.0
    %259 = vmatpush1.msra.mxu0 %v209
    %260 = vmatprep.subr.mxu0 0.0
    %261 = vmatpush1.msra.mxu0 %v208
    %262 = vmatprep.subr.mxu0 0.0
    %263 = vmatpush1.msra.mxu0 %v207
    %264 = vmatprep.subr.mxu0 0.0
    %265 = vmatpush1.msra.mxu0 %v206
    %266 = vmatprep.subr.mxu0 0.0
    %267 = vmatpush2.msra.mxu0 0.0
    %268 = vmatprep.subr.mxu0 0.0
    %269 = vmatpush2.msra.mxu0 0.0
    %270 = vmatprep.subr.mxu0 0.0
    %271 = vmatpush2.msra.mxu0 0.0
    %272 = vmatprep.subr.mxu0 0.0
    %273 = vmatpush2.msra.mxu0 0.0
    %274 = vmatprep.subr.mxu0 0.0
    %275 = vmatpush2.msra.mxu0 0.0
    %276 = vmatprep.subr.mxu0 0.0
    %277 = vmatpush2.msra.mxu0 0.0
    %278 = vmatprep.subr.mxu0 0.0
    %279 = vmatpush2.msra.mxu0 0.0
    %280 = vmatprep.subr.mxu0 0.0
    %281 = vmatpush2.msra.mxu0 0.0
    %282 = vmatprep.subr.mxu0 0.0
    %283 = vmatpush2.msra.mxu0 0.0
    %284 = vmatprep.subr.mxu0 0.0
    %285 = vmatpush2.msra.mxu0 0.0
    %286 = vmatprep.subr.mxu0 0.0
    %287 = vmatpush2.msra.mxu0 0.0
    %288 = vmatprep.subr.mxu0 0.0
    %289 = vmatpush2.msra.mxu0 0.0
    %290 = vmatprep.subr.mxu0 0.0
    %291 = vmatpush2.msra.mxu0 0.0
    %292 = vmatprep.subr.mxu0 0.0
    %293 = vmatpush2.msra.mxu0 0.0
    %294 = vmatprep.subr.mxu0 0.0
    %295 = vmatpush2.msra.mxu0 0.0
    %296 = vmatprep.subr.mxu0 0.0
    %297 = vmatpush2.msra.mxu0 0.0
    %298 = vmatprep.mubr.f32.mxu0 0.0
    %299 = vmatmul.mubr.f32.gmra.mxu0 %v211
    %v300 = vpop.f32.mrf.mxu0
    %v301 = vadd.f32 0.0, %v300
    %v302 = vpop.f32.mrf.mxu0
    %303 = vmatprep.mubr.f32.mxu0 0.0
    %304 = vmatmul.mubr.f32.gmra.mxu0 %v214
    %v305 = vpop.f32.mrf.mxu0
    %v306 = vadd.f32 0.0, %v305
    %v307 = vpop.f32.mrf.mxu0
    %308 = vmatprep.mubr.f32.mxu0 0.0
    %309 = vmatmul.mubr.f32.gmra.mxu0 %v217
    %v310 = vpop.f32.mrf.mxu0
    %v311 = vadd.f32 0.0, %v310
    %v312 = vpop.f32.mrf.mxu0
    %313 = vmatprep.mubr.f32.mxu0 0.0
    %314 = vmatmul.mubr.f32.gmra.mxu0 %v220
    %v315 = vpop.f32.mrf.mxu0
    %v316 = vadd.f32 0.0, %v315
    %v317 = vpop.f32.mrf.mxu0
    %318 = vmatprep.mubr.f32.mxu0 0.0
    %319 = vmatmul.mubr.f32.gmra.mxu0 %v223
    %v320 = vpop.f32.mrf.mxu0
    %v321 = vadd.f32 0.0, %v320
    %v322 = vpop.f32.mrf.mxu0
    %323 = vmatprep.mubr.f32.mxu0 0.0
    %324 = vmatmul.mubr.f32.gmra.mxu0 %v226
    %v325 = vpop.f32.mrf.mxu0
    %v326 = vadd.f32 0.0, %v325
    %v327 = vpop.f32.mrf.mxu0
    %328 = vmatprep.mubr.f32.mxu0 0.0
    %329 = vmatmul.mubr.f32.gmra.mxu0 %v229
    %v330 = vpop.f32.mrf.mxu0
    %v331 = vadd.f32 0.0, %v330
    %v332 = vpop.f32.mrf.mxu0
    %333 = vmatprep.mubr.f32.mxu0 0.0
    %334 = vmatmul.mubr.f32.gmra.mxu0 %v232
    %v335 = vpop.f32.mrf.mxu0
    %v336 = vadd.f32 0.0, %v335
    %v337 = vpop.f32.mrf.mxu0
    %338 = vdwg.mxu0
    %v341 = vunpack.c.l.s4 1966171168
    %v342 = vunpack.c.0.s8 %v341
    %v343 = vlaneseq
    %v344 = vshrl.u32 %v343, 7
    %v345 = vsub.s32 %v342, %v344
    %v346 = vrot.slane %v203, %v345
    %v347 = vcombine.high %v346, %v346
    %v349 = vunpack.c.l.s4 1966171168
    %v350 = vunpack.c.0.s8 %v349
    %v351 = vlaneseq
    %v352 = vshrl.u32 %v351, 7
    %v353 = vsub.s32 %v350, %v352
    %v354 = vrot.slane %v346, %v353
    %v356 = vunpack.c.l.s4 1966171168
    %v357 = vunpack.c.0.s8 %v356
    %v358 = vlaneseq
    %v359 = vshrl.u32 %v358, 7
    %v360 = vsub.s32 %v357, %v359
    %v361 = vrot.slane %v347, %v360
    %v362 = vlaneseq
    %v363 = vshrl.u32 %v362, 7
    %v364 = vsub.s32 0, %v363
    %v365 = vrot.slane %v354, %v364
    %v366 = vlaneseq
    %v367 = vshrl.u32 %v366, 7
    %v368 = vsub.s32 0, %v367
    %v369 = vrot.slane %v361, %v368
    %v372 = vadd.f32 %v365, %v301
    %v373 = vadd.f32 %v365, %v306
    %v374 = vadd.f32 %v365, %v311
    %v375 = vadd.f32 %v365, %v316
    %v376 = vadd.f32 %v365, %v321
    %v377 = vadd.f32 %v365, %v326
    %v378 = vadd.f32 %v365, %v331
    %v379 = vadd.f32 %v365, %v336
    %v380 = vadd.f32 %v369, %v301
    %v381 = vadd.f32 %v369, %v306
    %v382 = vadd.f32 %v369, %v311
    %v383 = vadd.f32 %v369, %v316
    %v384 = vadd.f32 %v369, %v321
    %v385 = vadd.f32 %v369, %v326
    %v386 = vadd.f32 %v369, %v331
    %v387 = vadd.f32 %v369, %v336
    %v388 = vmax.f32 %v372, 0.0
    %v389 = vmax.f32 %v373, 0.0
    %v390 = vmax.f32 %v374, 0.0
    %v391 = vmax.f32 %v375, 0.0
    %v392 = vmax.f32 %v376, 0.0
    %v393 = vmax.f32 %v377, 0.0
    %v394 = vmax.f32 %v378, 0.0
    %v395 = vmax.f32 %v379, 0.0
    %v396 = vmax.f32 %v380, 0.0
    %v397 = vmax.f32 %v381, 0.0
    %v398 = vmax.f32 %v382, 0.0
    %v399 = vmax.f32 %v383, 0.0
    %v400 = vmax.f32 %v384, 0.0
    %v401 = vmax.f32 %v385, 0.0
    %v402 = vmax.f32 %v386, 0.0
    %v403 = vmax.f32 %v387, 0.0
    %v404 = vld [vmem:[#allocation6] sm:$0x1]
    %v406 = vlaneseq
    %v407 = vshrl.u32 %v406, 7
    %v408 = vsub.s32 0, %v407
    %v409 = vrot.slane %v404, %v408
    %v411 = vmul.f32 %v388, %v409
    %v412 = vmul.f32 %v389, %v409
    %v413 = vmul.f32 %v390, %v409
    %v414 = vmul.f32 %v391, %v409
    %v415 = vmul.f32 %v392, %v409
    %v416 = vmul.f32 %v393, %v409
    %v417 = vmul.f32 %v394, %v409
    %v418 = vmul.f32 %v395, %v409
    %v419 = vmul.f32 %v396, %v409
    %v420 = vmul.f32 %v397, %v409
    %v421 = vmul.f32 %v398, %v409
    %v422 = vmul.f32 %v399, %v409
    %v423 = vmul.f32 %v400, %v409
    %v424 = vmul.f32 %v401, %v409
    %v425 = vmul.f32 %v402, %v409
    %v426 = vmul.f32 %v403, %v409
    %427 = vadd.xlane.f32.xlu0 %v411
    %v428 = vpop.xlane.xlu0 %427
    %429 = vadd.xlane.f32.xlu0 %v412
    %v430 = vpop.xlane.xlu0 %429
    %431 = vadd.xlane.f32.xlu0 %v413
    %v432 = vpop.xlane.xlu0 %431
    %433 = vadd.xlane.f32.xlu0 %v414
    %v434 = vpop.xlane.xlu0 %433
    %435 = vadd.xlane.f32.xlu0 %v415
    %v436 = vpop.xlane.xlu0 %435
    %437 = vadd.xlane.f32.xlu0 %v416
    %v438 = vpop.xlane.xlu0 %437
    %439 = vadd.xlane.f32.xlu0 %v417
    %v440 = vpop.xlane.xlu0 %439
    %441 = vadd.xlane.f32.xlu0 %v418
    %v442 = vpop.xlane.xlu0 %441
    %443 = vadd.xlane.f32.xlu0 %v419
    %v444 = vpop.xlane.xlu0 %443
    %445 = vadd.xlane.f32.xlu0 %v420
    %v446 = vpop.xlane.xlu0 %445
    %447 = vadd.xlane.f32.xlu0 %v421
    %v448 = vpop.xlane.xlu0 %447
    %449 = vadd.xlane.f32.xlu0 %v422
    %v450 = vpop.xlane.xlu0 %449
    %451 = vadd.xlane.f32.xlu0 %v423
    %v452 = vpop.xlane.xlu0 %451
    %453 = vadd.xlane.f32.xlu0 %v424
    %v454 = vpop.xlane.xlu0 %453
    %455 = vadd.xlane.f32.xlu0 %v425
    %v456 = vpop.xlane.xlu0 %455
    %457 = vadd.xlane.f32.xlu0 %v426
    %v458 = vpop.xlane.xlu0 %457
    %v459 = vadd.f32 %v428, 0.0
    %v460 = vadd.f32 %v430, 0.0
    %v461 = vadd.f32 %v432, 0.0
    %v462 = vadd.f32 %v434, 0.0
    %v463 = vadd.f32 %v436, 0.0
    %v464 = vadd.f32 %v438, 0.0
    %v465 = vadd.f32 %v440, 0.0
    %v466 = vadd.f32 %v442, 0.0
    %v467 = vadd.f32 %v444, 0.0
    %v468 = vadd.f32 %v446, 0.0
    %v469 = vadd.f32 %v448, 0.0
    %v470 = vadd.f32 %v450, 0.0
    %v471 = vadd.f32 %v452, 0.0
    %v472 = vadd.f32 %v454, 0.0
    %v473 = vadd.f32 %v456, 0.0
    %v474 = vadd.f32 %v458, 0.0
    %v475 = vld [vmem:[%s3 + $0x8] sm:$0xff]
    %v476 = vld [vmem:[%s3 + $0x28] sm:$0xff]
    %v477 = vld [vmem:[%s3 + $0x48] sm:$0xff]
    %v478 = vld [vmem:[%s3 + $0x68] sm:$0xff]
    %v479 = vld [vmem:[#allocation4 + $0x1] sm:$0x1]
    %v481 = vlaneseq
    %v482 = vshrl.u32 %v481, 7
    %v483 = vsub.s32 0, %v482
    %v484 = vrot.slane %v479, %v483
    %486 = vmatprep.subr.mxu0 0.0
    %487 = vmatpush1.msra.mxu0 0.0
    %488 = vmatprep.subr.mxu0 0.0
    %489 = vmatpush1.msra.mxu0 0.0
    %490 = vmatprep.subr.mxu0 0.0
    %491 = vmatpush1.msra.mxu0 0.0
    %492 = vmatprep.subr.mxu0 0.0
    %493 = vmatpush1.msra.mxu0 0.0
    %494 = vmatprep.subr.mxu0 0.0
    %495 = vmatpush1.msra.mxu0 0.0
    %496 = vmatprep.subr.mxu0 0.0
    %497 = vmatpush1.msra.mxu0 0.0
    %498 = vmatprep.subr.mxu0 0.0
    %499 = vmatpush1.msra.mxu0 0.0
    %500 = vmatprep.subr.mxu0 0.0
    %501 = vmatpush1.msra.mxu0 0.0
    %502 = vmatprep.subr.mxu0 0.0
    %503 = vmatpush1.msra.mxu0 0.0
    %504 = vmatprep.subr.mxu0 0.0
    %505 = vmatpush1.msra.mxu0 0.0
    %506 = vmatprep.subr.mxu0 0.0
    %507 = vmatpush1.msra.mxu0 0.0
    %508 = vmatprep.subr.mxu0 0.0
    %509 = vmatpush1.msra.mxu0 0.0
    %510 = vmatprep.subr.mxu0 0.0
    %511 = vmatpush1.msra.mxu0 %v478
    %512 = vmatprep.subr.mxu0 0.0
    %513 = vmatpush1.msra.mxu0 %v477
    %514 = vmatprep.subr.mxu0 0.0
    %515 = vmatpush1.msra.mxu0 %v476
    %516 = vmatprep.subr.mxu0 0.0
    %517 = vmatpush1.msra.mxu0 %v475
    %518 = vmatprep.subr.mxu0 0.0
    %519 = vmatpush2.msra.mxu0 0.0
    %520 = vmatprep.subr.mxu0 0.0
    %521 = vmatpush2.msra.mxu0 0.0
    %522 = vmatprep.subr.mxu0 0.0
    %523 = vmatpush2.msra.mxu0 0.0
    %524 = vmatprep.subr.mxu0 0.0
    %525 = vmatpush2.msra.mxu0 0.0
    %526 = vmatprep.subr.mxu0 0.0
    %527 = vmatpush2.msra.mxu0 0.0
    %528 = vmatprep.subr.mxu0 0.0
    %529 = vmatpush2.msra.mxu0 0.0
    %530 = vmatprep.subr.mxu0 0.0
    %531 = vmatpush2.msra.mxu0 0.0
    %532 = vmatprep.subr.mxu0 0.0
    %533 = vmatpush2.msra.mxu0 0.0
    %534 = vmatprep.subr.mxu0 0.0
    %535 = vmatpush2.msra.mxu0 0.0
    %536 = vmatprep.subr.mxu0 0.0
    %537 = vmatpush2.msra.mxu0 0.0
    %538 = vmatprep.subr.mxu0 0.0
    %539 = vmatpush2.msra.mxu0 0.0
    %540 = vmatprep.subr.mxu0 0.0
    %541 = vmatpush2.msra.mxu0 0.0
    %542 = vmatprep.subr.mxu0 0.0
    %543 = vmatpush2.msra.mxu0 0.0
    %544 = vmatprep.subr.mxu0 0.0
    %545 = vmatpush2.msra.mxu0 0.0
    %546 = vmatprep.subr.mxu0 0.0
    %547 = vmatpush2.msra.mxu0 0.0
    %548 = vmatprep.subr.mxu0 0.0
    %549 = vmatpush2.msra.mxu0 0.0
    %550 = vmatprep.mubr.f32.mxu0 0.0
    %551 = vmatmul.mubr.f32.gmra.mxu0 %v134
    %v552 = vpop.f32.mrf.mxu0
    %v553 = vadd.f32 %v484, %v552
    %v554 = vpop.f32.mrf.mxu0
    %555 = vdwg.mxu0
    %v556 = vld [vmem:[%s4 + $0x8] sm:$0xff]
    %v557 = vld [vmem:[%s4 + $0x28] sm:$0xff]
    %v558 = vld [vmem:[%s4 + $0x48] sm:$0xff]
    %v559 = vld [vmem:[%s4 + $0x68] sm:$0xff]
    %560 = vmatprep.subr.mxu0 0.0
    %561 = vmatpush1.msra.mxu0 0.0
    %562 = vmatprep.subr.mxu0 0.0
    %563 = vmatpush1.msra.mxu0 0.0
    %564 = vmatprep.subr.mxu0 0.0
    %565 = vmatpush1.msra.mxu0 0.0
    %566 = vmatprep.subr.mxu0 0.0
    %567 = vmatpush1.msra.mxu0 0.0
    %568 = vmatprep.subr.mxu0 0.0
    %569 = vmatpush1.msra.mxu0 0.0
    %570 = vmatprep.subr.mxu0 0.0
    %571 = vmatpush1.msra.mxu0 0.0
    %572 = vmatprep.subr.mxu0 0.0
    %573 = vmatpush1.msra.mxu0 0.0
    %574 = vmatprep.subr.mxu0 0.0
    %575 = vmatpush1.msra.mxu0 0.0
    %576 = vmatprep.subr.mxu0 0.0
    %577 = vmatpush1.msra.mxu0 0.0
    %578 = vmatprep.subr.mxu0 0.0
    %579 = vmatpush1.msra.mxu0 0.0
    %580 = vmatprep.subr.mxu0 0.0
    %581 = vmatpush1.msra.mxu0 0.0
    %582 = vmatprep.subr.mxu0 0.0
    %583 = vmatpush1.msra.mxu0 0.0
    %584 = vmatprep.subr.mxu0 0.0
    %585 = vmatpush1.msra.mxu0 %v559
    %586 = vmatprep.subr.mxu0 0.0
    %587 = vmatpush1.msra.mxu0 %v558
    %588 = vmatprep.subr.mxu0 0.0
    %589 = vmatpush1.msra.mxu0 %v557
    %590 = vmatprep.subr.mxu0 0.0
    %591 = vmatpush1.msra.mxu0 %v556
    %592 = vmatprep.subr.mxu0 0.0
    %593 = vmatpush2.msra.mxu0 0.0
    %594 = vmatprep.subr.mxu0 0.0
    %595 = vmatpush2.msra.mxu0 0.0
    %596 = vmatprep.subr.mxu0 0.0
    %597 = vmatpush2.msra.mxu0 0.0
    %598 = vmatprep.subr.mxu0 0.0
    %599 = vmatpush2.msra.mxu0 0.0
    %600 = vmatprep.subr.mxu0 0.0
    %601 = vmatpush2.msra.mxu0 0.0
    %602 = vmatprep.subr.mxu0 0.0
    %603 = vmatpush2.msra.mxu0 0.0
    %604 = vmatprep.subr.mxu0 0.0
    %605 = vmatpush2.msra.mxu0 0.0
    %606 = vmatprep.subr.mxu0 0.0
    %607 = vmatpush2.msra.mxu0 0.0
    %608 = vmatprep.subr.mxu0 0.0
    %609 = vmatpush2.msra.mxu0 0.0
    %610 = vmatprep.subr.mxu0 0.0
    %611 = vmatpush2.msra.mxu0 0.0
    %612 = vmatprep.subr.mxu0 0.0
    %613 = vmatpush2.msra.mxu0 0.0
    %614 = vmatprep.subr.mxu0 0.0
    %615 = vmatpush2.msra.mxu0 0.0
    %616 = vmatprep.subr.mxu0 0.0
    %617 = vmatpush2.msra.mxu0 0.0
    %618 = vmatprep.subr.mxu0 0.0
    %619 = vmatpush2.msra.mxu0 0.0
    %620 = vmatprep.subr.mxu0 0.0
    %621 = vmatpush2.msra.mxu0 0.0
    %622 = vmatprep.subr.mxu0 0.0
    %623 = vmatpush2.msra.mxu0 0.0
    %624 = vmatprep.mubr.f32.mxu0 0.0
    %625 = vmatmul.mubr.f32.gmra.mxu0 %v211
    %v626 = vpop.f32.mrf.mxu0
    %v627 = vadd.f32 0.0, %v626
    %v628 = vpop.f32.mrf.mxu0
    %629 = vmatprep.mubr.f32.mxu0 0.0
    %630 = vmatmul.mubr.f32.gmra.mxu0 %v214
    %v631 = vpop.f32.mrf.mxu0
    %v632 = vadd.f32 0.0, %v631
    %v633 = vpop.f32.mrf.mxu0
    %634 = vmatprep.mubr.f32.mxu0 0.0
    %635 = vmatmul.mubr.f32.gmra.mxu0 %v217
    %v636 = vpop.f32.mrf.mxu0
    %v637 = vadd.f32 0.0, %v636
    %v638 = vpop.f32.mrf.mxu0
    %639 = vmatprep.mubr.f32.mxu0 0.0
    %640 = vmatmul.mubr.f32.gmra.mxu0 %v220
    %v641 = vpop.f32.mrf.mxu0
    %v642 = vadd.f32 0.0, %v641
    %v643 = vpop.f32.mrf.mxu0
    %644 = vmatprep.mubr.f32.mxu0 0.0
    %645 = vmatmul.mubr.f32.gmra.mxu0 %v223
    %v646 = vpop.f32.mrf.mxu0
    %v647 = vadd.f32 0.0, %v646
    %v648 = vpop.f32.mrf.mxu0
    %649 = vmatprep.mubr.f32.mxu0 0.0
    %650 = vmatmul.mubr.f32.gmra.mxu0 %v226
    %v651 = vpop.f32.mrf.mxu0
    %v652 = vadd.f32 0.0, %v651
    %v653 = vpop.f32.mrf.mxu0
    %654 = vmatprep.mubr.f32.mxu0 0.0
    %655 = vmatmul.mubr.f32.gmra.mxu0 %v229
    %v656 = vpop.f32.mrf.mxu0
    %v657 = vadd.f32 0.0, %v656
    %v658 = vpop.f32.mrf.mxu0
    %659 = vmatprep.mubr.f32.mxu0 0.0
    %660 = vmatmul.mubr.f32.gmra.mxu0 %v232
    %v661 = vpop.f32.mrf.mxu0
    %v662 = vadd.f32 0.0, %v661
    %v663 = vpop.f32.mrf.mxu0
    %664 = vdwg.mxu0
    %v667 = vunpack.c.l.s4 1966171168
    %v668 = vunpack.c.0.s8 %v667
    %v669 = vlaneseq
    %v670 = vshrl.u32 %v669, 7
    %v671 = vsub.s32 %v668, %v670
    %v672 = vrot.slane %v553, %v671
    %v673 = vcombine.high %v672, %v672
    %v675 = vunpack.c.l.s4 1966171168
    %v676 = vunpack.c.0.s8 %v675
    %v677 = vlaneseq
    %v678 = vshrl.u32 %v677, 7
    %v679 = vsub.s32 %v676, %v678
    %v680 = vrot.slane %v672, %v679
    %v682 = vunpack.c.l.s4 1966171168
    %v683 = vunpack.c.0.s8 %v682
    %v684 = vlaneseq
    %v685 = vshrl.u32 %v684, 7
    %v686 = vsub.s32 %v683, %v685
    %v687 = vrot.slane %v673, %v686
    %v688 = vlaneseq
    %v689 = vshrl.u32 %v688, 7
    %v690 = vsub.s32 0, %v689
    %v691 = vrot.slane %v680, %v690
    %v692 = vlaneseq
    %v693 = vshrl.u32 %v692, 7
    %v694 = vsub.s32 0, %v693
    %v695 = vrot.slane %v687, %v694
    %v698 = vadd.f32 %v691, %v627
    %v699 = vadd.f32 %v691, %v632
    %v700 = vadd.f32 %v691, %v637
    %v701 = vadd.f32 %v691, %v642
    %v702 = vadd.f32 %v691, %v647
    %v703 = vadd.f32 %v691, %v652
    %v704 = vadd.f32 %v691, %v657
    %v705 = vadd.f32 %v691, %v662
    %v706 = vadd.f32 %v695, %v627
    %v707 = vadd.f32 %v695, %v632
    %v708 = vadd.f32 %v695, %v637
    %v709 = vadd.f32 %v695, %v642
    %v710 = vadd.f32 %v695, %v647
    %v711 = vadd.f32 %v695, %v652
    %v712 = vadd.f32 %v695, %v657
    %v713 = vadd.f32 %v695, %v662
    %v714 = vmax.f32 %v698, 0.0
    %v715 = vmax.f32 %v699, 0.0
    %v716 = vmax.f32 %v700, 0.0
    %v717 = vmax.f32 %v701, 0.0
    %v718 = vmax.f32 %v702, 0.0
    %v719 = vmax.f32 %v703, 0.0
    %v720 = vmax.f32 %v704, 0.0
    %v721 = vmax.f32 %v705, 0.0
    %v722 = vmax.f32 %v706, 0.0
    %v723 = vmax.f32 %v707, 0.0
    %v724 = vmax.f32 %v708, 0.0
    %v725 = vmax.f32 %v709, 0.0
    %v726 = vmax.f32 %v710, 0.0
    %v727 = vmax.f32 %v711, 0.0
    %v728 = vmax.f32 %v712, 0.0
    %v729 = vmax.f32 %v713, 0.0
    %v730 = vld [vmem:[#allocation6 + $0x1] sm:$0x1]
    %v732 = vlaneseq
    %v733 = vshrl.u32 %v732, 7
    %v734 = vsub.s32 0, %v733
    %v735 = vrot.slane %v730, %v734
    %v737 = vmul.f32 %v714, %v735
    %v738 = vmul.f32 %v715, %v735
    %v739 = vmul.f32 %v716, %v735
    %v740 = vmul.f32 %v717, %v735
    %v741 = vmul.f32 %v718, %v735
    %v742 = vmul.f32 %v719, %v735
    %v743 = vmul.f32 %v720, %v735
    %v744 = vmul.f32 %v721, %v735
    %v745 = vmul.f32 %v722, %v735
    %v746 = vmul.f32 %v723, %v735
    %v747 = vmul.f32 %v724, %v735
    %v748 = vmul.f32 %v725, %v735
    %v749 = vmul.f32 %v726, %v735
    %v750 = vmul.f32 %v727, %v735
    %v751 = vmul.f32 %v728, %v735
    %v752 = vmul.f32 %v729, %v735
    %753 = vadd.xlane.f32.xlu0 %v737
    %v754 = vpop.xlane.xlu0 %753
    %755 = vadd.xlane.f32.xlu0 %v738
    %v756 = vpop.xlane.xlu0 %755
    %757 = vadd.xlane.f32.xlu0 %v739
    %v758 = vpop.xlane.xlu0 %757
    %759 = vadd.xlane.f32.xlu0 %v740
    %v760 = vpop.xlane.xlu0 %759
    %761 = vadd.xlane.f32.xlu0 %v741
    %v762 = vpop.xlane.xlu0 %761
    %763 = vadd.xlane.f32.xlu0 %v742
    %v764 = vpop.xlane.xlu0 %763
    %765 = vadd.xlane.f32.xlu0 %v743
    %v766 = vpop.xlane.xlu0 %765
    %767 = vadd.xlane.f32.xlu0 %v744
    %v768 = vpop.xlane.xlu0 %767
    %769 = vadd.xlane.f32.xlu0 %v745
    %v770 = vpop.xlane.xlu0 %769
    %771 = vadd.xlane.f32.xlu0 %v746
    %v772 = vpop.xlane.xlu0 %771
    %773 = vadd.xlane.f32.xlu0 %v747
    %v774 = vpop.xlane.xlu0 %773
    %775 = vadd.xlane.f32.xlu0 %v748
    %v776 = vpop.xlane.xlu0 %775
    %777 = vadd.xlane.f32.xlu0 %v749
    %v778 = vpop.xlane.xlu0 %777
    %779 = vadd.xlane.f32.xlu0 %v750
    %v780 = vpop.xlane.xlu0 %779
    %781 = vadd.xlane.f32.xlu0 %v751
    %v782 = vpop.xlane.xlu0 %781
    %783 = vadd.xlane.f32.xlu0 %v752
    %v784 = vpop.xlane.xlu0 %783
    %v785 = vadd.f32 %v459, %v754
    %v786 = vadd.f32 %v460, %v756
    %v787 = vadd.f32 %v461, %v758
    %v788 = vadd.f32 %v462, %v760
    %v789 = vadd.f32 %v463, %v762
    %v790 = vadd.f32 %v464, %v764
    %v791 = vadd.f32 %v465, %v766
    %v792 = vadd.f32 %v466, %v768
    %v793 = vadd.f32 %v467, %v770
    %v794 = vadd.f32 %v468, %v772
    %v795 = vadd.f32 %v469, %v774
    %v796 = vadd.f32 %v470, %v776
    %v797 = vadd.f32 %v471, %v778
    %v798 = vadd.f32 %v472, %v780
    %v799 = vadd.f32 %v473, %v782
    %v800 = vadd.f32 %v474, %v784
    %v801 = vld [vmem:[%s3 + $0x10] sm:$0xff]
    %v802 = vld [vmem:[%s3 + $0x30] sm:$0xff]
    %v803 = vld [vmem:[%s3 + $0x50] sm:$0xff]
    %v804 = vld [vmem:[%s3 + $0x70] sm:$0xff]
    %v805 = vld [vmem:[#allocation4 + $0x2] sm:$0x1]
    %v807 = vlaneseq
    %v808 = vshrl.u32 %v807, 7
    %v809 = vsub.s32 0, %v808
    %v810 = vrot.slane %v805, %v809
    %812 = vmatprep.subr.mxu0 0.0
    %813 = vmatpush1.msra.mxu0 0.0
    %814 = vmatprep.subr.mxu0 0.0
    %815 = vmatpush1.msra.mxu0 0.0
    %816 = vmatprep.subr.mxu0 0.0
    %817 = vmatpush1.msra.mxu0 0.0
    %818 = vmatprep.subr.mxu0 0.0
    %819 = vmatpush1.msra.mxu0 0.0
    %820 = vmatprep.subr.mxu0 0.0
    %821 = vmatpush1.msra.mxu0 0.0
    %822 = vmatprep.subr.mxu0 0.0
    %823 = vmatpush1.msra.mxu0 0.0
    %824 = vmatprep.subr.mxu0 0.0
    %825 = vmatpush1.msra.mxu0 0.0
    %826 = vmatprep.subr.mxu0 0.0
    %827 = vmatpush1.msra.mxu0 0.0
    %828 = vmatprep.subr.mxu0 0.0
    %829 = vmatpush1.msra.mxu0 0.0
    %830 = vmatprep.subr.mxu0 0.0
    %831 = vmatpush1.msra.mxu0 0.0
    %832 = vmatprep.subr.mxu0 0.0
    %833 = vmatpush1.msra.mxu0 0.0
    %834 = vmatprep.subr.mxu0 0.0
    %835 = vmatpush1.msra.mxu0 0.0
    %836 = vmatprep.subr.mxu0 0.0
    %837 = vmatpush1.msra.mxu0 %v804
    %838 = vmatprep.subr.mxu0 0.0
    %839 = vmatpush1.msra.mxu0 %v803
    %840 = vmatprep.subr.mxu0 0.0
    %841 = vmatpush1.msra.mxu0 %v802
    %842 = vmatprep.subr.mxu0 0.0
    %843 = vmatpush1.msra.mxu0 %v801
    %844 = vmatprep.subr.mxu0 0.0
    %845 = vmatpush2.msra.mxu0 0.0
    %846 = vmatprep.subr.mxu0 0.0
    %847 = vmatpush2.msra.mxu0 0.0
    %848 = vmatprep.subr.mxu0 0.0
    %849 = vmatpush2.msra.mxu0 0.0
    %850 = vmatprep.subr.mxu0 0.0
    %851 = vmatpush2.msra.mxu0 0.0
    %852 = vmatprep.subr.mxu0 0.0
    %853 = vmatpush2.msra.mxu0 0.0
    %854 = vmatprep.subr.mxu0 0.0
    %855 = vmatpush2.msra.mxu0 0.0
    %856 = vmatprep.subr.mxu0 0.0
    %857 = vmatpush2.msra.mxu0 0.0
    %858 = vmatprep.subr.mxu0 0.0
    %859 = vmatpush2.msra.mxu0 0.0
    %860 = vmatprep.subr.mxu0 0.0
    %861 = vmatpush2.msra.mxu0 0.0
    %862 = vmatprep.subr.mxu0 0.0
    %863 = vmatpush2.msra.mxu0 0.0
    %864 = vmatprep.subr.mxu0 0.0
    %865 = vmatpush2.msra.mxu0 0.0
    %866 = vmatprep.subr.mxu0 0.0
    %867 = vmatpush2.msra.mxu0 0.0
    %868 = vmatprep.subr.mxu0 0.0
    %869 = vmatpush2.msra.mxu0 0.0
    %870 = vmatprep.subr.mxu0 0.0
    %871 = vmatpush2.msra.mxu0 0.0
    %872 = vmatprep.subr.mxu0 0.0
    %873 = vmatpush2.msra.mxu0 0.0
    %874 = vmatprep.subr.mxu0 0.0
    %875 = vmatpush2.msra.mxu0 0.0
    %876 = vmatprep.mubr.f32.mxu0 0.0
    %877 = vmatmul.mubr.f32.gmra.mxu0 %v134
    %v878 = vpop.f32.mrf.mxu0
    %v879 = vadd.f32 %v810, %v878
    %v880 = vpop.f32.mrf.mxu0
    %881 = vdwg.mxu0
    %v882 = vld [vmem:[%s4 + $0x10] sm:$0xff]
    %v883 = vld [vmem:[%s4 + $0x30] sm:$0xff]
    %v884 = vld [vmem:[%s4 + $0x50] sm:$0xff]
    %v885 = vld [vmem:[%s4 + $0x70] sm:$0xff]
    %886 = vmatprep.subr.mxu0 0.0
    %887 = vmatpush1.msra.mxu0 0.0
    %888 = vmatprep.subr.mxu0 0.0
    %889 = vmatpush1.msra.mxu0 0.0
    %890 = vmatprep.subr.mxu0 0.0
    %891 = vmatpush1.msra.mxu0 0.0
    %892 = vmatprep.subr.mxu0 0.0
    %893 = vmatpush1.msra.mxu0 0.0
    %894 = vmatprep.subr.mxu0 0.0
    %895 = vmatpush1.msra.mxu0 0.0
    %896 = vmatprep.subr.mxu0 0.0
    %897 = vmatpush1.msra.mxu0 0.0
    %898 = vmatprep.subr.mxu0 0.0
    %899 = vmatpush1.msra.mxu0 0.0
    %900 = vmatprep.subr.mxu0 0.0
    %901 = vmatpush1.msra.mxu0 0.0
    %902 = vmatprep.subr.mxu0 0.0
    %903 = vmatpush1.msra.mxu0 0.0
    %904 = vmatprep.subr.mxu0 0.0
    %905 = vmatpush1.msra.mxu0 0.0
    %906 = vmatprep.subr.mxu0 0.0
    %907 = vmatpush1.msra.mxu0 0.0
    %908 = vmatprep.subr.mxu0 0.0
    %909 = vmatpush1.msra.mxu0 0.0
    %910 = vmatprep.subr.mxu0 0.0
    %911 = vmatpush1.msra.mxu0 %v885
    %912 = vmatprep.subr.mxu0 0.0
    %913 = vmatpush1.msra.mxu0 %v884
    %914 = vmatprep.subr.mxu0 0.0
    %915 = vmatpush1.msra.mxu0 %v883
    %916 = vmatprep.subr.mxu0 0.0
    %917 = vmatpush1.msra.mxu0 %v882
    %918 = vmatprep.subr.mxu0 0.0
    %919 = vmatpush2.msra.mxu0 0.0
    %920 = vmatprep.subr.mxu0 0.0
    %921 = vmatpush2.msra.mxu0 0.0
    %922 = vmatprep.subr.mxu0 0.0
    %923 = vmatpush2.msra.mxu0 0.0
    %924 = vmatprep.subr.mxu0 0.0
    %925 = vmatpush2.msra.mxu0 0.0
    %926 = vmatprep.subr.mxu0 0.0
    %927 = vmatpush2.msra.mxu0 0.0
    %928 = vmatprep.subr.mxu0 0.0
    %929 = vmatpush2.msra.mxu0 0.0
    %930 = vmatprep.subr.mxu0 0.0
    %931 = vmatpush2.msra.mxu0 0.0
    %932 = vmatprep.subr.mxu0 0.0
    %933 = vmatpush2.msra.mxu0 0.0
    %934 = vmatprep.subr.mxu0 0.0
    %935 = vmatpush2.msra.mxu0 0.0
    %936 = vmatprep.subr.mxu0 0.0
    %937 = vmatpush2.msra.mxu0 0.0
    %938 = vmatprep.subr.mxu0 0.0
    %939 = vmatpush2.msra.mxu0 0.0
    %940 = vmatprep.subr.mxu0 0.0
    %941 = vmatpush2.msra.mxu0 0.0
    %942 = vmatprep.subr.mxu0 0.0
    %943 = vmatpush2.msra.mxu0 0.0
    %944 = vmatprep.subr.mxu0 0.0
    %945 = vmatpush2.msra.mxu0 0.0
    %946 = vmatprep.subr.mxu0 0.0
    %947 = vmatpush2.msra.mxu0 0.0
    %948 = vmatprep.subr.mxu0 0.0
    %949 = vmatpush2.msra.mxu0 0.0
    %950 = vmatprep.mubr.f32.mxu0 0.0
    %951 = vmatmul.mubr.f32.gmra.mxu0 %v211
    %v952 = vpop.f32.mrf.mxu0
    %v953 = vadd.f32 0.0, %v952
    %v954 = vpop.f32.mrf.mxu0
    %955 = vmatprep.mubr.f32.mxu0 0.0
    %956 = vmatmul.mubr.f32.gmra.mxu0 %v214
    %v957 = vpop.f32.mrf.mxu0
    %v958 = vadd.f32 0.0, %v957
    %v959 = vpop.f32.mrf.mxu0
    %960 = vmatprep.mubr.f32.mxu0 0.0
    %961 = vmatmul.mubr.f32.gmra.mxu0 %v217
    %v962 = vpop.f32.mrf.mxu0
    %v963 = vadd.f32 0.0, %v962
    %v964 = vpop.f32.mrf.mxu0
    %965 = vmatprep.mubr.f32.mxu0 0.0
    %966 = vmatmul.mubr.f32.gmra.mxu0 %v220
    %v967 = vpop.f32.mrf.mxu0
    %v968 = vadd.f32 0.0, %v967
    %v969 = vpop.f32.mrf.mxu0
    %970 = vmatprep.mubr.f32.mxu0 0.0
    %971 = vmatmul.mubr.f32.gmra.mxu0 %v223
    %v972 = vpop.f32.mrf.mxu0
    %v973 = vadd.f32 0.0, %v972
    %v974 = vpop.f32.mrf.mxu0
    %975 = vmatprep.mubr.f32.mxu0 0.0
    %976 = vmatmul.mubr.f32.gmra.mxu0 %v226
    %v977 = vpop.f32.mrf.mxu0
    %v978 = vadd.f32 0.0, %v977
    %v979 = vpop.f32.mrf.mxu0
    %980 = vmatprep.mubr.f32.mxu0 0.0
    %981 = vmatmul.mubr.f32.gmra.mxu0 %v229
    %v982 = vpop.f32.mrf.mxu0
    %v983 = vadd.f32 0.0, %v982
    %v984 = vpop.f32.mrf.mxu0
    %985 = vmatprep.mubr.f32.mxu0 0.0
    %986 = vmatmul.mubr.f32.gmra.mxu0 %v232
    %v987 = vpop.f32.mrf.mxu0
    %v988 = vadd.f32 0.0, %v987
    %v989 = vpop.f32.mrf.mxu0
    %990 = vdwg.mxu0
    %v993 = vunpack.c.l.s4 1966171168
    %v994 = vunpack.c.0.s8 %v993
    %v995 = vlaneseq
    %v996 = vshrl.u32 %v995, 7
    %v997 = vsub.s32 %v994, %v996
    %v998 = vrot.slane %v879, %v997
    %v999 = vcombine.high %v998, %v998
    %v1001 = vunpack.c.l.s4 1966171168
    %v1002 = vunpack.c.0.s8 %v1001
    %v1003 = vlaneseq
    %v1004 = vshrl.u32 %v1003, 7
    %v1005 = vsub.s32 %v1002, %v1004
    %v1006 = vrot.slane %v998, %v1005
    %v1008 = vunpack.c.l.s4 1966171168
    %v1009 = vunpack.c.0.s8 %v1008
    %v1010 = vlaneseq
    %v1011 = vshrl.u32 %v1010, 7
    %v1012 = vsub.s32 %v1009, %v1011
    %v1013 = vrot.slane %v999, %v1012
    %v1014 = vlaneseq
    %v1015 = vshrl.u32 %v1014, 7
    %v1016 = vsub.s32 0, %v1015
    %v1017 = vrot.slane %v1006, %v1016
    %v1018 = vlaneseq
    %v1019 = vshrl.u32 %v1018, 7
    %v1020 = vsub.s32 0, %v1019
    %v1021 = vrot.slane %v1013, %v1020
    %v1024 = vadd.f32 %v1017, %v953
    %v1025 = vadd.f32 %v1017, %v958
    %v1026 = vadd.f32 %v1017, %v963
    %v1027 = vadd.f32 %v1017, %v968
    %v1028 = vadd.f32 %v1017, %v973
    %v1029 = vadd.f32 %v1017, %v978
    %v1030 = vadd.f32 %v1017, %v983
    %v1031 = vadd.f32 %v1017, %v988
    %v1032 = vadd.f32 %v1021, %v953
    %v1033 = vadd.f32 %v1021, %v958
    %v1034 = vadd.f32 %v1021, %v963
    %v1035 = vadd.f32 %v1021, %v968
    %v1036 = vadd.f32 %v1021, %v973
    %v1037 = vadd.f32 %v1021, %v978
    %v1038 = vadd.f32 %v1021, %v983
    %v1039 = vadd.f32 %v1021, %v988
    %v1040 = vmax.f32 %v1024, 0.0
    %v1041 = vmax.f32 %v1025, 0.0
    %v1042 = vmax.f32 %v1026, 0.0
    %v1043 = vmax.f32 %v1027, 0.0
    %v1044 = vmax.f32 %v1028, 0.0
    %v1045 = vmax.f32 %v1029, 0.0
    %v1046 = vmax.f32 %v1030, 0.0
    %v1047 = vmax.f32 %v1031, 0.0
    %v1048 = vmax.f32 %v1032, 0.0
    %v1049 = vmax.f32 %v1033, 0.0
    %v1050 = vmax.f32 %v1034, 0.0
    %v1051 = vmax.f32 %v1035, 0.0
    %v1052 = vmax.f32 %v1036, 0.0
    %v1053 = vmax.f32 %v1037, 0.0
    %v1054 = vmax.f32 %v1038, 0.0
    %v1055 = vmax.f32 %v1039, 0.0
    %v1056 = vld [vmem:[#allocation6 + $0x2] sm:$0x1]
    %v1058 = vlaneseq
    %v1059 = vshrl.u32 %v1058, 7
    %v1060 = vsub.s32 0, %v1059
    %v1061 = vrot.slane %v1056, %v1060
    %v1063 = vmul.f32 %v1040, %v1061
    %v1064 = vmul.f32 %v1041, %v1061
    %v1065 = vmul.f32 %v1042, %v1061
    %v1066 = vmul.f32 %v1043, %v1061
    %v1067 = vmul.f32 %v1044, %v1061
    %v1068 = vmul.f32 %v1045, %v1061
    %v1069 = vmul.f32 %v1046, %v1061
    %v1070 = vmul.f32 %v1047, %v1061
    %v1071 = vmul.f32 %v1048, %v1061
    %v1072 = vmul.f32 %v1049, %v1061
    %v1073 = vmul.f32 %v1050, %v1061
    %v1074 = vmul.f32 %v1051, %v1061
    %v1075 = vmul.f32 %v1052, %v1061
    %v1076 = vmul.f32 %v1053, %v1061
    %v1077 = vmul.f32 %v1054, %v1061
    %v1078 = vmul.f32 %v1055, %v1061
    %1079 = vadd.xlane.f32.xlu0 %v1063
    %v1080 = vpop.xlane.xlu0 %1079
    %1081 = vadd.xlane.f32.xlu0 %v1064
    %v1082 = vpop.xlane.xlu0 %1081
    %1083 = vadd.xlane.f32.xlu0 %v1065
    %v1084 = vpop.xlane.xlu0 %1083
    %1085 = vadd.xlane.f32.xlu0 %v1066
    %v1086 = vpop.xlane.xlu0 %1085
    %1087 = vadd.xlane.f32.xlu0 %v1067
    %v1088 = vpop.xlane.xlu0 %1087
    %1089 = vadd.xlane.f32.xlu0 %v1068
    %v1090 = vpop.xlane.xlu0 %1089
    %1091 = vadd.xlane.f32.xlu0 %v1069
    %v1092 = vpop.xlane.xlu0 %1091
    %1093 = vadd.xlane.f32.xlu0 %v1070
    %v1094 = vpop.xlane.xlu0 %1093
    %1095 = vadd.xlane.f32.xlu0 %v1071
    %v1096 = vpop.xlane.xlu0 %1095
    %1097 = vadd.xlane.f32.xlu0 %v1072
    %v1098 = vpop.xlane.xlu0 %1097
    %1099 = vadd.xlane.f32.xlu0 %v1073
    %v1100 = vpop.xlane.xlu0 %1099
    %1101 = vadd.xlane.f32.xlu0 %v1074
    %v1102 = vpop.xlane.xlu0 %1101
    %1103 = vadd.xlane.f32.xlu0 %v1075
    %v1104 = vpop.xlane.xlu0 %1103
    %1105 = vadd.xlane.f32.xlu0 %v1076
    %v1106 = vpop.xlane.xlu0 %1105
    %1107 = vadd.xlane.f32.xlu0 %v1077
    %v1108 = vpop.xlane.xlu0 %1107
    %1109 = vadd.xlane.f32.xlu0 %v1078
    %v1110 = vpop.xlane.xlu0 %1109
    %v1111 = vadd.f32 %v785, %v1080
    %v1112 = vadd.f32 %v786, %v1082
    %v1113 = vadd.f32 %v787, %v1084
    %v1114 = vadd.f32 %v788, %v1086
    %v1115 = vadd.f32 %v789, %v1088
    %v1116 = vadd.f32 %v790, %v1090
    %v1117 = vadd.f32 %v791, %v1092
    %v1118 = vadd.f32 %v792, %v1094
    %v1119 = vadd.f32 %v793, %v1096
    %v1120 = vadd.f32 %v794, %v1098
    %v1121 = vadd.f32 %v795, %v1100
    %v1122 = vadd.f32 %v796, %v1102
    %v1123 = vadd.f32 %v797, %v1104
    %v1124 = vadd.f32 %v798, %v1106
    %v1125 = vadd.f32 %v799, %v1108
    %v1126 = vadd.f32 %v800, %v1110
    %v1127 = vld [vmem:[%s3 + $0x18] sm:$0xff]
    %v1128 = vld [vmem:[%s3 + $0x38] sm:$0xff]
    %v1129 = vld [vmem:[%s3 + $0x58] sm:$0xff]
    %v1130 = vld [vmem:[%s3 + $0x78] sm:$0xff]
    %v1131 = vld [vmem:[#allocation4 + $0x3] sm:$0x1]
    %v1133 = vlaneseq
    %v1134 = vshrl.u32 %v1133, 7
    %v1135 = vsub.s32 0, %v1134
    %v1136 = vrot.slane %v1131, %v1135
    %1138 = vmatprep.subr.mxu0 0.0
    %1139 = vmatpush1.msra.mxu0 0.0
    %1140 = vmatprep.subr.mxu0 0.0
    %1141 = vmatpush1.msra.mxu0 0.0
    %1142 = vmatprep.subr.mxu0 0.0
    %1143 = vmatpush1.msra.mxu0 0.0
    %1144 = vmatprep.subr.mxu0 0.0
    %1145 = vmatpush1.msra.mxu0 0.0
    %1146 = vmatprep.subr.mxu0 0.0
    %1147 = vmatpush1.msra.mxu0 0.0
    %1148 = vmatprep.subr.mxu0 0.0
    %1149 = vmatpush1.msra.mxu0 0.0
    %1150 = vmatprep.subr.mxu0 0.0
    %1151 = vmatpush1.msra.mxu0 0.0
    %1152 = vmatprep.subr.mxu0 0.0
    %1153 = vmatpush1.msra.mxu0 0.0
    %1154 = vmatprep.subr.mxu0 0.0
    %1155 = vmatpush1.msra.mxu0 0.0
    %1156 = vmatprep.subr.mxu0 0.0
    %1157 = vmatpush1.msra.mxu0 0.0
    %1158 = vmatprep.subr.mxu0 0.0
    %1159 = vmatpush1.msra.mxu0 0.0
    %1160 = vmatprep.subr.mxu0 0.0
    %1161 = vmatpush1.msra.mxu0 0.0
    %1162 = vmatprep.subr.mxu0 0.0
    %1163 = vmatpush1.msra.mxu0 %v1130
    %1164 = vmatprep.subr.mxu0 0.0
    %1165 = vmatpush1.msra.mxu0 %v1129
    %1166 = vmatprep.subr.mxu0 0.0
    %1167 = vmatpush1.msra.mxu0 %v1128
    %1168 = vmatprep.subr.mxu0 0.0
    %1169 = vmatpush1.msra.mxu0 %v1127
    %1170 = vmatprep.subr.mxu0 0.0
    %1171 = vmatpush2.msra.mxu0 0.0
    %1172 = vmatprep.subr.mxu0 0.0
    %1173 = vmatpush2.msra.mxu0 0.0
    %1174 = vmatprep.subr.mxu0 0.0
    %1175 = vmatpush2.msra.mxu0 0.0
    %1176 = vmatprep.subr.mxu0 0.0
    %1177 = vmatpush2.msra.mxu0 0.0
    %1178 = vmatprep.subr.mxu0 0.0
    %1179 = vmatpush2.msra.mxu0 0.0
    %1180 = vmatprep.subr.mxu0 0.0
    %1181 = vmatpush2.msra.mxu0 0.0
    %1182 = vmatprep.subr.mxu0 0.0
    %1183 = vmatpush2.msra.mxu0 0.0
    %1184 = vmatprep.subr.mxu0 0.0
    %1185 = vmatpush2.msra.mxu0 0.0
    %1186 = vmatprep.subr.mxu0 0.0
    %1187 = vmatpush2.msra.mxu0 0.0
    %1188 = vmatprep.subr.mxu0 0.0
    %1189 = vmatpush2.msra.mxu0 0.0
    %1190 = vmatprep.subr.mxu0 0.0
    %1191 = vmatpush2.msra.mxu0 0.0
    %1192 = vmatprep.subr.mxu0 0.0
    %1193 = vmatpush2.msra.mxu0 0.0
    %1194 = vmatprep.subr.mxu0 0.0
    %1195 = vmatpush2.msra.mxu0 0.0
    %1196 = vmatprep.subr.mxu0 0.0
    %1197 = vmatpush2.msra.mxu0 0.0
    %1198 = vmatprep.subr.mxu0 0.0
    %1199 = vmatpush2.msra.mxu0 0.0
    %1200 = vmatprep.subr.mxu0 0.0
    %1201 = vmatpush2.msra.mxu0 0.0
    %1202 = vmatprep.mubr.f32.mxu0 0.0
    %1203 = vmatmul.mubr.f32.gmra.mxu0 %v134
    %v1204 = vpop.f32.mrf.mxu0
    %v1205 = vadd.f32 %v1136, %v1204
    %v1206 = vpop.f32.mrf.mxu0
    %1207 = vdwg.mxu0
    %v1208 = vld [vmem:[%s4 + $0x18] sm:$0xff]
    %v1209 = vld [vmem:[%s4 + $0x38] sm:$0xff]
    %v1210 = vld [vmem:[%s4 + $0x58] sm:$0xff]
    %v1211 = vld [vmem:[%s4 + $0x78] sm:$0xff]
    %1212 = vmatprep.subr.mxu0 0.0
    %1213 = vmatpush1.msra.mxu0 0.0
    %1214 = vmatprep.subr.mxu0 0.0
    %1215 = vmatpush1.msra.mxu0 0.0
    %1216 = vmatprep.subr.mxu0 0.0
    %1217 = vmatpush1.msra.mxu0 0.0
    %1218 = vmatprep.subr.mxu0 0.0
    %1219 = vmatpush1.msra.mxu0 0.0
    %1220 = vmatprep.subr.mxu0 0.0
    %1221 = vmatpush1.msra.mxu0 0.0
    %1222 = vmatprep.subr.mxu0 0.0
    %1223 = vmatpush1.msra.mxu0 0.0
    %1224 = vmatprep.subr.mxu0 0.0
    %1225 = vmatpush1.msra.mxu0 0.0
    %1226 = vmatprep.subr.mxu0 0.0
    %1227 = vmatpush1.msra.mxu0 0.0
    %1228 = vmatprep.subr.mxu0 0.0
    %1229 = vmatpush1.msra.mxu0 0.0
    %1230 = vmatprep.subr.mxu0 0.0
    %1231 = vmatpush1.msra.mxu0 0.0
    %1232 = vmatprep.subr.mxu0 0.0
    %1233 = vmatpush1.msra.mxu0 0.0
    %1234 = vmatprep.subr.mxu0 0.0
    %1235 = vmatpush1.msra.mxu0 0.0
    %1236 = vmatprep.subr.mxu0 0.0
    %1237 = vmatpush1.msra.mxu0 %v1211
    %1238 = vmatprep.subr.mxu0 0.0
    %1239 = vmatpush1.msra.mxu0 %v1210
    %1240 = vmatprep.subr.mxu0 0.0
    %1241 = vmatpush1.msra.mxu0 %v1209
    %1242 = vmatprep.subr.mxu0 0.0
    %1243 = vmatpush1.msra.mxu0 %v1208
    %1244 = vmatprep.subr.mxu0 0.0
    %1245 = vmatpush2.msra.mxu0 0.0
    %1246 = vmatprep.subr.mxu0 0.0
    %1247 = vmatpush2.msra.mxu0 0.0
    %1248 = vmatprep.subr.mxu0 0.0
    %1249 = vmatpush2.msra.mxu0 0.0
    %1250 = vmatprep.subr.mxu0 0.0
    %1251 = vmatpush2.msra.mxu0 0.0
    %1252 = vmatprep.subr.mxu0 0.0
    %1253 = vmatpush2.msra.mxu0 0.0
    %1254 = vmatprep.subr.mxu0 0.0
    %1255 = vmatpush2.msra.mxu0 0.0
    %1256 = vmatprep.subr.mxu0 0.0
    %1257 = vmatpush2.msra.mxu0 0.0
    %1258 = vmatprep.subr.mxu0 0.0
    %1259 = vmatpush2.msra.mxu0 0.0
    %1260 = vmatprep.subr.mxu0 0.0
    %1261 = vmatpush2.msra.mxu0 0.0
    %1262 = vmatprep.subr.mxu0 0.0
    %1263 = vmatpush2.msra.mxu0 0.0
    %1264 = vmatprep.subr.mxu0 0.0
    %1265 = vmatpush2.msra.mxu0 0.0
    %1266 = vmatprep.subr.mxu0 0.0
    %1267 = vmatpush2.msra.mxu0 0.0
    %1268 = vmatprep.subr.mxu0 0.0
    %1269 = vmatpush2.msra.mxu0 0.0
    %1270 = vmatprep.subr.mxu0 0.0
    %1271 = vmatpush2.msra.mxu0 0.0
    %1272 = vmatprep.subr.mxu0 0.0
    %1273 = vmatpush2.msra.mxu0 0.0
    %1274 = vmatprep.subr.mxu0 0.0
    %1275 = vmatpush2.msra.mxu0 0.0
    %1276 = vmatprep.mubr.f32.mxu0 0.0
    %1277 = vmatmul.mubr.f32.gmra.mxu0 %v211
    %v1278 = vpop.f32.mrf.mxu0
    %v1279 = vadd.f32 0.0, %v1278
    %v1280 = vpop.f32.mrf.mxu0
    %1281 = vmatprep.mubr.f32.mxu0 0.0
    %1282 = vmatmul.mubr.f32.gmra.mxu0 %v214
    %v1283 = vpop.f32.mrf.mxu0
    %v1284 = vadd.f32 0.0, %v1283
    %v1285 = vpop.f32.mrf.mxu0
    %1286 = vmatprep.mubr.f32.mxu0 0.0
    %1287 = vmatmul.mubr.f32.gmra.mxu0 %v217
    %v1288 = vpop.f32.mrf.mxu0
    %v1289 = vadd.f32 0.0, %v1288
    %v1290 = vpop.f32.mrf.mxu0
    %1291 = vmatprep.mubr.f32.mxu0 0.0
    %1292 = vmatmul.mubr.f32.gmra.mxu0 %v220
    %v1293 = vpop.f32.mrf.mxu0
    %v1294 = vadd.f32 0.0, %v1293
    %v1295 = vpop.f32.mrf.mxu0
    %1296 = vmatprep.mubr.f32.mxu0 0.0
    %1297 = vmatmul.mubr.f32.gmra.mxu0 %v223
    %v1298 = vpop.f32.mrf.mxu0
    %v1299 = vadd.f32 0.0, %v1298
    %v1300 = vpop.f32.mrf.mxu0
    %1301 = vmatprep.mubr.f32.mxu0 0.0
    %1302 = vmatmul.mubr.f32.gmra.mxu0 %v226
    %v1303 = vpop.f32.mrf.mxu0
    %v1304 = vadd.f32 0.0, %v1303
    %v1305 = vpop.f32.mrf.mxu0
    %1306 = vmatprep.mubr.f32.mxu0 0.0
    %1307 = vmatmul.mubr.f32.gmra.mxu0 %v229
    %v1308 = vpop.f32.mrf.mxu0
    %v1309 = vadd.f32 0.0, %v1308
    %v1310 = vpop.f32.mrf.mxu0
    %1311 = vmatprep.mubr.f32.mxu0 0.0
    %1312 = vmatmul.mubr.f32.gmra.mxu0 %v232
    %v1313 = vpop.f32.mrf.mxu0
    %v1314 = vadd.f32 0.0, %v1313
    %v1315 = vpop.f32.mrf.mxu0
    %1316 = vdwg.mxu0
    %v1319 = vunpack.c.l.s4 1966171168
    %v1320 = vunpack.c.0.s8 %v1319
    %v1321 = vlaneseq
    %v1322 = vshrl.u32 %v1321, 7
    %v1323 = vsub.s32 %v1320, %v1322
    %v1324 = vrot.slane %v1205, %v1323
    %v1325 = vcombine.high %v1324, %v1324
    %v1327 = vunpack.c.l.s4 1966171168
    %v1328 = vunpack.c.0.s8 %v1327
    %v1329 = vlaneseq
    %v1330 = vshrl.u32 %v1329, 7
    %v1331 = vsub.s32 %v1328, %v1330
    %v1332 = vrot.slane %v1324, %v1331
    %v1334 = vunpack.c.l.s4 1966171168
    %v1335 = vunpack.c.0.s8 %v1334
    %v1336 = vlaneseq
    %v1337 = vshrl.u32 %v1336, 7
    %v1338 = vsub.s32 %v1335, %v1337
    %v1339 = vrot.slane %v1325, %v1338
    %v1340 = vlaneseq
    %v1341 = vshrl.u32 %v1340, 7
    %v1342 = vsub.s32 0, %v1341
    %v1343 = vrot.slane %v1332, %v1342
    %v1344 = vlaneseq
    %v1345 = vshrl.u32 %v1344, 7
    %v1346 = vsub.s32 0, %v1345
    %v1347 = vrot.slane %v1339, %v1346
    %v1350 = vadd.f32 %v1343, %v1279
    %v1351 = vadd.f32 %v1343, %v1284
    %v1352 = vadd.f32 %v1343, %v1289
    %v1353 = vadd.f32 %v1343, %v1294
    %v1354 = vadd.f32 %v1343, %v1299
    %v1355 = vadd.f32 %v1343, %v1304
    %v1356 = vadd.f32 %v1343, %v1309
    %v1357 = vadd.f32 %v1343, %v1314
    %v1358 = vadd.f32 %v1347, %v1279
    %v1359 = vadd.f32 %v1347, %v1284
    %v1360 = vadd.f32 %v1347, %v1289
    %v1361 = vadd.f32 %v1347, %v1294
    %v1362 = vadd.f32 %v1347, %v1299
    %v1363 = vadd.f32 %v1347, %v1304
    %v1364 = vadd.f32 %v1347, %v1309
    %v1365 = vadd.f32 %v1347, %v1314
    %v1366 = vmax.f32 %v1350, 0.0
    %v1367 = vmax.f32 %v1351, 0.0
    %v1368 = vmax.f32 %v1352, 0.0
    %v1369 = vmax.f32 %v1353, 0.0
    %v1370 = vmax.f32 %v1354, 0.0
    %v1371 = vmax.f32 %v1355, 0.0
    %v1372 = vmax.f32 %v1356, 0.0
    %v1373 = vmax.f32 %v1357, 0.0
    %v1374 = vmax.f32 %v1358, 0.0
    %v1375 = vmax.f32 %v1359, 0.0
    %v1376 = vmax.f32 %v1360, 0.0
    %v1377 = vmax.f32 %v1361, 0.0
    %v1378 = vmax.f32 %v1362, 0.0
    %v1379 = vmax.f32 %v1363, 0.0
    %v1380 = vmax.f32 %v1364, 0.0
    %v1381 = vmax.f32 %v1365, 0.0
    %v1382 = vld [vmem:[#allocation6 + $0x3] sm:$0x1]
    %v1384 = vlaneseq
    %v1385 = vshrl.u32 %v1384, 7
    %v1386 = vsub.s32 0, %v1385
    %v1387 = vrot.slane %v1382, %v1386
    %v1389 = vmul.f32 %v1366, %v1387
    %v1390 = vmul.f32 %v1367, %v1387
    %v1391 = vmul.f32 %v1368, %v1387
    %v1392 = vmul.f32 %v1369, %v1387
    %v1393 = vmul.f32 %v1370, %v1387
    %v1394 = vmul.f32 %v1371, %v1387
    %v1395 = vmul.f32 %v1372, %v1387
    %v1396 = vmul.f32 %v1373, %v1387
    %v1397 = vmul.f32 %v1374, %v1387
    %v1398 = vmul.f32 %v1375, %v1387
    %v1399 = vmul.f32 %v1376, %v1387
    %v1400 = vmul.f32 %v1377, %v1387
    %v1401 = vmul.f32 %v1378, %v1387
    %v1402 = vmul.f32 %v1379, %v1387
    %v1403 = vmul.f32 %v1380, %v1387
    %v1404 = vmul.f32 %v1381, %v1387
    %1405 = vadd.xlane.f32.xlu0 %v1389
    %v1406 = vpop.xlane.xlu0 %1405
    %1407 = vadd.xlane.f32.xlu0 %v1390
    %v1408 = vpop.xlane.xlu0 %1407
    %1409 = vadd.xlane.f32.xlu0 %v1391
    %v1410 = vpop.xlane.xlu0 %1409
    %1411 = vadd.xlane.f32.xlu0 %v1392
    %v1412 = vpop.xlane.xlu0 %1411
    %1413 = vadd.xlane.f32.xlu0 %v1393
    %v1414 = vpop.xlane.xlu0 %1413
    %1415 = vadd.xlane.f32.xlu0 %v1394
    %v1416 = vpop.xlane.xlu0 %1415
    %1417 = vadd.xlane.f32.xlu0 %v1395
    %v1418 = vpop.xlane.xlu0 %1417
    %1419 = vadd.xlane.f32.xlu0 %v1396
    %v1420 = vpop.xlane.xlu0 %1419
    %1421 = vadd.xlane.f32.xlu0 %v1397
    %v1422 = vpop.xlane.xlu0 %1421
    %1423 = vadd.xlane.f32.xlu0 %v1398
    %v1424 = vpop.xlane.xlu0 %1423
    %1425 = vadd.xlane.f32.xlu0 %v1399
    %v1426 = vpop.xlane.xlu0 %1425
    %1427 = vadd.xlane.f32.xlu0 %v1400
    %v1428 = vpop.xlane.xlu0 %1427
    %1429 = vadd.xlane.f32.xlu0 %v1401
    %v1430 = vpop.xlane.xlu0 %1429
    %1431 = vadd.xlane.f32.xlu0 %v1402
    %v1432 = vpop.xlane.xlu0 %1431
    %1433 = vadd.xlane.f32.xlu0 %v1403
    %v1434 = vpop.xlane.xlu0 %1433
    %1435 = vadd.xlane.f32.xlu0 %v1404
    %v1436 = vpop.xlane.xlu0 %1435
    %v1437 = vadd.f32 %v1111, %v1406
    %v1438 = vadd.f32 %v1112, %v1408
    %v1439 = vadd.f32 %v1113, %v1410
    %v1440 = vadd.f32 %v1114, %v1412
    %v1441 = vadd.f32 %v1115, %v1414
    %v1442 = vadd.f32 %v1116, %v1416
    %v1443 = vadd.f32 %v1117, %v1418
    %v1444 = vadd.f32 %v1118, %v1420
    %v1445 = vadd.f32 %v1119, %v1422
    %v1446 = vadd.f32 %v1120, %v1424
    %v1447 = vadd.f32 %v1121, %v1426
    %v1448 = vadd.f32 %v1122, %v1428
    %v1449 = vadd.f32 %v1123, %v1430
    %v1450 = vadd.f32 %v1124, %v1432
    %v1451 = vadd.f32 %v1125, %v1434
    %v1452 = vadd.f32 %v1126, %v1436
    %v1453 = vlaneseq
    %v1454 = vshrl.u32 %v1453, 7
    %v1455 = vadd.s32 %v1454, 8
    %v1456 = vadd.s32 %v1454, 16
    %v1457 = vadd.s32 %v1454, 24
    %v1458 = vadd.s32 %v1454, 32
    %v1459 = vadd.s32 %v1454, 40
    %v1460 = vadd.s32 %v1454, 48
    %v1461 = vadd.s32 %v1454, 56
    %v1462 = vcvt.s32.f32 %v1454
    %v1463 = vcvt.s32.f32 %v1455
    %v1464 = vcvt.s32.f32 %v1456
    %v1465 = vcvt.s32.f32 %v1457
    %v1466 = vcvt.s32.f32 %v1458
    %v1467 = vcvt.s32.f32 %v1459
    %v1468 = vcvt.s32.f32 %v1460
    %v1469 = vcvt.s32.f32 %v1461
    %v1470 = vmax.f32 %v1437, %v1439
    %v1471 = vmax.f32 %v1438, %v1440
    %v1472 = vmax.f32 %v1470, %v1441
    %v1473 = vmax.f32 %v1471, %v1442
    %v1474 = vmax.f32 %v1472, %v1443
    %v1475 = vmax.f32 %v1473, %v1444
    %v1476 = vmax.f32 %v1474, %v1475
    %v1477 = vrot.slane %v1476, 4
    %v1478 = vmax.f32 %v1476, %v1477
    %v1479 = vrot.slane %v1478, 2
    %v1480 = vmax.f32 %v1478, %v1479
    %v1481 = vrot.slane %v1480, 1
    %v1482 = vmax.f32 %v1480, %v1481
    %v1483 = vmax.f32 %v1445, %v1447
    %v1484 = vmax.f32 %v1446, %v1448
    %v1485 = vmax.f32 %v1483, %v1449
    %v1486 = vmax.f32 %v1484, %v1450
    %v1487 = vmax.f32 %v1485, %v1451
    %v1488 = vmax.f32 %v1486, %v1452
    %v1489 = vmax.f32 %v1487, %v1488
    %v1490 = vrot.slane %v1489, 4
    %v1491 = vmax.f32 %v1489, %v1490
    %v1492 = vrot.slane %v1491, 2
    %v1493 = vmax.f32 %v1491, %v1492
    %v1494 = vrot.slane %v1493, 1
    %v1495 = vmax.f32 %v1493, %v1494
    %vm1496 = vcmp.ge.f32.partialorder %v1437, %v1482
    %vm1497 = vcmp.ge.f32.partialorder %v1438, %v1482
    %vm1498 = vcmp.ge.f32.partialorder %v1439, %v1482
    %vm1499 = vcmp.ge.f32.partialorder %v1440, %v1482
    %vm1500 = vcmp.ge.f32.partialorder %v1441, %v1482
    %vm1501 = vcmp.ge.f32.partialorder %v1442, %v1482
    %vm1502 = vcmp.ge.f32.partialorder %v1443, %v1482
    %vm1503 = vcmp.ge.f32.partialorder %v1444, %v1482
    %vm1504 = vcmp.ge.f32.partialorder %v1445, %v1495
    %vm1505 = vcmp.ge.f32.partialorder %v1446, %v1495
    %vm1506 = vcmp.ge.f32.partialorder %v1447, %v1495
    %vm1507 = vcmp.ge.f32.partialorder %v1448, %v1495
    %vm1508 = vcmp.ge.f32.partialorder %v1449, %v1495
    %vm1509 = vcmp.ge.f32.partialorder %v1450, %v1495
    %vm1510 = vcmp.ge.f32.partialorder %v1451, %v1495
    %vm1511 = vcmp.ge.f32.partialorder %v1452, %v1495
    %v1512 = vsel %vm1496, %v1462, 64.0
    %v1513 = vsel %vm1497, %v1463, 64.0
    %v1514 = vsel %vm1498, %v1464, 64.0
    %v1515 = vsel %vm1499, %v1465, 64.0
    %v1516 = vsel %vm1500, %v1466, 64.0
    %v1517 = vsel %vm1501, %v1467, 64.0
    %v1518 = vsel %vm1502, %v1468, 64.0
    %v1519 = vsel %vm1503, %v1469, 64.0
    %v1520 = vsel %vm1504, %v1462, 64.0
    %v1521 = vsel %vm1505, %v1463, 64.0
    %v1522 = vsel %vm1506, %v1464, 64.0
    %v1523 = vsel %vm1507, %v1465, 64.0
    %v1524 = vsel %vm1508, %v1466, 64.0
    %v1525 = vsel %vm1509, %v1467, 64.0
    %v1526 = vsel %vm1510, %v1468, 64.0
    %v1527 = vsel %vm1511, %v1469, 64.0
    %v1528 = vmin.f32 %v1512, %v1514
    %v1529 = vmin.f32 %v1513, %v1515
    %v1530 = vmin.f32 %v1528, %v1516
    %v1531 = vmin.f32 %v1529, %v1517
    %v1532 = vmin.f32 %v1530, %v1518
    %v1533 = vmin.f32 %v1531, %v1519
    %v1534 = vmin.f32 %v1532, %v1533
    %v1535 = vrot.slane %v1534, 4
    %v1536 = vmin.f32 %v1534, %v1535
    %v1537 = vrot.slane %v1536, 2
    %v1538 = vmin.f32 %v1536, %v1537
    %v1539 = vrot.slane %v1538, 1
    %v1540 = vmin.f32 %v1538, %v1539
    %v1541 = vmin.f32 %v1520, %v1522
    %v1542 = vmin.f32 %v1521, %v1523
    %v1543 = vmin.f32 %v1541, %v1524
    %v1544 = vmin.f32 %v1542, %v1525
    %v1545 = vmin.f32 %v1543, %v1526
    %v1546 = vmin.f32 %v1544, %v1527
    %v1547 = vmin.f32 %v1545, %v1546
    %v1548 = vrot.slane %v1547, 4
    %v1549 = vmin.f32 %v1547, %v1548
    %v1550 = vrot.slane %v1549, 2
    %v1551 = vmin.f32 %v1549, %v1550
    %v1552 = vrot.slane %v1551, 1
    %v1553 = vmin.f32 %v1551, %v1552
    %vm1554 = vcmp.eq.f32.partialorder %v1462, %v1540
    %vm1555 = vcmp.eq.f32.partialorder %v1463, %v1540
    %vm1556 = vcmp.eq.f32.partialorder %v1464, %v1540
    %vm1557 = vcmp.eq.f32.partialorder %v1465, %v1540
    %vm1558 = vcmp.eq.f32.partialorder %v1466, %v1540
    %vm1559 = vcmp.eq.f32.partialorder %v1467, %v1540
    %vm1560 = vcmp.eq.f32.partialorder %v1468, %v1540
    %vm1561 = vcmp.eq.f32.partialorder %v1469, %v1540
    %vm1562 = vcmp.eq.f32.partialorder %v1462, %v1553
    %vm1563 = vcmp.eq.f32.partialorder %v1463, %v1553
    %vm1564 = vcmp.eq.f32.partialorder %v1464, %v1553
    %vm1565 = vcmp.eq.f32.partialorder %v1465, %v1553
    %vm1566 = vcmp.eq.f32.partialorder %v1466, %v1553
    %vm1567 = vcmp.eq.f32.partialorder %v1467, %v1553
    %vm1568 = vcmp.eq.f32.partialorder %v1468, %v1553
    %vm1569 = vcmp.eq.f32.partialorder %v1469, %v1553
    %v1570 = vsel %vm1554, 1, 0
    %v1571 = vsel %vm1555, 1, 0
    %v1572 = vsel %vm1556, 1, 0
    %v1573 = vsel %vm1557, 1, 0
    %v1574 = vsel %vm1558, 1, 0
    %v1575 = vsel %vm1559, 1, 0
    %v1576 = vsel %vm1560, 1, 0
    %v1577 = vsel %vm1561, 1, 0
    %v1578 = vsel %vm1562, 1, 0
    %v1579 = vsel %vm1563, 1, 0
    %v1580 = vsel %vm1564, 1, 0
    %v1581 = vsel %vm1565, 1, 0
    %v1582 = vsel %vm1566, 1, 0
    %v1583 = vsel %vm1567, 1, 0
    %v1584 = vsel %vm1568, 1, 0
    %v1585 = vsel %vm1569, 1, 0
    %v1586 = vcvt.s32.f32 %v1570
    %v1587 = vcvt.s32.f32 %v1571
    %v1588 = vcvt.s32.f32 %v1572
    %v1589 = vcvt.s32.f32 %v1573
    %v1590 = vcvt.s32.f32 %v1574
    %v1591 = vcvt.s32.f32 %v1575
    %v1592 = vcvt.s32.f32 %v1576
    %v1593 = vcvt.s32.f32 %v1577
    %v1594 = vcvt.s32.f32 %v1578
    %v1595 = vcvt.s32.f32 %v1579
    %v1596 = vcvt.s32.f32 %v1580
    %v1597 = vcvt.s32.f32 %v1581
    %v1598 = vcvt.s32.f32 %v1582
    %v1599 = vcvt.s32.f32 %v1583
    %v1600 = vcvt.s32.f32 %v1584
    %v1601 = vcvt.s32.f32 %v1585
    %v1602 = vmax.f32 %v1586, 0.0
    %v1603 = vmax.f32 %v1587, 0.0
    %v1604 = vmax.f32 %v1588, 0.0
    %v1605 = vmax.f32 %v1589, 0.0
    %v1606 = vmax.f32 %v1590, 0.0
    %v1607 = vmax.f32 %v1591, 0.0
    %v1608 = vmax.f32 %v1592, 0.0
    %v1609 = vmax.f32 %v1593, 0.0
    %v1610 = vmax.f32 %v1594, 0.0
    %v1611 = vmax.f32 %v1595, 0.0
    %v1612 = vmax.f32 %v1596, 0.0
    %v1613 = vmax.f32 %v1597, 0.0
    %v1614 = vmax.f32 %v1598, 0.0
    %v1615 = vmax.f32 %v1599, 0.0
    %v1616 = vmax.f32 %v1600, 0.0
    %v1617 = vmax.f32 %v1601, 0.0
    %v1618 = vsel %vm1554, -inf, %v1437
    %v1619 = vsel %vm1555, -inf, %v1438
    %v1620 = vsel %vm1556, -inf, %v1439
    %v1621 = vsel %vm1557, -inf, %v1440
    %v1622 = vsel %vm1558, -inf, %v1441
    %v1623 = vsel %vm1559, -inf, %v1442
    %v1624 = vsel %vm1560, -inf, %v1443
    %v1625 = vsel %vm1561, -inf, %v1444
    %v1626 = vsel %vm1562, -inf, %v1445
    %v1627 = vsel %vm1563, -inf, %v1446
    %v1628 = vsel %vm1564, -inf, %v1447
    %v1629 = vsel %vm1565, -inf, %v1448
    %v1630 = vsel %vm1566, -inf, %v1449
    %v1631 = vsel %vm1567, -inf, %v1450
    %v1632 = vsel %vm1568, -inf, %v1451
    %v1633 = vsel %vm1569, -inf, %v1452
    %v1634 = vmax.f32 %v1618, %v1620
    %v1635 = vmax.f32 %v1619, %v1621
    %v1636 = vmax.f32 %v1634, %v1622
    %v1637 = vmax.f32 %v1635, %v1623
    %v1638 = vmax.f32 %v1636, %v1624
    %v1639 = vmax.f32 %v1637, %v1625
    %v1640 = vmax.f32 %v1638, %v1639
    %v1641 = vrot.slane %v1640, 4
    %v1642 = vmax.f32 %v1640, %v1641
    %v1643 = vrot.slane %v1642, 2
    %v1644 = vmax.f32 %v1642, %v1643
    %v1645 = vrot.slane %v1644, 1
    %v1646 = vmax.f32 %v1644, %v1645
    %v1647 = vmax.f32 %v1626, %v1628
    %v1648 = vmax.f32 %v1627, %v1629
    %v1649 = vmax.f32 %v1647, %v1630
    %v1650 = vmax.f32 %v1648, %v1631
    %v1651 = vmax.f32 %v1649, %v1632
    %v1652 = vmax.f32 %v1650, %v1633
    %v1653 = vmax.f32 %v1651, %v1652
    %v1654 = vrot.slane %v1653, 4
    %v1655 = vmax.f32 %v1653, %v1654
    %v1656 = vrot.slane %v1655, 2
    %v1657 = vmax.f32 %v1655, %v1656
    %v1658 = vrot.slane %v1657, 1
    %v1659 = vmax.f32 %v1657, %v1658
    %vm1660 = vcmp.ge.f32.partialorder %v1618, %v1646
    %vm1661 = vcmp.ge.f32.partialorder %v1619, %v1646
    %vm1662 = vcmp.ge.f32.partialorder %v1620, %v1646
    %vm1663 = vcmp.ge.f32.partialorder %v1621, %v1646
    %vm1664 = vcmp.ge.f32.partialorder %v1622, %v1646
    %vm1665 = vcmp.ge.f32.partialorder %v1623, %v1646
    %vm1666 = vcmp.ge.f32.partialorder %v1624, %v1646
    %vm1667 = vcmp.ge.f32.partialorder %v1625, %v1646
    %vm1668 = vcmp.ge.f32.partialorder %v1626, %v1659
    %vm1669 = vcmp.ge.f32.partialorder %v1627, %v1659
    %vm1670 = vcmp.ge.f32.partialorder %v1628, %v1659
    %vm1671 = vcmp.ge.f32.partialorder %v1629, %v1659
    %vm1672 = vcmp.ge.f32.partialorder %v1630, %v1659
    %vm1673 = vcmp.ge.f32.partialorder %v1631, %v1659
    %vm1674 = vcmp.ge.f32.partialorder %v1632, %v1659
    %vm1675 = vcmp.ge.f32.partialorder %v1633, %v1659
    %v1676 = vsel %vm1660, %v1462, 64.0
    %v1677 = vsel %vm1661, %v1463, 64.0
    %v1678 = vsel %vm1662, %v1464, 64.0
    %v1679 = vsel %vm1663, %v1465, 64.0
    %v1680 = vsel %vm1664, %v1466, 64.0
    %v1681 = vsel %vm1665, %v1467, 64.0
    %v1682 = vsel %vm1666, %v1468, 64.0
    %v1683 = vsel %vm1667, %v1469, 64.0
    %v1684 = vsel %vm1668, %v1462, 64.0
    %v1685 = vsel %vm1669, %v1463, 64.0
    %v1686 = vsel %vm1670, %v1464, 64.0
    %v1687 = vsel %vm1671, %v1465, 64.0
    %v1688 = vsel %vm1672, %v1466, 64.0
    %v1689 = vsel %vm1673, %v1467, 64.0
    %v1690 = vsel %vm1674, %v1468, 64.0
    %v1691 = vsel %vm1675, %v1469, 64.0
    %v1692 = vmin.f32 %v1676, %v1678
    %v1693 = vmin.f32 %v1677, %v1679
    %v1694 = vmin.f32 %v1692, %v1680
    %v1695 = vmin.f32 %v1693, %v1681
    %v1696 = vmin.f32 %v1694, %v1682
    %v1697 = vmin.f32 %v1695, %v1683
    %v1698 = vmin.f32 %v1696, %v1697
    %v1699 = vrot.slane %v1698, 4
    %v1700 = vmin.f32 %v1698, %v1699
    %v1701 = vrot.slane %v1700, 2
    %v1702 = vmin.f32 %v1700, %v1701
    %v1703 = vrot.slane %v1702, 1
    %v1704 = vmin.f32 %v1702, %v1703
    %v1705 = vmin.f32 %v1684, %v1686
    %v1706 = vmin.f32 %v1685, %v1687
    %v1707 = vmin.f32 %v1705, %v1688
    %v1708 = vmin.f32 %v1706, %v1689
    %v1709 = vmin.f32 %v1707, %v1690
    %v1710 = vmin.f32 %v1708, %v1691
    %v1711 = vmin.f32 %v1709, %v1710
    %v1712 = vrot.slane %v1711, 4
    %v1713 = vmin.f32 %v1711, %v1712
    %v1714 = vrot.slane %v1713, 2
    %v1715 = vmin.f32 %v1713, %v1714
    %v1716 = vrot.slane %v1715, 1
    %v1717 = vmin.f32 %v1715, %v1716
    %vm1718 = vcmp.eq.f32.partialorder %v1462, %v1704
    %vm1719 = vcmp.eq.f32.partialorder %v1463, %v1704
    %vm1720 = vcmp.eq.f32.partialorder %v1464, %v1704
    %vm1721 = vcmp.eq.f32.partialorder %v1465, %v1704
    %vm1722 = vcmp.eq.f32.partialorder %v1466, %v1704
    %vm1723 = vcmp.eq.f32.partialorder %v1467, %v1704
    %vm1724 = vcmp.eq.f32.partialorder %v1468, %v1704
    %vm1725 = vcmp.eq.f32.partialorder %v1469, %v1704
    %vm1726 = vcmp.eq.f32.partialorder %v1462, %v1717
    %vm1727 = vcmp.eq.f32.partialorder %v1463, %v1717
    %vm1728 = vcmp.eq.f32.partialorder %v1464, %v1717
    %vm1729 = vcmp.eq.f32.partialorder %v1465, %v1717
    %vm1730 = vcmp.eq.f32.partialorder %v1466, %v1717
    %vm1731 = vcmp.eq.f32.partialorder %v1467, %v1717
    %vm1732 = vcmp.eq.f32.partialorder %v1468, %v1717
    %vm1733 = vcmp.eq.f32.partialorder %v1469, %v1717
    %v1734 = vsel %vm1718, 1, 0
    %v1735 = vsel %vm1719, 1, 0
    %v1736 = vsel %vm1720, 1, 0
    %v1737 = vsel %vm1721, 1, 0
    %v1738 = vsel %vm1722, 1, 0
    %v1739 = vsel %vm1723, 1, 0
    %v1740 = vsel %vm1724, 1, 0
    %v1741 = vsel %vm1725, 1, 0
    %v1742 = vsel %vm1726, 1, 0
    %v1743 = vsel %vm1727, 1, 0
    %v1744 = vsel %vm1728, 1, 0
    %v1745 = vsel %vm1729, 1, 0
    %v1746 = vsel %vm1730, 1, 0
    %v1747 = vsel %vm1731, 1, 0
    %v1748 = vsel %vm1732, 1, 0
    %v1749 = vsel %vm1733, 1, 0
    %v1750 = vcvt.s32.f32 %v1734
    %v1751 = vcvt.s32.f32 %v1735
    %v1752 = vcvt.s32.f32 %v1736
    %v1753 = vcvt.s32.f32 %v1737
    %v1754 = vcvt.s32.f32 %v1738
    %v1755 = vcvt.s32.f32 %v1739
    %v1756 = vcvt.s32.f32 %v1740
    %v1757 = vcvt.s32.f32 %v1741
    %v1758 = vcvt.s32.f32 %v1742
    %v1759 = vcvt.s32.f32 %v1743
    %v1760 = vcvt.s32.f32 %v1744
    %v1761 = vcvt.s32.f32 %v1745
    %v1762 = vcvt.s32.f32 %v1746
    %v1763 = vcvt.s32.f32 %v1747
    %v1764 = vcvt.s32.f32 %v1748
    %v1765 = vcvt.s32.f32 %v1749
    %v1766 = vmax.f32 %v1602, %v1750
    %v1767 = vmax.f32 %v1603, %v1751
    %v1768 = vmax.f32 %v1604, %v1752
    %v1769 = vmax.f32 %v1605, %v1753
    %v1770 = vmax.f32 %v1606, %v1754
    %v1771 = vmax.f32 %v1607, %v1755
    %v1772 = vmax.f32 %v1608, %v1756
    %v1773 = vmax.f32 %v1609, %v1757
    %v1774 = vmax.f32 %v1610, %v1758
    %v1775 = vmax.f32 %v1611, %v1759
    %v1776 = vmax.f32 %v1612, %v1760
    %v1777 = vmax.f32 %v1613, %v1761
    %v1778 = vmax.f32 %v1614, %v1762
    %v1779 = vmax.f32 %v1615, %v1763
    %v1780 = vmax.f32 %v1616, %v1764
    %v1781 = vmax.f32 %v1617, %v1765
    %v1782 = vsel %vm1718, -inf, %v1618
    %v1783 = vsel %vm1719, -inf, %v1619
    %v1784 = vsel %vm1720, -inf, %v1620
    %v1785 = vsel %vm1721, -inf, %v1621
    %v1786 = vsel %vm1722, -inf, %v1622
    %v1787 = vsel %vm1723, -inf, %v1623
    %v1788 = vsel %vm1724, -inf, %v1624
    %v1789 = vsel %vm1725, -inf, %v1625
    %v1790 = vsel %vm1726, -inf, %v1626
    %v1791 = vsel %vm1727, -inf, %v1627
    %v1792 = vsel %vm1728, -inf, %v1628
    %v1793 = vsel %vm1729, -inf, %v1629
    %v1794 = vsel %vm1730, -inf, %v1630
    %v1795 = vsel %vm1731, -inf, %v1631
    %v1796 = vsel %vm1732, -inf, %v1632
    %v1797 = vsel %vm1733, -inf, %v1633
    %v1798 = vmax.f32 %v1782, %v1784
    %v1799 = vmax.f32 %v1783, %v1785
    %v1800 = vmax.f32 %v1798, %v1786
    %v1801 = vmax.f32 %v1799, %v1787
    %v1802 = vmax.f32 %v1800, %v1788
    %v1803 = vmax.f32 %v1801, %v1789
    %v1804 = vmax.f32 %v1802, %v1803
    %v1805 = vrot.slane %v1804, 4
    %v1806 = vmax.f32 %v1804, %v1805
    %v1807 = vrot.slane %v1806, 2
    %v1808 = vmax.f32 %v1806, %v1807
    %v1809 = vrot.slane %v1808, 1
    %v1810 = vmax.f32 %v1808, %v1809
    %v1811 = vmax.f32 %v1790, %v1792
    %v1812 = vmax.f32 %v1791, %v1793
    %v1813 = vmax.f32 %v1811, %v1794
    %v1814 = vmax.f32 %v1812, %v1795
    %v1815 = vmax.f32 %v1813, %v1796
    %v1816 = vmax.f32 %v1814, %v1797
    %v1817 = vmax.f32 %v1815, %v1816
    %v1818 = vrot.slane %v1817, 4
    %v1819 = vmax.f32 %v1817, %v1818
    %v1820 = vrot.slane %v1819, 2
    %v1821 = vmax.f32 %v1819, %v1820
    %v1822 = vrot.slane %v1821, 1
    %v1823 = vmax.f32 %v1821, %v1822
    %vm1824 = vcmp.ge.f32.partialorder %v1782, %v1810
    %vm1825 = vcmp.ge.f32.partialorder %v1783, %v1810
    %vm1826 = vcmp.ge.f32.partialorder %v1784, %v1810
    %vm1827 = vcmp.ge.f32.partialorder %v1785, %v1810
    %vm1828 = vcmp.ge.f32.partialorder %v1786, %v1810
    %vm1829 = vcmp.ge.f32.partialorder %v1787, %v1810
    %vm1830 = vcmp.ge.f32.partialorder %v1788, %v1810
    %vm1831 = vcmp.ge.f32.partialorder %v1789, %v1810
    %vm1832 = vcmp.ge.f32.partialorder %v1790, %v1823
    %vm1833 = vcmp.ge.f32.partialorder %v1791, %v1823
    %vm1834 = vcmp.ge.f32.partialorder %v1792, %v1823
    %vm1835 = vcmp.ge.f32.partialorder %v1793, %v1823
    %vm1836 = vcmp.ge.f32.partialorder %v1794, %v1823
    %vm1837 = vcmp.ge.f32.partialorder %v1795, %v1823
    %vm1838 = vcmp.ge.f32.partialorder %v1796, %v1823
    %vm1839 = vcmp.ge.f32.partialorder %v1797, %v1823
    %v1840 = vsel %vm1824, %v1462, 64.0
    %v1841 = vsel %vm1825, %v1463, 64.0
    %v1842 = vsel %vm1826, %v1464, 64.0
    %v1843 = vsel %vm1827, %v1465, 64.0
    %v1844 = vsel %vm1828, %v1466, 64.0
    %v1845 = vsel %vm1829, %v1467, 64.0
    %v1846 = vsel %vm1830, %v1468, 64.0
    %v1847 = vsel %vm1831, %v1469, 64.0
    %v1848 = vsel %vm1832, %v1462, 64.0
    %v1849 = vsel %vm1833, %v1463, 64.0
    %v1850 = vsel %vm1834, %v1464, 64.0
    %v1851 = vsel %vm1835, %v1465, 64.0
    %v1852 = vsel %vm1836, %v1466, 64.0
    %v1853 = vsel %vm1837, %v1467, 64.0
    %v1854 = vsel %vm1838, %v1468, 64.0
    %v1855 = vsel %vm1839, %v1469, 64.0
    %v1856 = vmin.f32 %v1840, %v1842
    %v1857 = vmin.f32 %v1841, %v1843
    %v1858 = vmin.f32 %v1856, %v1844
    %v1859 = vmin.f32 %v1857, %v1845
    %v1860 = vmin.f32 %v1858, %v1846
    %v1861 = vmin.f32 %v1859, %v1847
    %v1862 = vmin.f32 %v1860, %v1861
    %v1863 = vrot.slane %v1862, 4
    %v1864 = vmin.f32 %v1862, %v1863
    %v1865 = vrot.slane %v1864, 2
    %v1866 = vmin.f32 %v1864, %v1865
    %v1867 = vrot.slane %v1866, 1
    %v1868 = vmin.f32 %v1866, %v1867
    %v1869 = vmin.f32 %v1848, %v1850
    %v1870 = vmin.f32 %v1849, %v1851
    %v1871 = vmin.f32 %v1869, %v1852
    %v1872 = vmin.f32 %v1870, %v1853
    %v1873 = vmin.f32 %v1871, %v1854
    %v1874 = vmin.f32 %v1872, %v1855
    %v1875 = vmin.f32 %v1873, %v1874
    %v1876 = vrot.slane %v1875, 4
    %v1877 = vmin.f32 %v1875, %v1876
    %v1878 = vrot.slane %v1877, 2
    %v1879 = vmin.f32 %v1877, %v1878
    %v1880 = vrot.slane %v1879, 1
    %v1881 = vmin.f32 %v1879, %v1880
    %vm1882 = vcmp.eq.f32.partialorder %v1462, %v1868
    %vm1883 = vcmp.eq.f32.partialorder %v1463, %v1868
    %vm1884 = vcmp.eq.f32.partialorder %v1464, %v1868
    %vm1885 = vcmp.eq.f32.partialorder %v1465, %v1868
    %vm1886 = vcmp.eq.f32.partialorder %v1466, %v1868
    %vm1887 = vcmp.eq.f32.partialorder %v1467, %v1868
    %vm1888 = vcmp.eq.f32.partialorder %v1468, %v1868
    %vm1889 = vcmp.eq.f32.partialorder %v1469, %v1868
    %vm1890 = vcmp.eq.f32.partialorder %v1462, %v1881
    %vm1891 = vcmp.eq.f32.partialorder %v1463, %v1881
    %vm1892 = vcmp.eq.f32.partialorder %v1464, %v1881
    %vm1893 = vcmp.eq.f32.partialorder %v1465, %v1881
    %vm1894 = vcmp.eq.f32.partialorder %v1466, %v1881
    %vm1895 = vcmp.eq.f32.partialorder %v1467, %v1881
    %vm1896 = vcmp.eq.f32.partialorder %v1468, %v1881
    %vm1897 = vcmp.eq.f32.partialorder %v1469, %v1881
    %v1898 = vsel %vm1882, 1, 0
    %v1899 = vsel %vm1883, 1, 0
    %v1900 = vsel %vm1884, 1, 0
    %v1901 = vsel %vm1885, 1, 0
    %v1902 = vsel %vm1886, 1, 0
    %v1903 = vsel %vm1887, 1, 0
    %v1904 = vsel %vm1888, 1, 0
    %v1905 = vsel %vm1889, 1, 0
    %v1906 = vsel %vm1890, 1, 0
    %v1907 = vsel %vm1891, 1, 0
    %v1908 = vsel %vm1892, 1, 0
    %v1909 = vsel %vm1893, 1, 0
    %v1910 = vsel %vm1894, 1, 0
    %v1911 = vsel %vm1895, 1, 0
    %v1912 = vsel %vm1896, 1, 0
    %v1913 = vsel %vm1897, 1, 0
    %v1914 = vcvt.s32.f32 %v1898
    %v1915 = vcvt.s32.f32 %v1899
    %v1916 = vcvt.s32.f32 %v1900
    %v1917 = vcvt.s32.f32 %v1901
    %v1918 = vcvt.s32.f32 %v1902
    %v1919 = vcvt.s32.f32 %v1903
    %v1920 = vcvt.s32.f32 %v1904
    %v1921 = vcvt.s32.f32 %v1905
    %v1922 = vcvt.s32.f32 %v1906
    %v1923 = vcvt.s32.f32 %v1907
    %v1924 = vcvt.s32.f32 %v1908
    %v1925 = vcvt.s32.f32 %v1909
    %v1926 = vcvt.s32.f32 %v1910
    %v1927 = vcvt.s32.f32 %v1911
    %v1928 = vcvt.s32.f32 %v1912
    %v1929 = vcvt.s32.f32 %v1913
    %v1930 = vmax.f32 %v1766, %v1914
    %v1931 = vmax.f32 %v1767, %v1915
    %v1932 = vmax.f32 %v1768, %v1916
    %v1933 = vmax.f32 %v1769, %v1917
    %v1934 = vmax.f32 %v1770, %v1918
    %v1935 = vmax.f32 %v1771, %v1919
    %v1936 = vmax.f32 %v1772, %v1920
    %v1937 = vmax.f32 %v1773, %v1921
    %v1938 = vmax.f32 %v1774, %v1922
    %v1939 = vmax.f32 %v1775, %v1923
    %v1940 = vmax.f32 %v1776, %v1924
    %v1941 = vmax.f32 %v1777, %v1925
    %v1942 = vmax.f32 %v1778, %v1926
    %v1943 = vmax.f32 %v1779, %v1927
    %v1944 = vmax.f32 %v1780, %v1928
    %v1945 = vmax.f32 %v1781, %v1929
    %v1946 = vsel %vm1882, -inf, %v1782
    %v1947 = vsel %vm1883, -inf, %v1783
    %v1948 = vsel %vm1884, -inf, %v1784
    %v1949 = vsel %vm1885, -inf, %v1785
    %v1950 = vsel %vm1886, -inf, %v1786
    %v1951 = vsel %vm1887, -inf, %v1787
    %v1952 = vsel %vm1888, -inf, %v1788
    %v1953 = vsel %vm1889, -inf, %v1789
    %v1954 = vsel %vm1890, -inf, %v1790
    %v1955 = vsel %vm1891, -inf, %v1791
    %v1956 = vsel %vm1892, -inf, %v1792
    %v1957 = vsel %vm1893, -inf, %v1793
    %v1958 = vsel %vm1894, -inf, %v1794
    %v1959 = vsel %vm1895, -inf, %v1795
    %v1960 = vsel %vm1896, -inf, %v1796
    %v1961 = vsel %vm1897, -inf, %v1797
    %v1962 = vmax.f32 %v1946, %v1948
    %v1963 = vmax.f32 %v1947, %v1949
    %v1964 = vmax.f32 %v1962, %v1950
    %v1965 = vmax.f32 %v1963, %v1951
    %v1966 = vmax.f32 %v1964, %v1952
    %v1967 = vmax.f32 %v1965, %v1953
    %v1968 = vmax.f32 %v1966, %v1967
    %v1969 = vrot.slane %v1968, 4
    %v1970 = vmax.f32 %v1968, %v1969
    %v1971 = vrot.slane %v1970, 2
    %v1972 = vmax.f32 %v1970, %v1971
    %v1973 = vrot.slane %v1972, 1
    %v1974 = vmax.f32 %v1972, %v1973
    %v1975 = vmax.f32 %v1954, %v1956
    %v1976 = vmax.f32 %v1955, %v1957
    %v1977 = vmax.f32 %v1975, %v1958
    %v1978 = vmax.f32 %v1976, %v1959
    %v1979 = vmax.f32 %v1977, %v1960
    %v1980 = vmax.f32 %v1978, %v1961
    %v1981 = vmax.f32 %v1979, %v1980
    %v1982 = vrot.slane %v1981, 4
    %v1983 = vmax.f32 %v1981, %v1982
    %v1984 = vrot.slane %v1983, 2
    %v1985 = vmax.f32 %v1983, %v1984
    %v1986 = vrot.slane %v1985, 1
    %v1987 = vmax.f32 %v1985, %v1986
    %vm1988 = vcmp.ge.f32.partialorder %v1946, %v1974
    %vm1989 = vcmp.ge.f32.partialorder %v1947, %v1974
    %vm1990 = vcmp.ge.f32.partialorder %v1948, %v1974
    %vm1991 = vcmp.ge.f32.partialorder %v1949, %v1974
    %vm1992 = vcmp.ge.f32.partialorder %v1950, %v1974
    %vm1993 = vcmp.ge.f32.partialorder %v1951, %v1974
    %vm1994 = vcmp.ge.f32.partialorder %v1952, %v1974
    %vm1995 = vcmp.ge.f32.partialorder %v1953, %v1974
    %vm1996 = vcmp.ge.f32.partialorder %v1954, %v1987
    %vm1997 = vcmp.ge.f32.partialorder %v1955, %v1987
    %vm1998 = vcmp.ge.f32.partialorder %v1956, %v1987
    %vm1999 = vcmp.ge.f32.partialorder %v1957, %v1987
    %vm2000 = vcmp.ge.f32.partialorder %v1958, %v1987
    %vm2001 = vcmp.ge.f32.partialorder %v1959, %v1987
    %vm2002 = vcmp.ge.f32.partialorder %v1960, %v1987
    %vm2003 = vcmp.ge.f32.partialorder %v1961, %v1987
    %v2004 = vsel %vm1988, %v1462, 64.0
    %v2005 = vsel %vm1989, %v1463, 64.0
    %v2006 = vsel %vm1990, %v1464, 64.0
    %v2007 = vsel %vm1991, %v1465, 64.0
    %v2008 = vsel %vm1992, %v1466, 64.0
    %v2009 = vsel %vm1993, %v1467, 64.0
    %v2010 = vsel %vm1994, %v1468, 64.0
    %v2011 = vsel %vm1995, %v1469, 64.0
    %v2012 = vsel %vm1996, %v1462, 64.0
    %v2013 = vsel %vm1997, %v1463, 64.0
    %v2014 = vsel %vm1998, %v1464, 64.0
    %v2015 = vsel %vm1999, %v1465, 64.0
    %v2016 = vsel %vm2000, %v1466, 64.0
    %v2017 = vsel %vm2001, %v1467, 64.0
    %v2018 = vsel %vm2002, %v1468, 64.0
    %v2019 = vsel %vm2003, %v1469, 64.0
    %v2020 = vmin.f32 %v2004, %v2006
    %v2021 = vmin.f32 %v2005, %v2007
    %v2022 = vmin.f32 %v2020, %v2008
    %v2023 = vmin.f32 %v2021, %v2009
    %v2024 = vmin.f32 %v2022, %v2010
    %v2025 = vmin.f32 %v2023, %v2011
    %v2026 = vmin.f32 %v2024, %v2025
    %v2027 = vrot.slane %v2026, 4
    %v2028 = vmin.f32 %v2026, %v2027
    %v2029 = vrot.slane %v2028, 2
    %v2030 = vmin.f32 %v2028, %v2029
    %v2031 = vrot.slane %v2030, 1
    %v2032 = vmin.f32 %v2030, %v2031
    %v2033 = vmin.f32 %v2012, %v2014
    %v2034 = vmin.f32 %v2013, %v2015
    %v2035 = vmin.f32 %v2033, %v2016
    %v2036 = vmin.f32 %v2034, %v2017
    %v2037 = vmin.f32 %v2035, %v2018
    %v2038 = vmin.f32 %v2036, %v2019
    %v2039 = vmin.f32 %v2037, %v2038
    %v2040 = vrot.slane %v2039, 4
    %v2041 = vmin.f32 %v2039, %v2040
    %v2042 = vrot.slane %v2041, 2
    %v2043 = vmin.f32 %v2041, %v2042
    %v2044 = vrot.slane %v2043, 1
    %v2045 = vmin.f32 %v2043, %v2044
    %vm2046 = vcmp.eq.f32.partialorder %v1462, %v2032
    %vm2047 = vcmp.eq.f32.partialorder %v1463, %v2032
    %vm2048 = vcmp.eq.f32.partialorder %v1464, %v2032
    %vm2049 = vcmp.eq.f32.partialorder %v1465, %v2032
    %vm2050 = vcmp.eq.f32.partialorder %v1466, %v2032
    %vm2051 = vcmp.eq.f32.partialorder %v1467, %v2032
    %vm2052 = vcmp.eq.f32.partialorder %v1468, %v2032
    %vm2053 = vcmp.eq.f32.partialorder %v1469, %v2032
    %vm2054 = vcmp.eq.f32.partialorder %v1462, %v2045
    %vm2055 = vcmp.eq.f32.partialorder %v1463, %v2045
    %vm2056 = vcmp.eq.f32.partialorder %v1464, %v2045
    %vm2057 = vcmp.eq.f32.partialorder %v1465, %v2045
    %vm2058 = vcmp.eq.f32.partialorder %v1466, %v2045
    %vm2059 = vcmp.eq.f32.partialorder %v1467, %v2045
    %vm2060 = vcmp.eq.f32.partialorder %v1468, %v2045
    %vm2061 = vcmp.eq.f32.partialorder %v1469, %v2045
    %v2062 = vsel %vm2046, 1, 0
    %v2063 = vsel %vm2047, 1, 0
    %v2064 = vsel %vm2048, 1, 0
    %v2065 = vsel %vm2049, 1, 0
    %v2066 = vsel %vm2050, 1, 0
    %v2067 = vsel %vm2051, 1, 0
    %v2068 = vsel %vm2052, 1, 0
    %v2069 = vsel %vm2053, 1, 0
    %v2070 = vsel %vm2054, 1, 0
    %v2071 = vsel %vm2055, 1, 0
    %v2072 = vsel %vm2056, 1, 0
    %v2073 = vsel %vm2057, 1, 0
    %v2074 = vsel %vm2058, 1, 0
    %v2075 = vsel %vm2059, 1, 0
    %v2076 = vsel %vm2060, 1, 0
    %v2077 = vsel %vm2061, 1, 0
    %v2078 = vcvt.s32.f32 %v2062
    %v2079 = vcvt.s32.f32 %v2063
    %v2080 = vcvt.s32.f32 %v2064
    %v2081 = vcvt.s32.f32 %v2065
    %v2082 = vcvt.s32.f32 %v2066
    %v2083 = vcvt.s32.f32 %v2067
    %v2084 = vcvt.s32.f32 %v2068
    %v2085 = vcvt.s32.f32 %v2069
    %v2086 = vcvt.s32.f32 %v2070
    %v2087 = vcvt.s32.f32 %v2071
    %v2088 = vcvt.s32.f32 %v2072
    %v2089 = vcvt.s32.f32 %v2073
    %v2090 = vcvt.s32.f32 %v2074
    %v2091 = vcvt.s32.f32 %v2075
    %v2092 = vcvt.s32.f32 %v2076
    %v2093 = vcvt.s32.f32 %v2077
    %v2094 = vmax.f32 %v1930, %v2078
    %v2095 = vmax.f32 %v1931, %v2079
    %v2096 = vmax.f32 %v1932, %v2080
    %v2097 = vmax.f32 %v1933, %v2081
    %v2098 = vmax.f32 %v1934, %v2082
    %v2099 = vmax.f32 %v1935, %v2083
    %v2100 = vmax.f32 %v1936, %v2084
    %v2101 = vmax.f32 %v1937, %v2085
    %v2102 = vmax.f32 %v1938, %v2086
    %v2103 = vmax.f32 %v1939, %v2087
    %v2104 = vmax.f32 %v1940, %v2088
    %v2105 = vmax.f32 %v1941, %v2089
    %v2106 = vmax.f32 %v1942, %v2090
    %v2107 = vmax.f32 %v1943, %v2091
    %v2108 = vmax.f32 %v1944, %v2092
    %v2109 = vmax.f32 %v1945, %v2093
    %v2110 = vsel %vm2046, -inf, %v1946
    %v2111 = vsel %vm2047, -inf, %v1947
    %v2112 = vsel %vm2048, -inf, %v1948
    %v2113 = vsel %vm2049, -inf, %v1949
    %v2114 = vsel %vm2050, -inf, %v1950
    %v2115 = vsel %vm2051, -inf, %v1951
    %v2116 = vsel %vm2052, -inf, %v1952
    %v2117 = vsel %vm2053, -inf, %v1953
    %v2118 = vsel %vm2054, -inf, %v1954
    %v2119 = vsel %vm2055, -inf, %v1955
    %v2120 = vsel %vm2056, -inf, %v1956
    %v2121 = vsel %vm2057, -inf, %v1957
    %v2122 = vsel %vm2058, -inf, %v1958
    %v2123 = vsel %vm2059, -inf, %v1959
    %v2124 = vsel %vm2060, -inf, %v1960
    %v2125 = vsel %vm2061, -inf, %v1961
    %v2126 = vmax.f32 %v2110, %v2112
    %v2127 = vmax.f32 %v2111, %v2113
    %v2128 = vmax.f32 %v2126, %v2114
    %v2129 = vmax.f32 %v2127, %v2115
    %v2130 = vmax.f32 %v2128, %v2116
    %v2131 = vmax.f32 %v2129, %v2117
    %v2132 = vmax.f32 %v2130, %v2131
    %v2133 = vrot.slane %v2132, 4
    %v2134 = vmax.f32 %v2132, %v2133
    %v2135 = vrot.slane %v2134, 2
    %v2136 = vmax.f32 %v2134, %v2135
    %v2137 = vrot.slane %v2136, 1
    %v2138 = vmax.f32 %v2136, %v2137
    %v2139 = vmax.f32 %v2118, %v2120
    %v2140 = vmax.f32 %v2119, %v2121
    %v2141 = vmax.f32 %v2139, %v2122
    %v2142 = vmax.f32 %v2140, %v2123
    %v2143 = vmax.f32 %v2141, %v2124
    %v2144 = vmax.f32 %v2142, %v2125
    %v2145 = vmax.f32 %v2143, %v2144
    %v2146 = vrot.slane %v2145, 4
    %v2147 = vmax.f32 %v2145, %v2146
    %v2148 = vrot.slane %v2147, 2
    %v2149 = vmax.f32 %v2147, %v2148
    %v2150 = vrot.slane %v2149, 1
    %v2151 = vmax.f32 %v2149, %v2150
    %vm2152 = vcmp.ge.f32.partialorder %v2110, %v2138
    %vm2153 = vcmp.ge.f32.partialorder %v2111, %v2138
    %vm2154 = vcmp.ge.f32.partialorder %v2112, %v2138
    %vm2155 = vcmp.ge.f32.partialorder %v2113, %v2138
    %vm2156 = vcmp.ge.f32.partialorder %v2114, %v2138
    %vm2157 = vcmp.ge.f32.partialorder %v2115, %v2138
    %vm2158 = vcmp.ge.f32.partialorder %v2116, %v2138
    %vm2159 = vcmp.ge.f32.partialorder %v2117, %v2138
    %vm2160 = vcmp.ge.f32.partialorder %v2118, %v2151
    %vm2161 = vcmp.ge.f32.partialorder %v2119, %v2151
    %vm2162 = vcmp.ge.f32.partialorder %v2120, %v2151
    %vm2163 = vcmp.ge.f32.partialorder %v2121, %v2151
    %vm2164 = vcmp.ge.f32.partialorder %v2122, %v2151
    %vm2165 = vcmp.ge.f32.partialorder %v2123, %v2151
    %vm2166 = vcmp.ge.f32.partialorder %v2124, %v2151
    %vm2167 = vcmp.ge.f32.partialorder %v2125, %v2151
    %v2168 = vsel %vm2152, %v1462, 64.0
    %v2169 = vsel %vm2153, %v1463, 64.0
    %v2170 = vsel %vm2154, %v1464, 64.0
    %v2171 = vsel %vm2155, %v1465, 64.0
    %v2172 = vsel %vm2156, %v1466, 64.0
    %v2173 = vsel %vm2157, %v1467, 64.0
    %v2174 = vsel %vm2158, %v1468, 64.0
    %v2175 = vsel %vm2159, %v1469, 64.0
    %v2176 = vsel %vm2160, %v1462, 64.0
    %v2177 = vsel %vm2161, %v1463, 64.0
    %v2178 = vsel %vm2162, %v1464, 64.0
    %v2179 = vsel %vm2163, %v1465, 64.0
    %v2180 = vsel %vm2164, %v1466, 64.0
    %v2181 = vsel %vm2165, %v1467, 64.0
    %v2182 = vsel %vm2166, %v1468, 64.0
    %v2183 = vsel %vm2167, %v1469, 64.0
    %v2184 = vmin.f32 %v2168, %v2170
    %v2185 = vmin.f32 %v2169, %v2171
    %v2186 = vmin.f32 %v2184, %v2172
    %v2187 = vmin.f32 %v2185, %v2173
    %v2188 = vmin.f32 %v2186, %v2174
    %v2189 = vmin.f32 %v2187, %v2175
    %v2190 = vmin.f32 %v2188, %v2189
    %v2191 = vrot.slane %v2190, 4
    %v2192 = vmin.f32 %v2190, %v2191
    %v2193 = vrot.slane %v2192, 2
    %v2194 = vmin.f32 %v2192, %v2193
    %v2195 = vrot.slane %v2194, 1
    %v2196 = vmin.f32 %v2194, %v2195
    %v2197 = vmin.f32 %v2176, %v2178
    %v2198 = vmin.f32 %v2177, %v2179
    %v2199 = vmin.f32 %v2197, %v2180
    %v2200 = vmin.f32 %v2198, %v2181
    %v2201 = vmin.f32 %v2199, %v2182
    %v2202 = vmin.f32 %v2200, %v2183
    %v2203 = vmin.f32 %v2201, %v2202
    %v2204 = vrot.slane %v2203, 4
    %v2205 = vmin.f32 %v2203, %v2204
    %v2206 = vrot.slane %v2205, 2
    %v2207 = vmin.f32 %v2205, %v2206
    %v2208 = vrot.slane %v2207, 1
    %v2209 = vmin.f32 %v2207, %v2208
    %vm2210 = vcmp.eq.f32.partialorder %v1462, %v2196
    %vm2211 = vcmp.eq.f32.partialorder %v1463, %v2196
    %vm2212 = vcmp.eq.f32.partialorder %v1464, %v2196
    %vm2213 = vcmp.eq.f32.partialorder %v1465, %v2196
    %vm2214 = vcmp.eq.f32.partialorder %v1466, %v2196
    %vm2215 = vcmp.eq.f32.partialorder %v1467, %v2196
    %vm2216 = vcmp.eq.f32.partialorder %v1468, %v2196
    %vm2217 = vcmp.eq.f32.partialorder %v1469, %v2196
    %vm2218 = vcmp.eq.f32.partialorder %v1462, %v2209
    %vm2219 = vcmp.eq.f32.partialorder %v1463, %v2209
    %vm2220 = vcmp.eq.f32.partialorder %v1464, %v2209
    %vm2221 = vcmp.eq.f32.partialorder %v1465, %v2209
    %vm2222 = vcmp.eq.f32.partialorder %v1466, %v2209
    %vm2223 = vcmp.eq.f32.partialorder %v1467, %v2209
    %vm2224 = vcmp.eq.f32.partialorder %v1468, %v2209
    %vm2225 = vcmp.eq.f32.partialorder %v1469, %v2209
    %v2226 = vsel %vm2210, 1, 0
    %v2227 = vsel %vm2211, 1, 0
    %v2228 = vsel %vm2212, 1, 0
    %v2229 = vsel %vm2213, 1, 0
    %v2230 = vsel %vm2214, 1, 0
    %v2231 = vsel %vm2215, 1, 0
    %v2232 = vsel %vm2216, 1, 0
    %v2233 = vsel %vm2217, 1, 0
    %v2234 = vsel %vm2218, 1, 0
    %v2235 = vsel %vm2219, 1, 0
    %v2236 = vsel %vm2220, 1, 0
    %v2237 = vsel %vm2221, 1, 0
    %v2238 = vsel %vm2222, 1, 0
    %v2239 = vsel %vm2223, 1, 0
    %v2240 = vsel %vm2224, 1, 0
    %v2241 = vsel %vm2225, 1, 0
    %v2242 = vcvt.s32.f32 %v2226
    %v2243 = vcvt.s32.f32 %v2227
    %v2244 = vcvt.s32.f32 %v2228
    %v2245 = vcvt.s32.f32 %v2229
    %v2246 = vcvt.s32.f32 %v2230
    %v2247 = vcvt.s32.f32 %v2231
    %v2248 = vcvt.s32.f32 %v2232
    %v2249 = vcvt.s32.f32 %v2233
    %v2250 = vcvt.s32.f32 %v2234
    %v2251 = vcvt.s32.f32 %v2235
    %v2252 = vcvt.s32.f32 %v2236
    %v2253 = vcvt.s32.f32 %v2237
    %v2254 = vcvt.s32.f32 %v2238
    %v2255 = vcvt.s32.f32 %v2239
    %v2256 = vcvt.s32.f32 %v2240
    %v2257 = vcvt.s32.f32 %v2241
    %v2258 = vmax.f32 %v2094, %v2242
    %v2259 = vmax.f32 %v2095, %v2243
    %v2260 = vmax.f32 %v2096, %v2244
    %v2261 = vmax.f32 %v2097, %v2245
    %v2262 = vmax.f32 %v2098, %v2246
    %v2263 = vmax.f32 %v2099, %v2247
    %v2264 = vmax.f32 %v2100, %v2248
    %v2265 = vmax.f32 %v2101, %v2249
    %v2266 = vmax.f32 %v2102, %v2250
    %v2267 = vmax.f32 %v2103, %v2251
    %v2268 = vmax.f32 %v2104, %v2252
    %v2269 = vmax.f32 %v2105, %v2253
    %v2270 = vmax.f32 %v2106, %v2254
    %v2271 = vmax.f32 %v2107, %v2255
    %v2272 = vmax.f32 %v2108, %v2256
    %v2273 = vmax.f32 %v2109, %v2257
    %v2274 = vsel %vm2210, -inf, %v2110
    %v2275 = vsel %vm2211, -inf, %v2111
    %v2276 = vsel %vm2212, -inf, %v2112
    %v2277 = vsel %vm2213, -inf, %v2113
    %v2278 = vsel %vm2214, -inf, %v2114
    %v2279 = vsel %vm2215, -inf, %v2115
    %v2280 = vsel %vm2216, -inf, %v2116
    %v2281 = vsel %vm2217, -inf, %v2117
    %v2282 = vsel %vm2218, -inf, %v2118
    %v2283 = vsel %vm2219, -inf, %v2119
    %v2284 = vsel %vm2220, -inf, %v2120
    %v2285 = vsel %vm2221, -inf, %v2121
    %v2286 = vsel %vm2222, -inf, %v2122
    %v2287 = vsel %vm2223, -inf, %v2123
    %v2288 = vsel %vm2224, -inf, %v2124
    %v2289 = vsel %vm2225, -inf, %v2125
    %v2290 = vmax.f32 %v2274, %v2276
    %v2291 = vmax.f32 %v2275, %v2277
    %v2292 = vmax.f32 %v2290, %v2278
    %v2293 = vmax.f32 %v2291, %v2279
    %v2294 = vmax.f32 %v2292, %v2280
    %v2295 = vmax.f32 %v2293, %v2281
    %v2296 = vmax.f32 %v2294, %v2295
    %v2297 = vrot.slane %v2296, 4
    %v2298 = vmax.f32 %v2296, %v2297
    %v2299 = vrot.slane %v2298, 2
    %v2300 = vmax.f32 %v2298, %v2299
    %v2301 = vrot.slane %v2300, 1
    %v2302 = vmax.f32 %v2300, %v2301
    %v2303 = vmax.f32 %v2282, %v2284
    %v2304 = vmax.f32 %v2283, %v2285
    %v2305 = vmax.f32 %v2303, %v2286
    %v2306 = vmax.f32 %v2304, %v2287
    %v2307 = vmax.f32 %v2305, %v2288
    %v2308 = vmax.f32 %v2306, %v2289
    %v2309 = vmax.f32 %v2307, %v2308
    %v2310 = vrot.slane %v2309, 4
    %v2311 = vmax.f32 %v2309, %v2310
    %v2312 = vrot.slane %v2311, 2
    %v2313 = vmax.f32 %v2311, %v2312
    %v2314 = vrot.slane %v2313, 1
    %v2315 = vmax.f32 %v2313, %v2314
    %vm2316 = vcmp.ge.f32.partialorder %v2274, %v2302
    %vm2317 = vcmp.ge.f32.partialorder %v2275, %v2302
    %vm2318 = vcmp.ge.f32.partialorder %v2276, %v2302
    %vm2319 = vcmp.ge.f32.partialorder %v2277, %v2302
    %vm2320 = vcmp.ge.f32.partialorder %v2278, %v2302
    %vm2321 = vcmp.ge.f32.partialorder %v2279, %v2302
    %vm2322 = vcmp.ge.f32.partialorder %v2280, %v2302
    %vm2323 = vcmp.ge.f32.partialorder %v2281, %v2302
    %vm2324 = vcmp.ge.f32.partialorder %v2282, %v2315
    %vm2325 = vcmp.ge.f32.partialorder %v2283, %v2315
    %vm2326 = vcmp.ge.f32.partialorder %v2284, %v2315
    %vm2327 = vcmp.ge.f32.partialorder %v2285, %v2315
    %vm2328 = vcmp.ge.f32.partialorder %v2286, %v2315
    %vm2329 = vcmp.ge.f32.partialorder %v2287, %v2315
    %vm2330 = vcmp.ge.f32.partialorder %v2288, %v2315
    %vm2331 = vcmp.ge.f32.partialorder %v2289, %v2315
    %v2332 = vsel %vm2316, %v1462, 64.0
    %v2333 = vsel %vm2317, %v1463, 64.0
    %v2334 = vsel %vm2318, %v1464, 64.0
    %v2335 = vsel %vm2319, %v1465, 64.0
    %v2336 = vsel %vm2320, %v1466, 64.0
    %v2337 = vsel %vm2321, %v1467, 64.0
    %v2338 = vsel %vm2322, %v1468, 64.0
    %v2339 = vsel %vm2323, %v1469, 64.0
    %v2340 = vsel %vm2324, %v1462, 64.0
    %v2341 = vsel %vm2325, %v1463, 64.0
    %v2342 = vsel %vm2326, %v1464, 64.0
    %v2343 = vsel %vm2327, %v1465, 64.0
    %v2344 = vsel %vm2328, %v1466, 64.0
    %v2345 = vsel %vm2329, %v1467, 64.0
    %v2346 = vsel %vm2330, %v1468, 64.0
    %v2347 = vsel %vm2331, %v1469, 64.0
    %v2348 = vmin.f32 %v2332, %v2334
    %v2349 = vmin.f32 %v2333, %v2335
    %v2350 = vmin.f32 %v2348, %v2336
    %v2351 = vmin.f32 %v2349, %v2337
    %v2352 = vmin.f32 %v2350, %v2338
    %v2353 = vmin.f32 %v2351, %v2339
    %v2354 = vmin.f32 %v2352, %v2353
    %v2355 = vrot.slane %v2354, 4
    %v2356 = vmin.f32 %v2354, %v2355
    %v2357 = vrot.slane %v2356, 2
    %v2358 = vmin.f32 %v2356, %v2357
    %v2359 = vrot.slane %v2358, 1
    %v2360 = vmin.f32 %v2358, %v2359
    %v2361 = vmin.f32 %v2340, %v2342
    %v2362 = vmin.f32 %v2341, %v2343
    %v2363 = vmin.f32 %v2361, %v2344
    %v2364 = vmin.f32 %v2362, %v2345
    %v2365 = vmin.f32 %v2363, %v2346
    %v2366 = vmin.f32 %v2364, %v2347
    %v2367 = vmin.f32 %v2365, %v2366
    %v2368 = vrot.slane %v2367, 4
    %v2369 = vmin.f32 %v2367, %v2368
    %v2370 = vrot.slane %v2369, 2
    %v2371 = vmin.f32 %v2369, %v2370
    %v2372 = vrot.slane %v2371, 1
    %v2373 = vmin.f32 %v2371, %v2372
    %vm2374 = vcmp.eq.f32.partialorder %v1462, %v2360
    %vm2375 = vcmp.eq.f32.partialorder %v1463, %v2360
    %vm2376 = vcmp.eq.f32.partialorder %v1464, %v2360
    %vm2377 = vcmp.eq.f32.partialorder %v1465, %v2360
    %vm2378 = vcmp.eq.f32.partialorder %v1466, %v2360
    %vm2379 = vcmp.eq.f32.partialorder %v1467, %v2360
    %vm2380 = vcmp.eq.f32.partialorder %v1468, %v2360
    %vm2381 = vcmp.eq.f32.partialorder %v1469, %v2360
    %vm2382 = vcmp.eq.f32.partialorder %v1462, %v2373
    %vm2383 = vcmp.eq.f32.partialorder %v1463, %v2373
    %vm2384 = vcmp.eq.f32.partialorder %v1464, %v2373
    %vm2385 = vcmp.eq.f32.partialorder %v1465, %v2373
    %vm2386 = vcmp.eq.f32.partialorder %v1466, %v2373
    %vm2387 = vcmp.eq.f32.partialorder %v1467, %v2373
    %vm2388 = vcmp.eq.f32.partialorder %v1468, %v2373
    %vm2389 = vcmp.eq.f32.partialorder %v1469, %v2373
    %v2390 = vsel %vm2374, 1, 0
    %v2391 = vsel %vm2375, 1, 0
    %v2392 = vsel %vm2376, 1, 0
    %v2393 = vsel %vm2377, 1, 0
    %v2394 = vsel %vm2378, 1, 0
    %v2395 = vsel %vm2379, 1, 0
    %v2396 = vsel %vm2380, 1, 0
    %v2397 = vsel %vm2381, 1, 0
    %v2398 = vsel %vm2382, 1, 0
    %v2399 = vsel %vm2383, 1, 0
    %v2400 = vsel %vm2384, 1, 0
    %v2401 = vsel %vm2385, 1, 0
    %v2402 = vsel %vm2386, 1, 0
    %v2403 = vsel %vm2387, 1, 0
    %v2404 = vsel %vm2388, 1, 0
    %v2405 = vsel %vm2389, 1, 0
    %v2406 = vcvt.s32.f32 %v2390
    %v2407 = vcvt.s32.f32 %v2391
    %v2408 = vcvt.s32.f32 %v2392
    %v2409 = vcvt.s32.f32 %v2393
    %v2410 = vcvt.s32.f32 %v2394
    %v2411 = vcvt.s32.f32 %v2395
    %v2412 = vcvt.s32.f32 %v2396
    %v2413 = vcvt.s32.f32 %v2397
    %v2414 = vcvt.s32.f32 %v2398
    %v2415 = vcvt.s32.f32 %v2399
    %v2416 = vcvt.s32.f32 %v2400
    %v2417 = vcvt.s32.f32 %v2401
    %v2418 = vcvt.s32.f32 %v2402
    %v2419 = vcvt.s32.f32 %v2403
    %v2420 = vcvt.s32.f32 %v2404
    %v2421 = vcvt.s32.f32 %v2405
    %v2422 = vmax.f32 %v2258, %v2406
    %v2423 = vmax.f32 %v2259, %v2407
    %v2424 = vmax.f32 %v2260, %v2408
    %v2425 = vmax.f32 %v2261, %v2409
    %v2426 = vmax.f32 %v2262, %v2410
    %v2427 = vmax.f32 %v2263, %v2411
    %v2428 = vmax.f32 %v2264, %v2412
    %v2429 = vmax.f32 %v2265, %v2413
    %v2430 = vmax.f32 %v2266, %v2414
    %v2431 = vmax.f32 %v2267, %v2415
    %v2432 = vmax.f32 %v2268, %v2416
    %v2433 = vmax.f32 %v2269, %v2417
    %v2434 = vmax.f32 %v2270, %v2418
    %v2435 = vmax.f32 %v2271, %v2419
    %v2436 = vmax.f32 %v2272, %v2420
    %v2437 = vmax.f32 %v2273, %v2421
    %v2438 = vsel %vm2374, -inf, %v2274
    %v2439 = vsel %vm2375, -inf, %v2275
    %v2440 = vsel %vm2376, -inf, %v2276
    %v2441 = vsel %vm2377, -inf, %v2277
    %v2442 = vsel %vm2378, -inf, %v2278
    %v2443 = vsel %vm2379, -inf, %v2279
    %v2444 = vsel %vm2380, -inf, %v2280
    %v2445 = vsel %vm2381, -inf, %v2281
    %v2446 = vsel %vm2382, -inf, %v2282
    %v2447 = vsel %vm2383, -inf, %v2283
    %v2448 = vsel %vm2384, -inf, %v2284
    %v2449 = vsel %vm2385, -inf, %v2285
    %v2450 = vsel %vm2386, -inf, %v2286
    %v2451 = vsel %vm2387, -inf, %v2287
    %v2452 = vsel %vm2388, -inf, %v2288
    %v2453 = vsel %vm2389, -inf, %v2289
    %v2454 = vmax.f32 %v2438, %v2440
    %v2455 = vmax.f32 %v2439, %v2441
    %v2456 = vmax.f32 %v2454, %v2442
    %v2457 = vmax.f32 %v2455, %v2443
    %v2458 = vmax.f32 %v2456, %v2444
    %v2459 = vmax.f32 %v2457, %v2445
    %v2460 = vmax.f32 %v2458, %v2459
    %v2461 = vrot.slane %v2460, 4
    %v2462 = vmax.f32 %v2460, %v2461
    %v2463 = vrot.slane %v2462, 2
    %v2464 = vmax.f32 %v2462, %v2463
    %v2465 = vrot.slane %v2464, 1
    %v2466 = vmax.f32 %v2464, %v2465
    %v2467 = vmax.f32 %v2446, %v2448
    %v2468 = vmax.f32 %v2447, %v2449
    %v2469 = vmax.f32 %v2467, %v2450
    %v2470 = vmax.f32 %v2468, %v2451
    %v2471 = vmax.f32 %v2469, %v2452
    %v2472 = vmax.f32 %v2470, %v2453
    %v2473 = vmax.f32 %v2471, %v2472
    %v2474 = vrot.slane %v2473, 4
    %v2475 = vmax.f32 %v2473, %v2474
    %v2476 = vrot.slane %v2475, 2
    %v2477 = vmax.f32 %v2475, %v2476
    %v2478 = vrot.slane %v2477, 1
    %v2479 = vmax.f32 %v2477, %v2478
    %vm2480 = vcmp.ge.f32.partialorder %v2438, %v2466
    %vm2481 = vcmp.ge.f32.partialorder %v2439, %v2466
    %vm2482 = vcmp.ge.f32.partialorder %v2440, %v2466
    %vm2483 = vcmp.ge.f32.partialorder %v2441, %v2466
    %vm2484 = vcmp.ge.f32.partialorder %v2442, %v2466
    %vm2485 = vcmp.ge.f32.partialorder %v2443, %v2466
    %vm2486 = vcmp.ge.f32.partialorder %v2444, %v2466
    %vm2487 = vcmp.ge.f32.partialorder %v2445, %v2466
    %vm2488 = vcmp.ge.f32.partialorder %v2446, %v2479
    %vm2489 = vcmp.ge.f32.partialorder %v2447, %v2479
    %vm2490 = vcmp.ge.f32.partialorder %v2448, %v2479
    %vm2491 = vcmp.ge.f32.partialorder %v2449, %v2479
    %vm2492 = vcmp.ge.f32.partialorder %v2450, %v2479
    %vm2493 = vcmp.ge.f32.partialorder %v2451, %v2479
    %vm2494 = vcmp.ge.f32.partialorder %v2452, %v2479
    %vm2495 = vcmp.ge.f32.partialorder %v2453, %v2479
    %v2496 = vsel %vm2480, %v1462, 64.0
    %v2497 = vsel %vm2481, %v1463, 64.0
    %v2498 = vsel %vm2482, %v1464, 64.0
    %v2499 = vsel %vm2483, %v1465, 64.0
    %v2500 = vsel %vm2484, %v1466, 64.0
    %v2501 = vsel %vm2485, %v1467, 64.0
    %v2502 = vsel %vm2486, %v1468, 64.0
    %v2503 = vsel %vm2487, %v1469, 64.0
    %v2504 = vsel %vm2488, %v1462, 64.0
    %v2505 = vsel %vm2489, %v1463, 64.0
    %v2506 = vsel %vm2490, %v1464, 64.0
    %v2507 = vsel %vm2491, %v1465, 64.0
    %v2508 = vsel %vm2492, %v1466, 64.0
    %v2509 = vsel %vm2493, %v1467, 64.0
    %v2510 = vsel %vm2494, %v1468, 64.0
    %v2511 = vsel %vm2495, %v1469, 64.0
    %v2512 = vmin.f32 %v2496, %v2498
    %v2513 = vmin.f32 %v2497, %v2499
    %v2514 = vmin.f32 %v2512, %v2500
    %v2515 = vmin.f32 %v2513, %v2501
    %v2516 = vmin.f32 %v2514, %v2502
    %v2517 = vmin.f32 %v2515, %v2503
    %v2518 = vmin.f32 %v2516, %v2517
    %v2519 = vrot.slane %v2518, 4
    %v2520 = vmin.f32 %v2518, %v2519
    %v2521 = vrot.slane %v2520, 2
    %v2522 = vmin.f32 %v2520, %v2521
    %v2523 = vrot.slane %v2522, 1
    %v2524 = vmin.f32 %v2522, %v2523
    %v2525 = vmin.f32 %v2504, %v2506
    %v2526 = vmin.f32 %v2505, %v2507
    %v2527 = vmin.f32 %v2525, %v2508
    %v2528 = vmin.f32 %v2526, %v2509
    %v2529 = vmin.f32 %v2527, %v2510
    %v2530 = vmin.f32 %v2528, %v2511
    %v2531 = vmin.f32 %v2529, %v2530
    %v2532 = vrot.slane %v2531, 4
    %v2533 = vmin.f32 %v2531, %v2532
    %v2534 = vrot.slane %v2533, 2
    %v2535 = vmin.f32 %v2533, %v2534
    %v2536 = vrot.slane %v2535, 1
    %v2537 = vmin.f32 %v2535, %v2536
    %vm2538 = vcmp.eq.f32.partialorder %v1462, %v2524
    %vm2539 = vcmp.eq.f32.partialorder %v1463, %v2524
    %vm2540 = vcmp.eq.f32.partialorder %v1464, %v2524
    %vm2541 = vcmp.eq.f32.partialorder %v1465, %v2524
    %vm2542 = vcmp.eq.f32.partialorder %v1466, %v2524
    %vm2543 = vcmp.eq.f32.partialorder %v1467, %v2524
    %vm2544 = vcmp.eq.f32.partialorder %v1468, %v2524
    %vm2545 = vcmp.eq.f32.partialorder %v1469, %v2524
    %vm2546 = vcmp.eq.f32.partialorder %v1462, %v2537
    %vm2547 = vcmp.eq.f32.partialorder %v1463, %v2537
    %vm2548 = vcmp.eq.f32.partialorder %v1464, %v2537
    %vm2549 = vcmp.eq.f32.partialorder %v1465, %v2537
    %vm2550 = vcmp.eq.f32.partialorder %v1466, %v2537
    %vm2551 = vcmp.eq.f32.partialorder %v1467, %v2537
    %vm2552 = vcmp.eq.f32.partialorder %v1468, %v2537
    %vm2553 = vcmp.eq.f32.partialorder %v1469, %v2537
    %v2554 = vsel %vm2538, 1, 0
    %v2555 = vsel %vm2539, 1, 0
    %v2556 = vsel %vm2540, 1, 0
    %v2557 = vsel %vm2541, 1, 0
    %v2558 = vsel %vm2542, 1, 0
    %v2559 = vsel %vm2543, 1, 0
    %v2560 = vsel %vm2544, 1, 0
    %v2561 = vsel %vm2545, 1, 0
    %v2562 = vsel %vm2546, 1, 0
    %v2563 = vsel %vm2547, 1, 0
    %v2564 = vsel %vm2548, 1, 0
    %v2565 = vsel %vm2549, 1, 0
    %v2566 = vsel %vm2550, 1, 0
    %v2567 = vsel %vm2551, 1, 0
    %v2568 = vsel %vm2552, 1, 0
    %v2569 = vsel %vm2553, 1, 0
    %v2570 = vcvt.s32.f32 %v2554
    %v2571 = vcvt.s32.f32 %v2555
    %v2572 = vcvt.s32.f32 %v2556
    %v2573 = vcvt.s32.f32 %v2557
    %v2574 = vcvt.s32.f32 %v2558
    %v2575 = vcvt.s32.f32 %v2559
    %v2576 = vcvt.s32.f32 %v2560
    %v2577 = vcvt.s32.f32 %v2561
    %v2578 = vcvt.s32.f32 %v2562
    %v2579 = vcvt.s32.f32 %v2563
    %v2580 = vcvt.s32.f32 %v2564
    %v2581 = vcvt.s32.f32 %v2565
    %v2582 = vcvt.s32.f32 %v2566
    %v2583 = vcvt.s32.f32 %v2567
    %v2584 = vcvt.s32.f32 %v2568
    %v2585 = vcvt.s32.f32 %v2569
    %v2586 = vmax.f32 %v2422, %v2570
    %v2587 = vmax.f32 %v2423, %v2571
    %v2588 = vmax.f32 %v2424, %v2572
    %v2589 = vmax.f32 %v2425, %v2573
    %v2590 = vmax.f32 %v2426, %v2574
    %v2591 = vmax.f32 %v2427, %v2575
    %v2592 = vmax.f32 %v2428, %v2576
    %v2593 = vmax.f32 %v2429, %v2577
    %v2594 = vmax.f32 %v2430, %v2578
    %v2595 = vmax.f32 %v2431, %v2579
    %v2596 = vmax.f32 %v2432, %v2580
    %v2597 = vmax.f32 %v2433, %v2581
    %v2598 = vmax.f32 %v2434, %v2582
    %v2599 = vmax.f32 %v2435, %v2583
    %v2600 = vmax.f32 %v2436, %v2584
    %v2601 = vmax.f32 %v2437, %v2585
    %v2602 = vsel %vm2538, -inf, %v2438
    %v2603 = vsel %vm2539, -inf, %v2439
    %v2604 = vsel %vm2540, -inf, %v2440
    %v2605 = vsel %vm2541, -inf, %v2441
    %v2606 = vsel %vm2542, -inf, %v2442
    %v2607 = vsel %vm2543, -inf, %v2443
    %v2608 = vsel %vm2544, -inf, %v2444
    %v2609 = vsel %vm2545, -inf, %v2445
    %v2610 = vsel %vm2546, -inf, %v2446
    %v2611 = vsel %vm2547, -inf, %v2447
    %v2612 = vsel %vm2548, -inf, %v2448
    %v2613 = vsel %vm2549, -inf, %v2449
    %v2614 = vsel %vm2550, -inf, %v2450
    %v2615 = vsel %vm2551, -inf, %v2451
    %v2616 = vsel %vm2552, -inf, %v2452
    %v2617 = vsel %vm2553, -inf, %v2453
    %v2618 = vmax.f32 %v2602, %v2604
    %v2619 = vmax.f32 %v2603, %v2605
    %v2620 = vmax.f32 %v2618, %v2606
    %v2621 = vmax.f32 %v2619, %v2607
    %v2622 = vmax.f32 %v2620, %v2608
    %v2623 = vmax.f32 %v2621, %v2609
    %v2624 = vmax.f32 %v2622, %v2623
    %v2625 = vrot.slane %v2624, 4
    %v2626 = vmax.f32 %v2624, %v2625
    %v2627 = vrot.slane %v2626, 2
    %v2628 = vmax.f32 %v2626, %v2627
    %v2629 = vrot.slane %v2628, 1
    %v2630 = vmax.f32 %v2628, %v2629
    %v2631 = vmax.f32 %v2610, %v2612
    %v2632 = vmax.f32 %v2611, %v2613
    %v2633 = vmax.f32 %v2631, %v2614
    %v2634 = vmax.f32 %v2632, %v2615
    %v2635 = vmax.f32 %v2633, %v2616
    %v2636 = vmax.f32 %v2634, %v2617
    %v2637 = vmax.f32 %v2635, %v2636
    %v2638 = vrot.slane %v2637, 4
    %v2639 = vmax.f32 %v2637, %v2638
    %v2640 = vrot.slane %v2639, 2
    %v2641 = vmax.f32 %v2639, %v2640
    %v2642 = vrot.slane %v2641, 1
    %v2643 = vmax.f32 %v2641, %v2642
    %vm2644 = vcmp.ge.f32.partialorder %v2602, %v2630
    %vm2645 = vcmp.ge.f32.partialorder %v2603, %v2630
    %vm2646 = vcmp.ge.f32.partialorder %v2604, %v2630
    %vm2647 = vcmp.ge.f32.partialorder %v2605, %v2630
    %vm2648 = vcmp.ge.f32.partialorder %v2606, %v2630
    %vm2649 = vcmp.ge.f32.partialorder %v2607, %v2630
    %vm2650 = vcmp.ge.f32.partialorder %v2608, %v2630
    %vm2651 = vcmp.ge.f32.partialorder %v2609, %v2630
    %vm2652 = vcmp.ge.f32.partialorder %v2610, %v2643
    %vm2653 = vcmp.ge.f32.partialorder %v2611, %v2643
    %vm2654 = vcmp.ge.f32.partialorder %v2612, %v2643
    %vm2655 = vcmp.ge.f32.partialorder %v2613, %v2643
    %vm2656 = vcmp.ge.f32.partialorder %v2614, %v2643
    %vm2657 = vcmp.ge.f32.partialorder %v2615, %v2643
    %vm2658 = vcmp.ge.f32.partialorder %v2616, %v2643
    %vm2659 = vcmp.ge.f32.partialorder %v2617, %v2643
    %v2660 = vsel %vm2644, %v1462, 64.0
    %v2661 = vsel %vm2645, %v1463, 64.0
    %v2662 = vsel %vm2646, %v1464, 64.0
    %v2663 = vsel %vm2647, %v1465, 64.0
    %v2664 = vsel %vm2648, %v1466, 64.0
    %v2665 = vsel %vm2649, %v1467, 64.0
    %v2666 = vsel %vm2650, %v1468, 64.0
    %v2667 = vsel %vm2651, %v1469, 64.0
    %v2668 = vsel %vm2652, %v1462, 64.0
    %v2669 = vsel %vm2653, %v1463, 64.0
    %v2670 = vsel %vm2654, %v1464, 64.0
    %v2671 = vsel %vm2655, %v1465, 64.0
    %v2672 = vsel %vm2656, %v1466, 64.0
    %v2673 = vsel %vm2657, %v1467, 64.0
    %v2674 = vsel %vm2658, %v1468, 64.0
    %v2675 = vsel %vm2659, %v1469, 64.0
    %v2676 = vmin.f32 %v2660, %v2662
    %v2677 = vmin.f32 %v2661, %v2663
    %v2678 = vmin.f32 %v2676, %v2664
    %v2679 = vmin.f32 %v2677, %v2665
    %v2680 = vmin.f32 %v2678, %v2666
    %v2681 = vmin.f32 %v2679, %v2667
    %v2682 = vmin.f32 %v2680, %v2681
    %v2683 = vrot.slane %v2682, 4
    %v2684 = vmin.f32 %v2682, %v2683
    %v2685 = vrot.slane %v2684, 2
    %v2686 = vmin.f32 %v2684, %v2685
    %v2687 = vrot.slane %v2686, 1
    %v2688 = vmin.f32 %v2686, %v2687
    %v2689 = vmin.f32 %v2668, %v2670
    %v2690 = vmin.f32 %v2669, %v2671
    %v2691 = vmin.f32 %v2689, %v2672
    %v2692 = vmin.f32 %v2690, %v2673
    %v2693 = vmin.f32 %v2691, %v2674
    %v2694 = vmin.f32 %v2692, %v2675
    %v2695 = vmin.f32 %v2693, %v2694
    %v2696 = vrot.slane %v2695, 4
    %v2697 = vmin.f32 %v2695, %v2696
    %v2698 = vrot.slane %v2697, 2
    %v2699 = vmin.f32 %v2697, %v2698
    %v2700 = vrot.slane %v2699, 1
    %v2701 = vmin.f32 %v2699, %v2700
    %vm2702 = vcmp.eq.f32.partialorder %v1462, %v2688
    %vm2703 = vcmp.eq.f32.partialorder %v1463, %v2688
    %vm2704 = vcmp.eq.f32.partialorder %v1464, %v2688
    %vm2705 = vcmp.eq.f32.partialorder %v1465, %v2688
    %vm2706 = vcmp.eq.f32.partialorder %v1466, %v2688
    %vm2707 = vcmp.eq.f32.partialorder %v1467, %v2688
    %vm2708 = vcmp.eq.f32.partialorder %v1468, %v2688
    %vm2709 = vcmp.eq.f32.partialorder %v1469, %v2688
    %vm2710 = vcmp.eq.f32.partialorder %v1462, %v2701
    %vm2711 = vcmp.eq.f32.partialorder %v1463, %v2701
    %vm2712 = vcmp.eq.f32.partialorder %v1464, %v2701
    %vm2713 = vcmp.eq.f32.partialorder %v1465, %v2701
    %vm2714 = vcmp.eq.f32.partialorder %v1466, %v2701
    %vm2715 = vcmp.eq.f32.partialorder %v1467, %v2701
    %vm2716 = vcmp.eq.f32.partialorder %v1468, %v2701
    %vm2717 = vcmp.eq.f32.partialorder %v1469, %v2701
    %v2718 = vsel %vm2702, 1, 0
    %v2719 = vsel %vm2703, 1, 0
    %v2720 = vsel %vm2704, 1, 0
    %v2721 = vsel %vm2705, 1, 0
    %v2722 = vsel %vm2706, 1, 0
    %v2723 = vsel %vm2707, 1, 0
    %v2724 = vsel %vm2708, 1, 0
    %v2725 = vsel %vm2709, 1, 0
    %v2726 = vsel %vm2710, 1, 0
    %v2727 = vsel %vm2711, 1, 0
    %v2728 = vsel %vm2712, 1, 0
    %v2729 = vsel %vm2713, 1, 0
    %v2730 = vsel %vm2714, 1, 0
    %v2731 = vsel %vm2715, 1, 0
    %v2732 = vsel %vm2716, 1, 0
    %v2733 = vsel %vm2717, 1, 0
    %v2734 = vcvt.s32.f32 %v2718
    %v2735 = vcvt.s32.f32 %v2719
    %v2736 = vcvt.s32.f32 %v2720
    %v2737 = vcvt.s32.f32 %v2721
    %v2738 = vcvt.s32.f32 %v2722
    %v2739 = vcvt.s32.f32 %v2723
    %v2740 = vcvt.s32.f32 %v2724
    %v2741 = vcvt.s32.f32 %v2725
    %v2742 = vcvt.s32.f32 %v2726
    %v2743 = vcvt.s32.f32 %v2727
    %v2744 = vcvt.s32.f32 %v2728
    %v2745 = vcvt.s32.f32 %v2729
    %v2746 = vcvt.s32.f32 %v2730
    %v2747 = vcvt.s32.f32 %v2731
    %v2748 = vcvt.s32.f32 %v2732
    %v2749 = vcvt.s32.f32 %v2733
    %v2750 = vmax.f32 %v2586, %v2734
    %v2751 = vmax.f32 %v2587, %v2735
    %v2752 = vmax.f32 %v2588, %v2736
    %v2753 = vmax.f32 %v2589, %v2737
    %v2754 = vmax.f32 %v2590, %v2738
    %v2755 = vmax.f32 %v2591, %v2739
    %v2756 = vmax.f32 %v2592, %v2740
    %v2757 = vmax.f32 %v2593, %v2741
    %v2758 = vmax.f32 %v2594, %v2742
    %v2759 = vmax.f32 %v2595, %v2743
    %v2760 = vmax.f32 %v2596, %v2744
    %v2761 = vmax.f32 %v2597, %v2745
    %v2762 = vmax.f32 %v2598, %v2746
    %v2763 = vmax.f32 %v2599, %v2747
    %v2764 = vmax.f32 %v2600, %v2748
    %v2765 = vmax.f32 %v2601, %v2749
    %v2766 = vld [vmem:[#allocation7] sm:$0xff]
    %v2767 = vld [vmem:[#allocation7 + $0x10] sm:$0xff]
    %v2768 = vld [vmem:[#allocation7 + $0x20] sm:$0xff]
    %v2769 = vld [vmem:[#allocation7 + $0x30] sm:$0xff]
    %v2770 = vld [vmem:[#allocation10] sm:$0x1]
    %v2772 = vlaneseq
    %v2773 = vshrl.u32 %v2772, 7
    %v2774 = vsub.s32 0, %v2773
    %v2775 = vrot.slane %v2770, %v2774
    %2777 = vmatprep.subr.mxu0 0.0
    %2778 = vmatpush1.msra.mxu0 0.0
    %2779 = vmatprep.subr.mxu0 0.0
    %2780 = vmatpush1.msra.mxu0 0.0
    %2781 = vmatprep.subr.mxu0 0.0
    %2782 = vmatpush1.msra.mxu0 0.0
    %2783 = vmatprep.subr.mxu0 0.0
    %2784 = vmatpush1.msra.mxu0 0.0
    %2785 = vmatprep.subr.mxu0 0.0
    %2786 = vmatpush1.msra.mxu0 0.0
    %2787 = vmatprep.subr.mxu0 0.0
    %2788 = vmatpush1.msra.mxu0 0.0
    %2789 = vmatprep.subr.mxu0 0.0
    %2790 = vmatpush1.msra.mxu0 0.0
    %2791 = vmatprep.subr.mxu0 0.0
    %2792 = vmatpush1.msra.mxu0 0.0
    %2793 = vmatprep.subr.mxu0 0.0
    %2794 = vmatpush1.msra.mxu0 0.0
    %2795 = vmatprep.subr.mxu0 0.0
    %2796 = vmatpush1.msra.mxu0 0.0
    %2797 = vmatprep.subr.mxu0 0.0
    %2798 = vmatpush1.msra.mxu0 0.0
    %2799 = vmatprep.subr.mxu0 0.0
    %2800 = vmatpush1.msra.mxu0 0.0
    %2801 = vmatprep.subr.mxu0 0.0
    %2802 = vmatpush1.msra.mxu0 %v2769
    %2803 = vmatprep.subr.mxu0 0.0
    %2804 = vmatpush1.msra.mxu0 %v2768
    %2805 = vmatprep.subr.mxu0 0.0
    %2806 = vmatpush1.msra.mxu0 %v2767
    %2807 = vmatprep.subr.mxu0 0.0
    %2808 = vmatpush1.msra.mxu0 %v2766
    %2809 = vmatprep.subr.mxu0 0.0
    %2810 = vmatpush2.msra.mxu0 0.0
    %2811 = vmatprep.subr.mxu0 0.0
    %2812 = vmatpush2.msra.mxu0 0.0
    %2813 = vmatprep.subr.mxu0 0.0
    %2814 = vmatpush2.msra.mxu0 0.0
    %2815 = vmatprep.subr.mxu0 0.0
    %2816 = vmatpush2.msra.mxu0 0.0
    %2817 = vmatprep.subr.mxu0 0.0
    %2818 = vmatpush2.msra.mxu0 0.0
    %2819 = vmatprep.subr.mxu0 0.0
    %2820 = vmatpush2.msra.mxu0 0.0
    %2821 = vmatprep.subr.mxu0 0.0
    %2822 = vmatpush2.msra.mxu0 0.0
    %2823 = vmatprep.subr.mxu0 0.0
    %2824 = vmatpush2.msra.mxu0 0.0
    %2825 = vmatprep.subr.mxu0 0.0
    %2826 = vmatpush2.msra.mxu0 0.0
    %2827 = vmatprep.subr.mxu0 0.0
    %2828 = vmatpush2.msra.mxu0 0.0
    %2829 = vmatprep.subr.mxu0 0.0
    %2830 = vmatpush2.msra.mxu0 0.0
    %2831 = vmatprep.subr.mxu0 0.0
    %2832 = vmatpush2.msra.mxu0 0.0
    %2833 = vmatprep.subr.mxu0 0.0
    %2834 = vmatpush2.msra.mxu0 0.0
    %2835 = vmatprep.subr.mxu0 0.0
    %2836 = vmatpush2.msra.mxu0 0.0
    %2837 = vmatprep.subr.mxu0 0.0
    %2838 = vmatpush2.msra.mxu0 0.0
    %2839 = vmatprep.subr.mxu0 0.0
    %2840 = vmatpush2.msra.mxu0 0.0
    %2841 = vmatprep.mubr.f32.mxu0 0.0
    %2842 = vmatmul.mubr.f32.gmra.mxu0 %v134
    %v2843 = vpop.f32.mrf.mxu0
    %v2844 = vadd.f32 %v2775, %v2843
    %v2845 = vpop.f32.mrf.mxu0
    %2846 = vdwg.mxu0
    %v2847 = vld [vmem:[#allocation9] sm:$0xff]
    %v2848 = vld [vmem:[#allocation9 + $0x10] sm:$0xff]
    %v2849 = vld [vmem:[#allocation9 + $0x20] sm:$0xff]
    %v2850 = vld [vmem:[#allocation9 + $0x30] sm:$0xff]
    %2851 = vmatprep.subr.mxu0 0.0
    %2852 = vmatpush1.msra.mxu0 0.0
    %2853 = vmatprep.subr.mxu0 0.0
    %2854 = vmatpush1.msra.mxu0 0.0
    %2855 = vmatprep.subr.mxu0 0.0
    %2856 = vmatpush1.msra.mxu0 0.0
    %2857 = vmatprep.subr.mxu0 0.0
    %2858 = vmatpush1.msra.mxu0 0.0
    %2859 = vmatprep.subr.mxu0 0.0
    %2860 = vmatpush1.msra.mxu0 0.0
    %2861 = vmatprep.subr.mxu0 0.0
    %2862 = vmatpush1.msra.mxu0 0.0
    %2863 = vmatprep.subr.mxu0 0.0
    %2864 = vmatpush1.msra.mxu0 0.0
    %2865 = vmatprep.subr.mxu0 0.0
    %2866 = vmatpush1.msra.mxu0 0.0
    %2867 = vmatprep.subr.mxu0 0.0
    %2868 = vmatpush1.msra.mxu0 0.0
    %2869 = vmatprep.subr.mxu0 0.0
    %2870 = vmatpush1.msra.mxu0 0.0
    %2871 = vmatprep.subr.mxu0 0.0
    %2872 = vmatpush1.msra.mxu0 0.0
    %2873 = vmatprep.subr.mxu0 0.0
    %2874 = vmatpush1.msra.mxu0 0.0
    %2875 = vmatprep.subr.mxu0 0.0
    %2876 = vmatpush1.msra.mxu0 %v2850
    %2877 = vmatprep.subr.mxu0 0.0
    %2878 = vmatpush1.msra.mxu0 %v2849
    %2879 = vmatprep.subr.mxu0 0.0
    %2880 = vmatpush1.msra.mxu0 %v2848
    %2881 = vmatprep.subr.mxu0 0.0
    %2882 = vmatpush1.msra.mxu0 %v2847
    %2883 = vmatprep.subr.mxu0 0.0
    %2884 = vmatpush2.msra.mxu0 0.0
    %2885 = vmatprep.subr.mxu0 0.0
    %2886 = vmatpush2.msra.mxu0 0.0
    %2887 = vmatprep.subr.mxu0 0.0
    %2888 = vmatpush2.msra.mxu0 0.0
    %2889 = vmatprep.subr.mxu0 0.0
    %2890 = vmatpush2.msra.mxu0 0.0
    %2891 = vmatprep.subr.mxu0 0.0
    %2892 = vmatpush2.msra.mxu0 0.0
    %2893 = vmatprep.subr.mxu0 0.0
    %2894 = vmatpush2.msra.mxu0 0.0
    %2895 = vmatprep.subr.mxu0 0.0
    %2896 = vmatpush2.msra.mxu0 0.0
    %2897 = vmatprep.subr.mxu0 0.0
    %2898 = vmatpush2.msra.mxu0 0.0
    %2899 = vmatprep.subr.mxu0 0.0
    %2900 = vmatpush2.msra.mxu0 0.0
    %2901 = vmatprep.subr.mxu0 0.0
    %2902 = vmatpush2.msra.mxu0 0.0
    %2903 = vmatprep.subr.mxu0 0.0
    %2904 = vmatpush2.msra.mxu0 0.0
    %2905 = vmatprep.subr.mxu0 0.0
    %2906 = vmatpush2.msra.mxu0 0.0
    %2907 = vmatprep.subr.mxu0 0.0
    %2908 = vmatpush2.msra.mxu0 0.0
    %2909 = vmatprep.subr.mxu0 0.0
    %2910 = vmatpush2.msra.mxu0 0.0
    %2911 = vmatprep.subr.mxu0 0.0
    %2912 = vmatpush2.msra.mxu0 0.0
    %2913 = vmatprep.subr.mxu0 0.0
    %2914 = vmatpush2.msra.mxu0 0.0
    %2915 = vmatprep.mubr.f32.mxu0 0.0
    %2916 = vmatmul.mubr.f32.gmra.mxu0 %v211
    %v2917 = vpop.f32.mrf.mxu0
    %v2918 = vadd.f32 0.0, %v2917
    %v2919 = vpop.f32.mrf.mxu0
    %2920 = vmatprep.mubr.f32.mxu0 0.0
    %2921 = vmatmul.mubr.f32.gmra.mxu0 %v214
    %v2922 = vpop.f32.mrf.mxu0
    %v2923 = vadd.f32 0.0, %v2922
    %v2924 = vpop.f32.mrf.mxu0
    %2925 = vmatprep.mubr.f32.mxu0 0.0
    %2926 = vmatmul.mubr.f32.gmra.mxu0 %v217
    %v2927 = vpop.f32.mrf.mxu0
    %v2928 = vadd.f32 0.0, %v2927
    %v2929 = vpop.f32.mrf.mxu0
    %2930 = vmatprep.mubr.f32.mxu0 0.0
    %2931 = vmatmul.mubr.f32.gmra.mxu0 %v220
    %v2932 = vpop.f32.mrf.mxu0
    %v2933 = vadd.f32 0.0, %v2932
    %v2934 = vpop.f32.mrf.mxu0
    %2935 = vmatprep.mubr.f32.mxu0 0.0
    %2936 = vmatmul.mubr.f32.gmra.mxu0 %v223
    %v2937 = vpop.f32.mrf.mxu0
    %v2938 = vadd.f32 0.0, %v2937
    %v2939 = vpop.f32.mrf.mxu0
    %2940 = vmatprep.mubr.f32.mxu0 0.0
    %2941 = vmatmul.mubr.f32.gmra.mxu0 %v226
    %v2942 = vpop.f32.mrf.mxu0
    %v2943 = vadd.f32 0.0, %v2942
    %v2944 = vpop.f32.mrf.mxu0
    %2945 = vmatprep.mubr.f32.mxu0 0.0
    %2946 = vmatmul.mubr.f32.gmra.mxu0 %v229
    %v2947 = vpop.f32.mrf.mxu0
    %v2948 = vadd.f32 0.0, %v2947
    %v2949 = vpop.f32.mrf.mxu0
    %2950 = vmatprep.mubr.f32.mxu0 0.0
    %2951 = vmatmul.mubr.f32.gmra.mxu0 %v232
    %v2952 = vpop.f32.mrf.mxu0
    %v2953 = vadd.f32 0.0, %v2952
    %v2954 = vpop.f32.mrf.mxu0
    %2955 = vdwg.mxu0
    %v2958 = vunpack.c.l.s4 1966171168
    %v2959 = vunpack.c.0.s8 %v2958
    %v2960 = vlaneseq
    %v2961 = vshrl.u32 %v2960, 7
    %v2962 = vsub.s32 %v2959, %v2961
    %v2963 = vrot.slane %v2844, %v2962
    %v2964 = vcombine.high %v2963, %v2963
    %v2966 = vunpack.c.l.s4 1966171168
    %v2967 = vunpack.c.0.s8 %v2966
    %v2968 = vlaneseq
    %v2969 = vshrl.u32 %v2968, 7
    %v2970 = vsub.s32 %v2967, %v2969
    %v2971 = vrot.slane %v2963, %v2970
    %v2973 = vunpack.c.l.s4 1966171168
    %v2974 = vunpack.c.0.s8 %v2973
    %v2975 = vlaneseq
    %v2976 = vshrl.u32 %v2975, 7
    %v2977 = vsub.s32 %v2974, %v2976
    %v2978 = vrot.slane %v2964, %v2977
    %v2979 = vlaneseq
    %v2980 = vshrl.u32 %v2979, 7
    %v2981 = vsub.s32 0, %v2980
    %v2982 = vrot.slane %v2971, %v2981
    %v2983 = vlaneseq
    %v2984 = vshrl.u32 %v2983, 7
    %v2985 = vsub.s32 0, %v2984
    %v2986 = vrot.slane %v2978, %v2985
    %v2989 = vadd.f32 %v2982, %v2918
    %v2990 = vadd.f32 %v2982, %v2923
    %v2991 = vadd.f32 %v2982, %v2928
    %v2992 = vadd.f32 %v2982, %v2933
    %v2993 = vadd.f32 %v2982, %v2938
    %v2994 = vadd.f32 %v2982, %v2943
    %v2995 = vadd.f32 %v2982, %v2948
    %v2996 = vadd.f32 %v2982, %v2953
    %v2997 = vadd.f32 %v2986, %v2918
    %v2998 = vadd.f32 %v2986, %v2923
    %v2999 = vadd.f32 %v2986, %v2928
    %v3000 = vadd.f32 %v2986, %v2933
    %v3001 = vadd.f32 %v2986, %v2938
    %v3002 = vadd.f32 %v2986, %v2943
    %v3003 = vadd.f32 %v2986, %v2948
    %v3004 = vadd.f32 %v2986, %v2953
    %v3005 = vmul.f32 %v2989, 0.5
    %v3006 = vmul.f32 %v2990, 0.5
    %v3007 = vmul.f32 %v2991, 0.5
    %v3008 = vmul.f32 %v2992, 0.5
    %v3009 = vmul.f32 %v2993, 0.5
    %v3010 = vmul.f32 %v2994, 0.5
    %v3011 = vmul.f32 %v2995, 0.5
    %v3012 = vmul.f32 %v2996, 0.5
    %v3013 = vmul.f32 %v2997, 0.5
    %v3014 = vmul.f32 %v2998, 0.5
    %v3015 = vmul.f32 %v2999, 0.5
    %v3016 = vmul.f32 %v3000, 0.5
    %v3017 = vmul.f32 %v3001, 0.5
    %v3018 = vmul.f32 %v3002, 0.5
    %v3019 = vmul.f32 %v3003, 0.5
    %v3020 = vmul.f32 %v3004, 0.5
    %v3021 = vmul.f32 %v2989, 0.70710677
    %v3022 = vmul.f32 %v2990, 0.70710677
    %v3023 = vmul.f32 %v2991, 0.70710677
    %v3024 = vmul.f32 %v2992, 0.70710677
    %v3025 = vmul.f32 %v2993, 0.70710677
    %v3026 = vmul.f32 %v2994, 0.70710677
    %v3027 = vmul.f32 %v2995, 0.70710677
    %v3028 = vmul.f32 %v2996, 0.70710677
    %v3029 = vmul.f32 %v2997, 0.70710677
    %v3030 = vmul.f32 %v2998, 0.70710677
    %v3031 = vmul.f32 %v2999, 0.70710677
    %v3032 = vmul.f32 %v3000, 0.70710677
    %v3033 = vmul.f32 %v3001, 0.70710677
    %v3034 = vmul.f32 %v3002, 0.70710677
    %v3035 = vmul.f32 %v3003, 0.70710677
    %v3036 = vmul.f32 %v3004, 0.70710677
    %v3037 = verf.f32.pop %v3021
    %v3038 = verf.f32.pop %v3022
    %v3039 = verf.f32.pop %v3023
    %v3040 = verf.f32.pop %v3024
    %v3041 = verf.f32.pop %v3025
    %v3042 = verf.f32.pop %v3026
    %v3043 = verf.f32.pop %v3027
    %v3044 = verf.f32.pop %v3028
    %v3045 = verf.f32.pop %v3029
    %v3046 = verf.f32.pop %v3030
    %v3047 = verf.f32.pop %v3031
    %v3048 = verf.f32.pop %v3032
    %v3049 = verf.f32.pop %v3033
    %v3050 = verf.f32.pop %v3034
    %v3051 = verf.f32.pop %v3035
    %v3052 = verf.f32.pop %v3036
    %v3053 = vadd.f32 %v3037, 1.0
    %v3054 = vadd.f32 %v3038, 1.0
    %v3055 = vadd.f32 %v3039, 1.0
    %v3056 = vadd.f32 %v3040, 1.0
    %v3057 = vadd.f32 %v3041, 1.0
    %v3058 = vadd.f32 %v3042, 1.0
    %v3059 = vadd.f32 %v3043, 1.0
    %v3060 = vadd.f32 %v3044, 1.0
    %v3061 = vadd.f32 %v3045, 1.0
    %v3062 = vadd.f32 %v3046, 1.0
    %v3063 = vadd.f32 %v3047, 1.0
    %v3064 = vadd.f32 %v3048, 1.0
    %v3065 = vadd.f32 %v3049, 1.0
    %v3066 = vadd.f32 %v3050, 1.0
    %v3067 = vadd.f32 %v3051, 1.0
    %v3068 = vadd.f32 %v3052, 1.0
    %v3069 = vmul.f32 %v3005, %v3053
    %v3070 = vmul.f32 %v3006, %v3054
    %v3071 = vmul.f32 %v3007, %v3055
    %v3072 = vmul.f32 %v3008, %v3056
    %v3073 = vmul.f32 %v3009, %v3057
    %v3074 = vmul.f32 %v3010, %v3058
    %v3075 = vmul.f32 %v3011, %v3059
    %v3076 = vmul.f32 %v3012, %v3060
    %v3077 = vmul.f32 %v3013, %v3061
    %v3078 = vmul.f32 %v3014, %v3062
    %v3079 = vmul.f32 %v3015, %v3063
    %v3080 = vmul.f32 %v3016, %v3064
    %v3081 = vmul.f32 %v3017, %v3065
    %v3082 = vmul.f32 %v3018, %v3066
    %v3083 = vmul.f32 %v3019, %v3067
    %v3084 = vmul.f32 %v3020, %v3068
    %v3085 = vld [vmem:[%s10] sm:$0x1]
    %v3087 = vlaneseq
    %v3088 = vshrl.u32 %v3087, 7
    %v3089 = vsub.s32 0, %v3088
    %v3090 = vrot.slane %v3085, %v3089
    %v3092 = vmul.f32 %v3069, %v3090
    %v3093 = vmul.f32 %v3070, %v3090
    %v3094 = vmul.f32 %v3071, %v3090
    %v3095 = vmul.f32 %v3072, %v3090
    %v3096 = vmul.f32 %v3073, %v3090
    %v3097 = vmul.f32 %v3074, %v3090
    %v3098 = vmul.f32 %v3075, %v3090
    %v3099 = vmul.f32 %v3076, %v3090
    %v3100 = vmul.f32 %v3077, %v3090
    %v3101 = vmul.f32 %v3078, %v3090
    %v3102 = vmul.f32 %v3079, %v3090
    %v3103 = vmul.f32 %v3080, %v3090
    %v3104 = vmul.f32 %v3081, %v3090
    %v3105 = vmul.f32 %v3082, %v3090
    %v3106 = vmul.f32 %v3083, %v3090
    %v3107 = vmul.f32 %v3084, %v3090
    %3108 = vadd.xlane.f32.xlu0 %v3092
    %v3109 = vpop.xlane.xlu0 %3108
    %3110 = vadd.xlane.f32.xlu0 %v3093
    %v3111 = vpop.xlane.xlu0 %3110
    %3112 = vadd.xlane.f32.xlu0 %v3094
    %v3113 = vpop.xlane.xlu0 %3112
    %3114 = vadd.xlane.f32.xlu0 %v3095
    %v3115 = vpop.xlane.xlu0 %3114
    %3116 = vadd.xlane.f32.xlu0 %v3096
    %v3117 = vpop.xlane.xlu0 %3116
    %3118 = vadd.xlane.f32.xlu0 %v3097
    %v3119 = vpop.xlane.xlu0 %3118
    %3120 = vadd.xlane.f32.xlu0 %v3098
    %v3121 = vpop.xlane.xlu0 %3120
    %3122 = vadd.xlane.f32.xlu0 %v3099
    %v3123 = vpop.xlane.xlu0 %3122
    %3124 = vadd.xlane.f32.xlu0 %v3100
    %v3125 = vpop.xlane.xlu0 %3124
    %3126 = vadd.xlane.f32.xlu0 %v3101
    %v3127 = vpop.xlane.xlu0 %3126
    %3128 = vadd.xlane.f32.xlu0 %v3102
    %v3129 = vpop.xlane.xlu0 %3128
    %3130 = vadd.xlane.f32.xlu0 %v3103
    %v3131 = vpop.xlane.xlu0 %3130
    %3132 = vadd.xlane.f32.xlu0 %v3104
    %v3133 = vpop.xlane.xlu0 %3132
    %3134 = vadd.xlane.f32.xlu0 %v3105
    %v3135 = vpop.xlane.xlu0 %3134
    %3136 = vadd.xlane.f32.xlu0 %v3106
    %v3137 = vpop.xlane.xlu0 %3136
    %3138 = vadd.xlane.f32.xlu0 %v3107
    %v3139 = vpop.xlane.xlu0 %3138
    %v3140 = vadd.f32 %v3109, 0.0
    %v3141 = vadd.f32 %v3111, 0.0
    %v3142 = vadd.f32 %v3113, 0.0
    %v3143 = vadd.f32 %v3115, 0.0
    %v3144 = vadd.f32 %v3117, 0.0
    %v3145 = vadd.f32 %v3119, 0.0
    %v3146 = vadd.f32 %v3121, 0.0
    %v3147 = vadd.f32 %v3123, 0.0
    %v3148 = vadd.f32 %v3125, 0.0
    %v3149 = vadd.f32 %v3127, 0.0
    %v3150 = vadd.f32 %v3129, 0.0
    %v3151 = vadd.f32 %v3131, 0.0
    %v3152 = vadd.f32 %v3133, 0.0
    %v3153 = vadd.f32 %v3135, 0.0
    %v3154 = vadd.f32 %v3137, 0.0
    %v3155 = vadd.f32 %v3139, 0.0
    %v3156 = vld [vmem:[#allocation7 + $0x8] sm:$0xff]
    %v3157 = vld [vmem:[#allocation7 + $0x18] sm:$0xff]
    %v3158 = vld [vmem:[#allocation7 + $0x28] sm:$0xff]
    %v3159 = vld [vmem:[#allocation7 + $0x38] sm:$0xff]
    %v3160 = vld [vmem:[#allocation10 + $0x1] sm:$0x1]
    %v3162 = vlaneseq
    %v3163 = vshrl.u32 %v3162, 7
    %v3164 = vsub.s32 0, %v3163
    %v3165 = vrot.slane %v3160, %v3164
    %3167 = vmatprep.subr.mxu0 0.0
    %3168 = vmatpush1.msra.mxu0 0.0
    %3169 = vmatprep.subr.mxu0 0.0
    %3170 = vmatpush1.msra.mxu0 0.0
    %3171 = vmatprep.subr.mxu0 0.0
    %3172 = vmatpush1.msra.mxu0 0.0
    %3173 = vmatprep.subr.mxu0 0.0
    %3174 = vmatpush1.msra.mxu0 0.0
    %3175 = vmatprep.subr.mxu0 0.0
    %3176 = vmatpush1.msra.mxu0 0.0
    %3177 = vmatprep.subr.mxu0 0.0
    %3178 = vmatpush1.msra.mxu0 0.0
    %3179 = vmatprep.subr.mxu0 0.0
    %3180 = vmatpush1.msra.mxu0 0.0
    %3181 = vmatprep.subr.mxu0 0.0
    %3182 = vmatpush1.msra.mxu0 0.0
    %3183 = vmatprep.subr.mxu0 0.0
    %3184 = vmatpush1.msra.mxu0 0.0
    %3185 = vmatprep.subr.mxu0 0.0
    %3186 = vmatpush1.msra.mxu0 0.0
    %3187 = vmatprep.subr.mxu0 0.0
    %3188 = vmatpush1.msra.mxu0 0.0
    %3189 = vmatprep.subr.mxu0 0.0
    %3190 = vmatpush1.msra.mxu0 0.0
    %3191 = vmatprep.subr.mxu0 0.0
    %3192 = vmatpush1.msra.mxu0 %v3159
    %3193 = vmatprep.subr.mxu0 0.0
    %3194 = vmatpush1.msra.mxu0 %v3158
    %3195 = vmatprep.subr.mxu0 0.0
    %3196 = vmatpush1.msra.mxu0 %v3157
    %3197 = vmatprep.subr.mxu0 0.0
    %3198 = vmatpush1.msra.mxu0 %v3156
    %3199 = vmatprep.subr.mxu0 0.0
    %3200 = vmatpush2.msra.mxu0 0.0
    %3201 = vmatprep.subr.mxu0 0.0
    %3202 = vmatpush2.msra.mxu0 0.0
    %3203 = vmatprep.subr.mxu0 0.0
    %3204 = vmatpush2.msra.mxu0 0.0
    %3205 = vmatprep.subr.mxu0 0.0
    %3206 = vmatpush2.msra.mxu0 0.0
    %3207 = vmatprep.subr.mxu0 0.0
    %3208 = vmatpush2.msra.mxu0 0.0
    %3209 = vmatprep.subr.mxu0 0.0
    %3210 = vmatpush2.msra.mxu0 0.0
    %3211 = vmatprep.subr.mxu0 0.0
    %3212 = vmatpush2.msra.mxu0 0.0
    %3213 = vmatprep.subr.mxu0 0.0
    %3214 = vmatpush2.msra.mxu0 0.0
    %3215 = vmatprep.subr.mxu0 0.0
    %3216 = vmatpush2.msra.mxu0 0.0
    %3217 = vmatprep.subr.mxu0 0.0
    %3218 = vmatpush2.msra.mxu0 0.0
    %3219 = vmatprep.subr.mxu0 0.0
    %3220 = vmatpush2.msra.mxu0 0.0
    %3221 = vmatprep.subr.mxu0 0.0
    %3222 = vmatpush2.msra.mxu0 0.0
    %3223 = vmatprep.subr.mxu0 0.0
    %3224 = vmatpush2.msra.mxu0 0.0
    %3225 = vmatprep.subr.mxu0 0.0
    %3226 = vmatpush2.msra.mxu0 0.0
    %3227 = vmatprep.subr.mxu0 0.0
    %3228 = vmatpush2.msra.mxu0 0.0
    %3229 = vmatprep.subr.mxu0 0.0
    %3230 = vmatpush2.msra.mxu0 0.0
    %3231 = vmatprep.mubr.f32.mxu0 0.0
    %3232 = vmatmul.mubr.f32.gmra.mxu0 %v134
    %v3233 = vpop.f32.mrf.mxu0
    %v3234 = vadd.f32 %v3165, %v3233
    %v3235 = vpop.f32.mrf.mxu0
    %3236 = vdwg.mxu0
    %v3237 = vld [vmem:[#allocation9 + $0x8] sm:$0xff]
    %v3238 = vld [vmem:[#allocation9 + $0x18] sm:$0xff]
    %v3239 = vld [vmem:[#allocation9 + $0x28] sm:$0xff]
    %v3240 = vld [vmem:[#allocation9 + $0x38] sm:$0xff]
    %3241 = vmatprep.subr.mxu0 0.0
    %3242 = vmatpush1.msra.mxu0 0.0
    %3243 = vmatprep.subr.mxu0 0.0
    %3244 = vmatpush1.msra.mxu0 0.0
    %3245 = vmatprep.subr.mxu0 0.0
    %3246 = vmatpush1.msra.mxu0 0.0
    %3247 = vmatprep.subr.mxu0 0.0
    %3248 = vmatpush1.msra.mxu0 0.0
    %3249 = vmatprep.subr.mxu0 0.0
    %3250 = vmatpush1.msra.mxu0 0.0
    %3251 = vmatprep.subr.mxu0 0.0
    %3252 = vmatpush1.msra.mxu0 0.0
    %3253 = vmatprep.subr.mxu0 0.0
    %3254 = vmatpush1.msra.mxu0 0.0
    %3255 = vmatprep.subr.mxu0 0.0
    %3256 = vmatpush1.msra.mxu0 0.0
    %3257 = vmatprep.subr.mxu0 0.0
    %3258 = vmatpush1.msra.mxu0 0.0
    %3259 = vmatprep.subr.mxu0 0.0
    %3260 = vmatpush1.msra.mxu0 0.0
    %3261 = vmatprep.subr.mxu0 0.0
    %3262 = vmatpush1.msra.mxu0 0.0
    %3263 = vmatprep.subr.mxu0 0.0
    %3264 = vmatpush1.msra.mxu0 0.0
    %3265 = vmatprep.subr.mxu0 0.0
    %3266 = vmatpush1.msra.mxu0 %v3240
    %3267 = vmatprep.subr.mxu0 0.0
    %3268 = vmatpush1.msra.mxu0 %v3239
    %3269 = vmatprep.subr.mxu0 0.0
    %3270 = vmatpush1.msra.mxu0 %v3238
    %3271 = vmatprep.subr.mxu0 0.0
    %3272 = vmatpush1.msra.mxu0 %v3237
    %3273 = vmatprep.subr.mxu0 0.0
    %3274 = vmatpush2.msra.mxu0 0.0
    %3275 = vmatprep.subr.mxu0 0.0
    %3276 = vmatpush2.msra.mxu0 0.0
    %3277 = vmatprep.subr.mxu0 0.0
    %3278 = vmatpush2.msra.mxu0 0.0
    %3279 = vmatprep.subr.mxu0 0.0
    %3280 = vmatpush2.msra.mxu0 0.0
    %3281 = vmatprep.subr.mxu0 0.0
    %3282 = vmatpush2.msra.mxu0 0.0
    %3283 = vmatprep.subr.mxu0 0.0
    %3284 = vmatpush2.msra.mxu0 0.0
    %3285 = vmatprep.subr.mxu0 0.0
    %3286 = vmatpush2.msra.mxu0 0.0
    %3287 = vmatprep.subr.mxu0 0.0
    %3288 = vmatpush2.msra.mxu0 0.0
    %3289 = vmatprep.subr.mxu0 0.0
    %3290 = vmatpush2.msra.mxu0 0.0
    %3291 = vmatprep.subr.mxu0 0.0
    %3292 = vmatpush2.msra.mxu0 0.0
    %3293 = vmatprep.subr.mxu0 0.0
    %3294 = vmatpush2.msra.mxu0 0.0
    %3295 = vmatprep.subr.mxu0 0.0
    %3296 = vmatpush2.msra.mxu0 0.0
    %3297 = vmatprep.subr.mxu0 0.0
    %3298 = vmatpush2.msra.mxu0 0.0
    %3299 = vmatprep.subr.mxu0 0.0
    %3300 = vmatpush2.msra.mxu0 0.0
    %3301 = vmatprep.subr.mxu0 0.0
    %3302 = vmatpush2.msra.mxu0 0.0
    %3303 = vmatprep.subr.mxu0 0.0
    %3304 = vmatpush2.msra.mxu0 0.0
    %3305 = vmatprep.mubr.f32.mxu0 0.0
    %3306 = vmatmul.mubr.f32.gmra.mxu0 %v211
    %v3307 = vpop.f32.mrf.mxu0
    %v3308 = vadd.f32 0.0, %v3307
    %v3309 = vpop.f32.mrf.mxu0
    %3310 = vmatprep.mubr.f32.mxu0 0.0
    %3311 = vmatmul.mubr.f32.gmra.mxu0 %v214
    %v3312 = vpop.f32.mrf.mxu0
    %v3313 = vadd.f32 0.0, %v3312
    %v3314 = vpop.f32.mrf.mxu0
    %3315 = vmatprep.mubr.f32.mxu0 0.0
    %3316 = vmatmul.mubr.f32.gmra.mxu0 %v217
    %v3317 = vpop.f32.mrf.mxu0
    %v3318 = vadd.f32 0.0, %v3317
    %v3319 = vpop.f32.mrf.mxu0
    %3320 = vmatprep.mubr.f32.mxu0 0.0
    %3321 = vmatmul.mubr.f32.gmra.mxu0 %v220
    %v3322 = vpop.f32.mrf.mxu0
    %v3323 = vadd.f32 0.0, %v3322
    %v3324 = vpop.f32.mrf.mxu0
    %3325 = vmatprep.mubr.f32.mxu0 0.0
    %3326 = vmatmul.mubr.f32.gmra.mxu0 %v223
    %v3327 = vpop.f32.mrf.mxu0
    %v3328 = vadd.f32 0.0, %v3327
    %v3329 = vpop.f32.mrf.mxu0
    %3330 = vmatprep.mubr.f32.mxu0 0.0
    %3331 = vmatmul.mubr.f32.gmra.mxu0 %v226
    %v3332 = vpop.f32.mrf.mxu0
    %v3333 = vadd.f32 0.0, %v3332
    %v3334 = vpop.f32.mrf.mxu0
    %3335 = vmatprep.mubr.f32.mxu0 0.0
    %3336 = vmatmul.mubr.f32.gmra.mxu0 %v229
    %v3337 = vpop.f32.mrf.mxu0
    %v3338 = vadd.f32 0.0, %v3337
    %v3339 = vpop.f32.mrf.mxu0
    %3340 = vmatprep.mubr.f32.mxu0 0.0
    %3341 = vmatmul.mubr.f32.gmra.mxu0 %v232
    %v3342 = vpop.f32.mrf.mxu0
    %v3343 = vadd.f32 0.0, %v3342
    %v3344 = vpop.f32.mrf.mxu0
    %3345 = vdwg.mxu0
    %v3348 = vunpack.c.l.s4 1966171168
    %v3349 = vunpack.c.0.s8 %v3348
    %v3350 = vlaneseq
    %v3351 = vshrl.u32 %v3350, 7
    %v3352 = vsub.s32 %v3349, %v3351
    %v3353 = vrot.slane %v3234, %v3352
    %v3354 = vcombine.high %v3353, %v3353
    %v3356 = vunpack.c.l.s4 1966171168
    %v3357 = vunpack.c.0.s8 %v3356
    %v3358 = vlaneseq
    %v3359 = vshrl.u32 %v3358, 7
    %v3360 = vsub.s32 %v3357, %v3359
    %v3361 = vrot.slane %v3353, %v3360
    %v3363 = vunpack.c.l.s4 1966171168
    %v3364 = vunpack.c.0.s8 %v3363
    %v3365 = vlaneseq
    %v3366 = vshrl.u32 %v3365, 7
    %v3367 = vsub.s32 %v3364, %v3366
    %v3368 = vrot.slane %v3354, %v3367
    %v3369 = vlaneseq
    %v3370 = vshrl.u32 %v3369, 7
    %v3371 = vsub.s32 0, %v3370
    %v3372 = vrot.slane %v3361, %v3371
    %v3373 = vlaneseq
    %v3374 = vshrl.u32 %v3373, 7
    %v3375 = vsub.s32 0, %v3374
    %v3376 = vrot.slane %v3368, %v3375
    %v3379 = vadd.f32 %v3372, %v3308
    %v3380 = vadd.f32 %v3372, %v3313
    %v3381 = vadd.f32 %v3372, %v3318
    %v3382 = vadd.f32 %v3372, %v3323
    %v3383 = vadd.f32 %v3372, %v3328
    %v3384 = vadd.f32 %v3372, %v3333
    %v3385 = vadd.f32 %v3372, %v3338
    %v3386 = vadd.f32 %v3372, %v3343
    %v3387 = vadd.f32 %v3376, %v3308
    %v3388 = vadd.f32 %v3376, %v3313
    %v3389 = vadd.f32 %v3376, %v3318
    %v3390 = vadd.f32 %v3376, %v3323
    %v3391 = vadd.f32 %v3376, %v3328
    %v3392 = vadd.f32 %v3376, %v3333
    %v3393 = vadd.f32 %v3376, %v3338
    %v3394 = vadd.f32 %v3376, %v3343
    %v3395 = vmul.f32 %v3379, 0.5
    %v3396 = vmul.f32 %v3380, 0.5
    %v3397 = vmul.f32 %v3381, 0.5
    %v3398 = vmul.f32 %v3382, 0.5
    %v3399 = vmul.f32 %v3383, 0.5
    %v3400 = vmul.f32 %v3384, 0.5
    %v3401 = vmul.f32 %v3385, 0.5
    %v3402 = vmul.f32 %v3386, 0.5
    %v3403 = vmul.f32 %v3387, 0.5
    %v3404 = vmul.f32 %v3388, 0.5
    %v3405 = vmul.f32 %v3389, 0.5
    %v3406 = vmul.f32 %v3390, 0.5
    %v3407 = vmul.f32 %v3391, 0.5
    %v3408 = vmul.f32 %v3392, 0.5
    %v3409 = vmul.f32 %v3393, 0.5
    %v3410 = vmul.f32 %v3394, 0.5
    %v3411 = vmul.f32 %v3379, 0.70710677
    %v3412 = vmul.f32 %v3380, 0.70710677
    %v3413 = vmul.f32 %v3381, 0.70710677
    %v3414 = vmul.f32 %v3382, 0.70710677
    %v3415 = vmul.f32 %v3383, 0.70710677
    %v3416 = vmul.f32 %v3384, 0.70710677
    %v3417 = vmul.f32 %v3385, 0.70710677
    %v3418 = vmul.f32 %v3386, 0.70710677
    %v3419 = vmul.f32 %v3387, 0.70710677
    %v3420 = vmul.f32 %v3388, 0.70710677
    %v3421 = vmul.f32 %v3389, 0.70710677
    %v3422 = vmul.f32 %v3390, 0.70710677
    %v3423 = vmul.f32 %v3391, 0.70710677
    %v3424 = vmul.f32 %v3392, 0.70710677
    %v3425 = vmul.f32 %v3393, 0.70710677
    %v3426 = vmul.f32 %v3394, 0.70710677
    %v3427 = verf.f32.pop %v3411
    %v3428 = verf.f32.pop %v3412
    %v3429 = verf.f32.pop %v3413
    %v3430 = verf.f32.pop %v3414
    %v3431 = verf.f32.pop %v3415
    %v3432 = verf.f32.pop %v3416
    %v3433 = verf.f32.pop %v3417
    %v3434 = verf.f32.pop %v3418
    %v3435 = verf.f32.pop %v3419
    %v3436 = verf.f32.pop %v3420
    %v3437 = verf.f32.pop %v3421
    %v3438 = verf.f32.pop %v3422
    %v3439 = verf.f32.pop %v3423
    %v3440 = verf.f32.pop %v3424
    %v3441 = verf.f32.pop %v3425
    %v3442 = verf.f32.pop %v3426
    %v3443 = vadd.f32 %v3427, 1.0
    %v3444 = vadd.f32 %v3428, 1.0
    %v3445 = vadd.f32 %v3429, 1.0
    %v3446 = vadd.f32 %v3430, 1.0
    %v3447 = vadd.f32 %v3431, 1.0
    %v3448 = vadd.f32 %v3432, 1.0
    %v3449 = vadd.f32 %v3433, 1.0
    %v3450 = vadd.f32 %v3434, 1.0
    %v3451 = vadd.f32 %v3435, 1.0
    %v3452 = vadd.f32 %v3436, 1.0
    %v3453 = vadd.f32 %v3437, 1.0
    %v3454 = vadd.f32 %v3438, 1.0
    %v3455 = vadd.f32 %v3439, 1.0
    %v3456 = vadd.f32 %v3440, 1.0
    %v3457 = vadd.f32 %v3441, 1.0
    %v3458 = vadd.f32 %v3442, 1.0
    %v3459 = vmul.f32 %v3395, %v3443
    %v3460 = vmul.f32 %v3396, %v3444
    %v3461 = vmul.f32 %v3397, %v3445
    %v3462 = vmul.f32 %v3398, %v3446
    %v3463 = vmul.f32 %v3399, %v3447
    %v3464 = vmul.f32 %v3400, %v3448
    %v3465 = vmul.f32 %v3401, %v3449
    %v3466 = vmul.f32 %v3402, %v3450
    %v3467 = vmul.f32 %v3403, %v3451
    %v3468 = vmul.f32 %v3404, %v3452
    %v3469 = vmul.f32 %v3405, %v3453
    %v3470 = vmul.f32 %v3406, %v3454
    %v3471 = vmul.f32 %v3407, %v3455
    %v3472 = vmul.f32 %v3408, %v3456
    %v3473 = vmul.f32 %v3409, %v3457
    %v3474 = vmul.f32 %v3410, %v3458
    %v3475 = vld [vmem:[%s10 + $0x1] sm:$0x1]
    %v3477 = vlaneseq
    %v3478 = vshrl.u32 %v3477, 7
    %v3479 = vsub.s32 0, %v3478
    %v3480 = vrot.slane %v3475, %v3479
    %v3482 = vmul.f32 %v3459, %v3480
    %v3483 = vmul.f32 %v3460, %v3480
    %v3484 = vmul.f32 %v3461, %v3480
    %v3485 = vmul.f32 %v3462, %v3480
    %v3486 = vmul.f32 %v3463, %v3480
    %v3487 = vmul.f32 %v3464, %v3480
    %v3488 = vmul.f32 %v3465, %v3480
    %v3489 = vmul.f32 %v3466, %v3480
    %v3490 = vmul.f32 %v3467, %v3480
    %v3491 = vmul.f32 %v3468, %v3480
    %v3492 = vmul.f32 %v3469, %v3480
    %v3493 = vmul.f32 %v3470, %v3480
    %v3494 = vmul.f32 %v3471, %v3480
    %v3495 = vmul.f32 %v3472, %v3480
    %v3496 = vmul.f32 %v3473, %v3480
    %v3497 = vmul.f32 %v3474, %v3480
    %3498 = vadd.xlane.f32.xlu0 %v3482
    %v3499 = vpop.xlane.xlu0 %3498
    %3500 = vadd.xlane.f32.xlu0 %v3483
    %v3501 = vpop.xlane.xlu0 %3500
    %3502 = vadd.xlane.f32.xlu0 %v3484
    %v3503 = vpop.xlane.xlu0 %3502
    %3504 = vadd.xlane.f32.xlu0 %v3485
    %v3505 = vpop.xlane.xlu0 %3504
    %3506 = vadd.xlane.f32.xlu0 %v3486
    %v3507 = vpop.xlane.xlu0 %3506
    %3508 = vadd.xlane.f32.xlu0 %v3487
    %v3509 = vpop.xlane.xlu0 %3508
    %3510 = vadd.xlane.f32.xlu0 %v3488
    %v3511 = vpop.xlane.xlu0 %3510
    %3512 = vadd.xlane.f32.xlu0 %v3489
    %v3513 = vpop.xlane.xlu0 %3512
    %3514 = vadd.xlane.f32.xlu0 %v3490
    %v3515 = vpop.xlane.xlu0 %3514
    %3516 = vadd.xlane.f32.xlu0 %v3491
    %v3517 = vpop.xlane.xlu0 %3516
    %3518 = vadd.xlane.f32.xlu0 %v3492
    %v3519 = vpop.xlane.xlu0 %3518
    %3520 = vadd.xlane.f32.xlu0 %v3493
    %v3521 = vpop.xlane.xlu0 %3520
    %3522 = vadd.xlane.f32.xlu0 %v3494
    %v3523 = vpop.xlane.xlu0 %3522
    %3524 = vadd.xlane.f32.xlu0 %v3495
    %v3525 = vpop.xlane.xlu0 %3524
    %3526 = vadd.xlane.f32.xlu0 %v3496
    %v3527 = vpop.xlane.xlu0 %3526
    %3528 = vadd.xlane.f32.xlu0 %v3497
    %v3529 = vpop.xlane.xlu0 %3528
    %v3530 = vadd.f32 %v3140, %v3499
    %v3531 = vadd.f32 %v3141, %v3501
    %v3532 = vadd.f32 %v3142, %v3503
    %v3533 = vadd.f32 %v3143, %v3505
    %v3534 = vadd.f32 %v3144, %v3507
    %v3535 = vadd.f32 %v3145, %v3509
    %v3536 = vadd.f32 %v3146, %v3511
    %v3537 = vadd.f32 %v3147, %v3513
    %v3538 = vadd.f32 %v3148, %v3515
    %v3539 = vadd.f32 %v3149, %v3517
    %v3540 = vadd.f32 %v3150, %v3519
    %v3541 = vadd.f32 %v3151, %v3521
    %v3542 = vadd.f32 %v3152, %v3523
    %v3543 = vadd.f32 %v3153, %v3525
    %v3544 = vadd.f32 %v3154, %v3527
    %v3545 = vadd.f32 %v3155, %v3529
    %vm3546 = vcmp.gt.f32.partialorder %v2750, 0.5
    %vm3547 = vcmp.gt.f32.partialorder %v2751, 0.5
    %vm3548 = vcmp.gt.f32.partialorder %v2752, 0.5
    %vm3549 = vcmp.gt.f32.partialorder %v2753, 0.5
    %vm3550 = vcmp.gt.f32.partialorder %v2754, 0.5
    %vm3551 = vcmp.gt.f32.partialorder %v2755, 0.5
    %vm3552 = vcmp.gt.f32.partialorder %v2756, 0.5
    %vm3553 = vcmp.gt.f32.partialorder %v2757, 0.5
    %vm3554 = vcmp.gt.f32.partialorder %v2758, 0.5
    %vm3555 = vcmp.gt.f32.partialorder %v2759, 0.5
    %vm3556 = vcmp.gt.f32.partialorder %v2760, 0.5
    %vm3557 = vcmp.gt.f32.partialorder %v2761, 0.5
    %vm3558 = vcmp.gt.f32.partialorder %v2762, 0.5
    %vm3559 = vcmp.gt.f32.partialorder %v2763, 0.5
    %vm3560 = vcmp.gt.f32.partialorder %v2764, 0.5
    %vm3561 = vcmp.gt.f32.partialorder %v2765, 0.5
    %v3562 = vsel %vm3546, %v3530, -inf
    %v3563 = vsel %vm3547, %v3531, -inf
    %v3564 = vsel %vm3548, %v3532, -inf
    %v3565 = vsel %vm3549, %v3533, -inf
    %v3566 = vsel %vm3550, %v3534, -inf
    %v3567 = vsel %vm3551, %v3535, -inf
    %v3568 = vsel %vm3552, %v3536, -inf
    %v3569 = vsel %vm3553, %v3537, -inf
    %v3570 = vsel %vm3554, %v3538, -inf
    %v3571 = vsel %vm3555, %v3539, -inf
    %v3572 = vsel %vm3556, %v3540, -inf
    %v3573 = vsel %vm3557, %v3541, -inf
    %v3574 = vsel %vm3558, %v3542, -inf
    %v3575 = vsel %vm3559, %v3543, -inf
    %v3576 = vsel %vm3560, %v3544, -inf
    %v3577 = vsel %vm3561, %v3545, -inf
    %v3578 = vmax.f32 %v3562, %v3564
    %v3579 = vmax.f32 %v3563, %v3565
    %v3580 = vmax.f32 %v3578, %v3566
    %v3581 = vmax.f32 %v3579, %v3567
    %v3582 = vmax.f32 %v3580, %v3568
    %v3583 = vmax.f32 %v3581, %v3569
    %v3584 = vmax.f32 %v3582, %v3583
    %v3585 = vrot.slane %v3584, 4
    %v3586 = vmax.f32 %v3584, %v3585
    %v3587 = vrot.slane %v3586, 2
    %v3588 = vmax.f32 %v3586, %v3587
    %v3589 = vrot.slane %v3588, 1
    %v3590 = vmax.f32 %v3588, %v3589
    %v3591 = vmax.f32 %v3570, %v3572
    %v3592 = vmax.f32 %v3571, %v3573
    %v3593 = vmax.f32 %v3591, %v3574
    %v3594 = vmax.f32 %v3592, %v3575
    %v3595 = vmax.f32 %v3593, %v3576
    %v3596 = vmax.f32 %v3594, %v3577
    %v3597 = vmax.f32 %v3595, %v3596
    %v3598 = vrot.slane %v3597, 4
    %v3599 = vmax.f32 %v3597, %v3598
    %v3600 = vrot.slane %v3599, 2
    %v3601 = vmax.f32 %v3599, %v3600
    %v3602 = vrot.slane %v3601, 1
    %v3603 = vmax.f32 %v3601, %v3602
    %v3604 = vsub.f32 %v3562, %v3590
    %v3605 = vsub.f32 %v3563, %v3590
    %v3606 = vsub.f32 %v3564, %v3590
    %v3607 = vsub.f32 %v3565, %v3590
    %v3608 = vsub.f32 %v3566, %v3590
    %v3609 = vsub.f32 %v3567, %v3590
    %v3610 = vsub.f32 %v3568, %v3590
    %v3611 = vsub.f32 %v3569, %v3590
    %v3612 = vsub.f32 %v3570, %v3603
    %v3613 = vsub.f32 %v3571, %v3603
    %v3614 = vsub.f32 %v3572, %v3603
    %v3615 = vsub.f32 %v3573, %v3603
    %v3616 = vsub.f32 %v3574, %v3603
    %v3617 = vsub.f32 %v3575, %v3603
    %v3618 = vsub.f32 %v3576, %v3603
    %v3619 = vsub.f32 %v3577, %v3603
    %v3620 = vmul.f32 %v3604, 1.442695
    %v3621 = vpow.pop %v3620
    %v3622 = vmul.f32 %v3605, 1.442695
    %v3623 = vpow.pop %v3622
    %v3624 = vmul.f32 %v3606, 1.442695
    %v3625 = vpow.pop %v3624
    %v3626 = vmul.f32 %v3607, 1.442695
    %v3627 = vpow.pop %v3626
    %v3628 = vmul.f32 %v3608, 1.442695
    %v3629 = vpow.pop %v3628
    %v3630 = vmul.f32 %v3609, 1.442695
    %v3631 = vpow.pop %v3630
    %v3632 = vmul.f32 %v3610, 1.442695
    %v3633 = vpow.pop %v3632
    %v3634 = vmul.f32 %v3611, 1.442695
    %v3635 = vpow.pop %v3634
    %v3636 = vmul.f32 %v3612, 1.442695
    %v3637 = vpow.pop %v3636
    %v3638 = vmul.f32 %v3613, 1.442695
    %v3639 = vpow.pop %v3638
    %v3640 = vmul.f32 %v3614, 1.442695
    %v3641 = vpow.pop %v3640
    %v3642 = vmul.f32 %v3615, 1.442695
    %v3643 = vpow.pop %v3642
    %v3644 = vmul.f32 %v3616, 1.442695
    %v3645 = vpow.pop %v3644
    %v3646 = vmul.f32 %v3617, 1.442695
    %v3647 = vpow.pop %v3646
    %v3648 = vmul.f32 %v3618, 1.442695
    %v3649 = vpow.pop %v3648
    %v3650 = vmul.f32 %v3619, 1.442695
    %v3651 = vpow.pop %v3650
    %v3652 = vadd.f32 %v3621, %v3623
    %v3653 = vadd.f32 %v3652, %v3625
    %v3654 = vadd.f32 %v3653, %v3627
    %v3655 = vadd.f32 %v3654, %v3629
    %v3656 = vadd.f32 %v3655, %v3631
    %v3657 = vadd.f32 %v3656, %v3633
    %v3658 = vadd.f32 %v3657, %v3635
    %v3659 = vrot.slane %v3658, 4
    %v3660 = vadd.f32 %v3658, %v3659
    %v3661 = vrot.slane %v3660, 2
    %v3662 = vadd.f32 %v3660, %v3661
    %v3663 = vrot.slane %v3662, 1
    %v3664 = vadd.f32 %v3662, %v3663
    %v3665 = vadd.f32 %v3637, %v3639
    %v3666 = vadd.f32 %v3665, %v3641
    %v3667 = vadd.f32 %v3666, %v3643
    %v3668 = vadd.f32 %v3667, %v3645
    %v3669 = vadd.f32 %v3668, %v3647
    %v3670 = vadd.f32 %v3669, %v3649
    %v3671 = vadd.f32 %v3670, %v3651
    %v3672 = vrot.slane %v3671, 4
    %v3673 = vadd.f32 %v3671, %v3672
    %v3674 = vrot.slane %v3673, 2
    %v3675 = vadd.f32 %v3673, %v3674
    %v3676 = vrot.slane %v3675, 1
    %v3677 = vadd.f32 %v3675, %v3676
    %v3678 = vrcp.pop %v3664
    %v3679 = vmul.f32 %v3621, %v3678
    %v3680 = vmul.f32 %v3623, %v3678
    %v3681 = vmul.f32 %v3625, %v3678
    %v3682 = vmul.f32 %v3627, %v3678
    %v3683 = vmul.f32 %v3629, %v3678
    %v3684 = vmul.f32 %v3631, %v3678
    %v3685 = vmul.f32 %v3633, %v3678
    %v3686 = vmul.f32 %v3635, %v3678
    %v3687 = vrcp.pop %v3677
    %v3688 = vmul.f32 %v3637, %v3687
    %v3689 = vmul.f32 %v3639, %v3687
    %v3690 = vmul.f32 %v3641, %v3687
    %v3691 = vmul.f32 %v3643, %v3687
    %v3692 = vmul.f32 %v3645, %v3687
    %v3693 = vmul.f32 %v3647, %v3687
    %v3694 = vmul.f32 %v3649, %v3687
    %v3695 = vmul.f32 %v3651, %v3687
    %v3696 = vld [vmem:[%s2] sm:$0xff]
    %v3697 = vld [vmem:[%s2 + $0x8] sm:$0xff]
    %v3698 = vld [vmem:[%s2 + $0x10] sm:$0xff]
    %v3699 = vld [vmem:[%s2 + $0x18] sm:$0xff]
    %v3700 = vld [vmem:[%s2 + $0x20] sm:$0xff]
    %v3701 = vld [vmem:[%s2 + $0x28] sm:$0xff]
    %v3702 = vld [vmem:[%s2 + $0x30] sm:$0xff]
    %v3703 = vld [vmem:[%s2 + $0x38] sm:$0xff]
    %v3704 = vlaneseq
    %v3705 = vand.u32 %v3704, 127
    %vm3706 = vcmp.lt.s32.totalorder %v3705, 4
    %vm3707 = vcmp.lt.f32.partialorder %v3696, 0.0
    %vm3708 = vcmp.lt.f32.partialorder %v3697, 0.0
    %vm3709 = vcmp.lt.f32.partialorder %v3698, 0.0
    %vm3710 = vcmp.lt.f32.partialorder %v3699, 0.0
    %vm3711 = vcmp.lt.f32.partialorder %v3700, 0.0
    %vm3712 = vcmp.lt.f32.partialorder %v3701, 0.0
    %vm3713 = vcmp.lt.f32.partialorder %v3702, 0.0
    %vm3714 = vcmp.lt.f32.partialorder %v3703, 0.0
    %v3715 = vceil.f32 %v3696
    %v3716 = vceil.f32 %v3697
    %v3717 = vceil.f32 %v3698
    %v3718 = vceil.f32 %v3699
    %v3719 = vceil.f32 %v3700
    %v3720 = vceil.f32 %v3701
    %v3721 = vceil.f32 %v3702
    %v3722 = vceil.f32 %v3703
    %v3723 = vfloor.f32 %v3696
    %v3724 = vfloor.f32 %v3697
    %v3725 = vfloor.f32 %v3698
    %v3726 = vfloor.f32 %v3699
    %v3727 = vfloor.f32 %v3700
    %v3728 = vfloor.f32 %v3701
    %v3729 = vfloor.f32 %v3702
    %v3730 = vfloor.f32 %v3703
    %v3731 = vsel %vm3707, %v3715, %v3723
    %v3732 = vsel %vm3708, %v3716, %v3724
    %v3733 = vsel %vm3709, %v3717, %v3725
    %v3734 = vsel %vm3710, %v3718, %v3726
    %v3735 = vsel %vm3711, %v3719, %v3727
    %v3736 = vsel %vm3712, %v3720, %v3728
    %v3737 = vsel %vm3713, %v3721, %v3729
    %v3738 = vsel %vm3714, %v3722, %v3730
    %v3739 = vsel %vm3706, %v3731, %v3696
    %v3740 = vsel %vm3706, %v3732, %v3697
    %v3741 = vsel %vm3706, %v3733, %v3698
    %v3742 = vsel %vm3706, %v3734, %v3699
    %v3743 = vsel %vm3706, %v3735, %v3700
    %v3744 = vsel %vm3706, %v3736, %v3701
    %v3745 = vsel %vm3706, %v3737, %v3702
    %v3746 = vsel %vm3706, %v3738, %v3703
    %v3747 = vmul.f32 %v3679, %v3739
    %v3748 = vmul.f32 %v3680, %v3740
    %v3749 = vmul.f32 %v3681, %v3741
    %v3750 = vmul.f32 %v3682, %v3742
    %v3751 = vmul.f32 %v3683, %v3743
    %v3752 = vmul.f32 %v3684, %v3744
    %v3753 = vmul.f32 %v3685, %v3745
    %v3754 = vmul.f32 %v3686, %v3746
    %v3755 = vmul.f32 %v3688, %v3739
    %v3756 = vmul.f32 %v3689, %v3740
    %v3757 = vmul.f32 %v3690, %v3741
    %v3758 = vmul.f32 %v3691, %v3742
    %v3759 = vmul.f32 %v3692, %v3743
    %v3760 = vmul.f32 %v3693, %v3744
    %v3761 = vmul.f32 %v3694, %v3745
    %v3762 = vmul.f32 %v3695, %v3746
    %vm3763 = vcmask 39936
    %v3764 = vsel %vm3763, %v3747, 0.0
    %v3765 = vsel %vm3763, %v3748, 0.0
    %v3766 = vadd.f32 %v3764, %v3765
    %v3767 = vsel %vm3763, %v3749, 0.0
    %v3768 = vadd.f32 %v3766, %v3767
    %v3769 = vsel %vm3763, %v3750, 0.0
    %v3770 = vadd.f32 %v3768, %v3769
    %v3771 = vsel %vm3763, %v3751, 0.0
    %v3772 = vadd.f32 %v3770, %v3771
    %v3773 = vsel %vm3763, %v3752, 0.0
    %v3774 = vadd.f32 %v3772, %v3773
    %v3775 = vsel %vm3763, %v3753, 0.0
    %v3776 = vadd.f32 %v3774, %v3775
    %v3777 = vsel %vm3763, %v3754, 0.0
    %v3778 = vadd.f32 %v3776, %v3777
    %v3779 = vrot.slane %v3778, 4
    %v3780 = vadd.f32 %v3778, %v3779
    %v3781 = vrot.slane %v3780, 2
    %v3782 = vadd.f32 %v3780, %v3781
    %v3783 = vrot.slane %v3782, 1
    %v3784 = vadd.f32 %v3782, %v3783
    %v3785 = vsel %vm3763, %v3755, 0.0
    %v3786 = vsel %vm3763, %v3756, 0.0
    %v3787 = vadd.f32 %v3785, %v3786
    %v3788 = vsel %vm3763, %v3757, 0.0
    %v3789 = vadd.f32 %v3787, %v3788
    %v3790 = vsel %vm3763, %v3758, 0.0
    %v3791 = vadd.f32 %v3789, %v3790
    %v3792 = vsel %vm3763, %v3759, 0.0
    %v3793 = vadd.f32 %v3791, %v3792
    %v3794 = vsel %vm3763, %v3760, 0.0
    %v3795 = vadd.f32 %v3793, %v3794
    %v3796 = vsel %vm3763, %v3761, 0.0
    %v3797 = vadd.f32 %v3795, %v3796
    %v3798 = vsel %vm3763, %v3762, 0.0
    %v3799 = vadd.f32 %v3797, %v3798
    %v3800 = vrot.slane %v3799, 4
    %v3801 = vadd.f32 %v3799, %v3800
    %v3802 = vrot.slane %v3801, 2
    %v3803 = vadd.f32 %v3801, %v3802
    %v3804 = vrot.slane %v3803, 1
    %v3805 = vadd.f32 %v3803, %v3804
    %vm3808 = vcmask 1041409
    %v3809 = vsel %vm3808, %v3805, %v3784
    %vm3811 = vcmask 33792
    %3812 = vst.msk [vmem:[%s11] sm:$0x3] %vm3811, %v3809
    // Predicated region
    $region70: #{read_head_forward.1} parent=1 // pred_check
      _
    $region71: #{read_head_forward.1} parent=1 // pred_check_branch
      %3814 = sbr.rel (0) target = $region73
    $region72: #{read_head_forward.1} parent=1 // pred_region
      _
    $region73: #{read_head_forward.1} parent=1 // pred_fallthru
      _
    // Predicated region
    $region74: #{read_head_forward.1} parent=1 // pred_check
      _
    $region75: #{read_head_forward.1} parent=1 // pred_check_branch
      %3816 = sbr.rel (0) target = $region77
    $region76: #{read_head_forward.1} parent=1 // pred_region
      _
    $region77: #{read_head_forward.1} parent=1 // pred_fallthru
      _
    %3817 = vsyncpa [#allocation3], 1
    %3818 = vsyncpa [#allocation5], 1
    %3819 = vsyncpa [#allocation8], 1
    %3820 = vsyncpa [#allocation11], 1

</llo_original>
